<compile_context>
chip_gen: v7x
topology: tpu7x:2x2x1
jax: 0.10.0
libtpu: 0.0.40
codegen_flags: <defaults>
</compile_context>

<pallas_src>
import math

import jax
import jax.numpy as jnp
from jax.experimental import pallas as pl
from jax.experimental.pallas import tpu as pltpu

# ----------------------------- model config ---------------------------------
B = 2                 # batch
H = 32                # hidden size
NH = 4                # attention heads
HD = H // NH          # head dim
FF = 64               # FFN intermediate size
NL = 2                # encoder layers
NUM_LABELS = 2        # num_labels != 1  -> softmax / logprobs / labels branch
N_MAX_CAND = 4        # n_max_candidates
MAX_POS = 16          # position-embedding table size (>= seq len)
LN_EPS = 1e-12        # BERT LayerNorm eps

WSLAB_W = 4 * H + FF  # packed [Wq|Wk|Wv|Wo|W1] output width
LVEC_ROWS = 8         # packed per-layer 1-D params: one row per vector
LVEC_W = 128          # each row left-aligned / zero-padded to one lane group


# ----------------------------- kernel helpers --------------------------------
def _layernorm(x, gamma, beta):
    mu = jnp.mean(x, axis=-1, keepdims=True)
    var = jnp.mean(jnp.square(x - mu), axis=-1, keepdims=True)
    return (x - mu) * jax.lax.rsqrt(var + LN_EPS) * gamma + beta


def _gelu(x):
    # TODO(synk): BERT uses exact erf-GELU; tanh approximation used for robust
    # Mosaic lowering (EUP tanh).
    return 0.5 * x * (1.0 + jnp.tanh(0.7978845608028654 * (x + 0.044715 * x * x * x)))


# ----------------------------- fused Pallas kernel ----------------------------
def _make_fused_kernel(bsz, nq, nc, S):
    BS = bsz * S
    scale = 1.0 / math.sqrt(HD)

    def kernel(q_ref, d_ref, words_ref, postype_ref, embln_ref, bias_ref,
               wslab_ref, w2_ref, lvec_ref, wp_ref, wc_ref, headb_ref,
               hid_ref, head_ref, x_sc):
        g_e = embln_ref[0:1, :]                     # (1, H) embeddings LN gamma
        b_e = embln_ref[1:2, :]                     # (1, H) embeddings LN beta

        # 1) BertEmbeddings over token ids [[CLS, SEP]] (identical for every
        #    batch row): word + position(0,1) + token_type(0), LayerNorm.
        cs = _layernorm(words_ref[...] + postype_ref[0:2, :], g_e, b_e)   # (2, H)
        cls_row = cs[0:1, :]
        sep_row = cs[1:2, :]

        # 2) Assemble [CLS] q [SEP] d0..d_{nc-1} [SEP] per batch row into a
        #    single (B*S, H) VMEM scratch (row-slice stores; no concat needed).
        for b in range(bsz):
            o = b * S
            x_sc[o:o + 1, :] = cls_row
            x_sc[o + 1:o + 1 + nq, :] = q_ref[b]
            x_sc[o + 1 + nq:o + 2 + nq, :] = sep_row
            x_sc[o + 2 + nq:o + 2 + nq + nc, :] = d_ref[b]
            x_sc[o + S - 1:o + S, :] = sep_row

        # 3) BertEmbeddings with inputs_embeds: + position + token_type(0), LN.
        x = _layernorm(x_sc[...] + postype_ref[...], g_e, b_e)           # (BS, H)

        attn_bias = bias_ref[...]                                        # (BS, BS)

        # 4) Transformer encoder layers (static unroll over NL).
        for l in range(NL):
            wsl = wslab_ref[l]                     # (H, 4H+FF)
            vec = lvec_ref[l]                      # (LVEC_ROWS, LVEC_W)
            w2 = w2_ref[l]                         # (FF, H)

            wqkv = wsl[:, 0:3 * H]                 # (H, 3H)  fused Q|K|V
            wo = wsl[:, 3 * H:4 * H]               # (H, H)
            w1 = wsl[:, 4 * H:4 * H + FF]          # (H, FF)

            bqkv = vec[0:1, 0:3 * H]
            bo = vec[1:2, 0:H]
            g1 = vec[2:3, 0:H]
            be1 = vec[3:4, 0:H]
            bf1 = vec[4:5, 0:FF]
            bf2 = vec[5:6, 0:H]
            g2 = vec[6:7, 0:H]
            be2 = vec[7:8, 0:H]

            # fused QKV projection: one (BS,H)@(H,3H) MXU op instead of three
            qkv = jnp.dot(x, wqkv, preferred_element_type=jnp.float32) + bqkv
            q = qkv[:, 0:H]
            k = qkv[:, H:2 * H]
            v = qkv[:, 2 * H:3 * H]

            attn = jnp.zeros((BS, H), jnp.float32) + bo
            for h in range(NH):                    # static unroll over heads
                sl = slice(h * HD, (h + 1) * HD)
                # dot_general contracting k's minor dim: the MXU consumes the
                # transposed RHS directly (no standalone XLU transpose pass).
                s = jax.lax.dot_general(q[:, sl], k[:, sl],
                                        (((1,), (1,)), ((), ())),
                                        preferred_element_type=jnp.float32)
                s = s * scale + attn_bias          # block-diagonal over batch
                s = s - jnp.max(s, axis=-1, keepdims=True)
                p = jnp.exp(s)
                p = p / jnp.sum(p, axis=-1, keepdims=True)
                ctx = jnp.dot(p, v[:, sl], preferred_element_type=jnp.float32)
                # concat-over-heads @ Wo == sum_h ctx_h @ Wo[h*HD:(h+1)*HD]
                attn = attn + jnp.dot(ctx, wo[sl, :],
                                      preferred_element_type=jnp.float32)

            x1 = _layernorm(x + attn, g1, be1)
            hmid = _gelu(jnp.dot(x1, w1, preferred_element_type=jnp.float32) + bf1)
            ffn = jnp.dot(hmid, w2, preferred_element_type=jnp.float32) + bf2
            x = _layernorm(x1 + ffn, g2, be2)

        # 5) last_hidden_states output (B, S, H).
        for b in range(bsz):
            hid_ref[b] = x[b * S:(b + 1) * S, :]

        # 6) pooler(tanh) + classifier + softmax / log-softmax.  Computed on
        #    all BS rows (row-wise ops, one matmul); only [CLS] rows are kept.
        bp = headb_ref[0:1, 0:H]
        bc = headb_ref[1:2, 0:NUM_LABELS]
        pooled = jnp.tanh(jnp.dot(x, wp_ref[...],
                                  preferred_element_type=jnp.float32) + bp)
        logits = jnp.dot(pooled, wc_ref[...],
                         preferred_element_type=jnp.float32) + bc          # (BS, NUM_LABELS)
        m = jnp.max(logits, axis=-1, keepdims=True)
        e = jnp.exp(logits - m)
        ssum = jnp.sum(e, axis=-1, keepdims=True)
        scores = e / ssum
        logprobs = (logits - m) - jnp.log(ssum)

        # packed head output: rows [0:B)=logits, [B:2B)=scores, [2B:3B)=logprobs
        for b in range(bsz):
            r = b * S
            head_ref[b:b + 1, :] = logits[r:r + 1, :]
            head_ref[bsz + b:bsz + b + 1, :] = scores[r:r + 1, :]
            head_ref[2 * bsz + b:2 * bsz + b + 1, :] = logprobs[r:r + 1, :]

    return kernel


# ----------------------------- parameters ------------------------------------
def init_params(key):
    def nrm(k, shape, scale=0.02):
        return (scale * jax.random.normal(k, shape, jnp.float32)).astype(jnp.float32)

    def pad_row(v):
        return jnp.pad(v, (0, LVEC_W - v.shape[0]))[None, :]

    keys = iter(jax.random.split(key, 128))

    word_cls = nrm(next(keys), (H,))
    word_sep = nrm(next(keys), (H,))
    params = {
        # BertEmbeddings (only tokens 101 [CLS] and 102 [SEP] are ever used)
        'words': jnp.stack([word_cls, word_sep], axis=0),            # (2, H)
        'pos_emb': nrm(next(keys), (MAX_POS, H)),
        'type_emb': nrm(next(keys), (2, H)),
        'emb_ln': jnp.concatenate([jnp.ones((1, H), jnp.float32),
                                   jnp.zeros((1, H), jnp.float32)], axis=0),
        # BertPooler + classifier head
        'pooler_w': nrm(next(keys), (H, H)),
        'cls_w': nrm(next(keys), (H, NUM_LABELS)),
        'headb': jnp.zeros((2, LVEC_W), jnp.float32),   # row0: pooler_b, row1: cls_b
    }

    wslabs, w2s, lvecs = [], [], []
    for _ in range(NL):
        wq = nrm(next(keys), (H, H))
        wk = nrm(next(keys), (H, H))
        wv = nrm(next(keys), (H, H))
        wo = nrm(next(keys), (H, H))
        w1 = nrm(next(keys), (H, FF))
        w2 = nrm(next(keys), (FF, H))
        wslabs.append(jnp.concatenate([wq, wk, wv, wo, w1], axis=1))  # (H, 4H+FF)
        w2s.append(w2)

        bqkv = jnp.zeros((3 * H,), jnp.float32)
        bo = jnp.zeros((H,), jnp.float32)
        g1 = jnp.ones((H,), jnp.float32)
        be1 = jnp.zeros((H,), jnp.float32)
        bf1 = jnp.zeros((FF,), jnp.float32)
        bf2 = jnp.zeros((H,), jnp.float32)
        g2 = jnp.ones((H,), jnp.float32)
        be2 = jnp.zeros((H,), jnp.float32)
        lvecs.append(jnp.concatenate(
            [pad_row(r) for r in (bqkv, bo, g1, be1, bf1, bf2, g2, be2)], axis=0))

    params['wslab'] = jnp.stack(wslabs, axis=0)          # (NL, H, 4H+FF)
    params['w2'] = jnp.stack(w2s, axis=0)                # (NL, FF, H)
    params['lvec'] = jnp.stack(lvecs, axis=0)            # (NL, 8, 128)
    return params


# ----------------------------- forward (ValueCrossEncoder.forward) ------------
def _maybe_reshape(x):
    if x.ndim != 3:
        x = x[:, None, :]
    return x


def value_cross_encoder_forward(params, qemb, dembs, n_max_candidates=N_MAX_CAND):
    # --- _prepare_inputs (plain-JAX glue, as in the PyTorch module) ---
    qemb = _maybe_reshape(qemb).astype(jnp.float32)
    dembs = _maybe_reshape(dembs).astype(jnp.float32)
    if n_max_candidates is not None:
        dembs = dembs[:, :n_max_candidates, :]

    bsz, nq, _ = qemb.shape
    nc = dembs.shape[1]
    S = 1 + nq + 1 + nc + 1
    BS = bsz * S
    assert S <= MAX_POS

    # position + token_type(0) embeddings, tiled to the flattened (B*S, H) layout
    postype = jnp.tile(params['pos_emb'][:S] + params['type_emb'][0:1], (bsz, 1))

    # block-diagonal attention bias: tokens attend only within their own sequence
    bid = jnp.repeat(jnp.arange(bsz, dtype=jnp.int32), S)
    attn_bias = jnp.where(bid[:, None] == bid[None, :], 0.0, -1e9).astype(jnp.float32)

    kernel = _make_fused_kernel(bsz, nq, nc, S)
    hid, head = pl.pallas_call(
        kernel,
        out_shape=(jax.ShapeDtypeStruct((bsz, S, H), jnp.float32),
                   jax.ShapeDtypeStruct((3 * bsz, NUM_LABELS), jnp.float32)),
        scratch_shapes=[pltpu.VMEM((BS, H), jnp.float32)],
    )(qemb, dembs, params['words'], postype, params['emb_ln'], attn_bias,
      params['wslab'], params['w2'], params['lvec'],
      params['pooler_w'], params['cls_w'], params['headb'])

    logits = head[0:bsz]
    scores = head[bsz:2 * bsz]
    logprobs = head[2 * bsz:3 * bsz]

    # num_labels != 1 branch of the PyTorch forward
    labels = jnp.argmax(logprobs, axis=-1)[:, None]

    return {
        'logits': logits,
        'logprobs': logprobs,
        'labels': labels,
        'scores': scores,
        'last_hidden_states': hid,
        'loss': 0.0,
        'logs': {},
    }


# ----------------------------- main -------------------------------------------
if __name__ == "__main__":
    key = jax.random.PRNGKey(0)
    kp, kq, kd = jax.random.split(key, 3)

    params = init_params(kp)
    # qemb is 2-D to exercise _maybe_reshape; dembs has 5 candidates, truncated to 4.
    qemb = jax.random.normal(kq, (B, H), jnp.float32)
    dembs = jax.random.normal(kd, (B, 5, H), jnp.float32)

    out = value_cross_encoder_forward(params, qemb, dembs)
    jax.block_until_ready((out['logits'], out['logprobs'], out['labels'],
                           out['scores'], out['last_hidden_states']))

    assert out['logits'].shape == (B, NUM_LABELS)
    assert out['scores'].shape == (B, NUM_LABELS)
    assert out['labels'].shape == (B, 1)
    assert out['last_hidden_states'].shape == (B, 3 + N_MAX_CAND + 1, H)
    # quick numerical sanity: softmax rows sum to 1, logprobs = log(scores)
    assert jnp.max(jnp.abs(jnp.sum(out['scores'], axis=-1) - 1.0)) < 1e-3
    assert jnp.max(jnp.abs(jnp.exp(out['logprobs']) - out['scores'])) < 1e-3

    print("KERNEL_OK")
</pallas_src>

<mosaic_0001>
module attributes {stable_mosaic.version = 11 : i64} {
  func.func @kernel(%arg0: memref<2x1x32xf32, #tpu.memory_space<vmem>>, %arg1: memref<2x4x32xf32, #tpu.memory_space<vmem>>, %arg2: memref<2x32xf32, #tpu.memory_space<vmem>>, %arg3: memref<16x32xf32, #tpu.memory_space<vmem>>, %arg4: memref<2x32xf32, #tpu.memory_space<vmem>>, %arg5: memref<16x16xf32, #tpu.memory_space<vmem>>, %arg6: memref<2x32x192xf32, #tpu.memory_space<vmem>>, %arg7: memref<2x64x32xf32, #tpu.memory_space<vmem>>, %arg8: memref<2x8x128xf32, #tpu.memory_space<vmem>>, %arg9: memref<32x32xf32, #tpu.memory_space<vmem>>, %arg10: memref<32x2xf32, #tpu.memory_space<vmem>>, %arg11: memref<2x128xf32, #tpu.memory_space<vmem>>, %arg12: memref<2x8x32xf32, #tpu.memory_space<vmem>>, %arg13: memref<6x2xf32, #tpu.memory_space<vmem>>, %arg14: memref<16x32xf32, #tpu.memory_space<vmem>>) attributes {dimension_semantics = [], scalar_prefetch = 0 : i64, scratch_operands = 1 : i64, tpu.core_type = #tpu.core_type<tc>} {
    %c0 = arith.constant 0 : index
    %c0_0 = arith.constant 0 : index
    %0 = vector.load %arg4[%c0, %c0_0] : memref<2x32xf32, #tpu.memory_space<vmem>>, vector<1x32xf32>
    %c1 = arith.constant 1 : index
    %c0_1 = arith.constant 0 : index
    %1 = vector.load %arg4[%c1, %c0_1] : memref<2x32xf32, #tpu.memory_space<vmem>>, vector<1x32xf32>
    %c0_2 = arith.constant 0 : index
    %c0_3 = arith.constant 0 : index
    %2 = vector.load %arg2[%c0_2, %c0_3] : memref<2x32xf32, #tpu.memory_space<vmem>>, vector<2x32xf32>
    %c0_4 = arith.constant 0 : index
    %c0_5 = arith.constant 0 : index
    %3 = vector.load %arg3[%c0_4, %c0_5] : memref<16x32xf32, #tpu.memory_space<vmem>>, vector<2x32xf32>
    %4 = arith.addf %2, %3 : vector<2x32xf32>
    %cst = arith.constant dense<0.000000e+00> : vector<2xf32>
    %5 = vector.multi_reduction <add>, %4, %cst [1] : vector<2x32xf32> to vector<2xf32>
    %6 = vector.shape_cast %5 : vector<2xf32> to vector<2x1xf32>
    %cst_6 = arith.constant 3.200000e+01 : f32
    %7 = vector.broadcast %cst_6 : f32 to vector<2x1xf32>
    %8 = arith.divf %6, %7 : vector<2x1xf32>
    %9 = vector.broadcast %8 : vector<2x1xf32> to vector<2x32xf32>
    %10 = arith.subf %4, %9 : vector<2x32xf32>
    %11 = arith.mulf %10, %10 : vector<2x32xf32>
    %cst_7 = arith.constant dense<0.000000e+00> : vector<2xf32>
    %12 = vector.multi_reduction <add>, %11, %cst_7 [1] : vector<2x32xf32> to vector<2xf32>
    %13 = vector.shape_cast %12 : vector<2xf32> to vector<2x1xf32>
    %cst_8 = arith.constant 3.200000e+01 : f32
    %14 = vector.broadcast %cst_8 : f32 to vector<2x1xf32>
    %15 = arith.divf %13, %14 : vector<2x1xf32>
    %16 = vector.broadcast %8 : vector<2x1xf32> to vector<2x32xf32>
    %17 = arith.subf %4, %16 : vector<2x32xf32>
    %cst_9 = arith.constant 9.99999996E-13 : f32
    %18 = vector.broadcast %cst_9 : f32 to vector<2x1xf32>
    %19 = arith.addf %15, %18 : vector<2x1xf32>
    %20 = math.rsqrt %19 : vector<2x1xf32>
    %21 = vector.broadcast %20 : vector<2x1xf32> to vector<2x32xf32>
    %22 = arith.mulf %17, %21 : vector<2x32xf32>
    %23 = vector.broadcast %0 : vector<1x32xf32> to vector<2x32xf32>
    %24 = arith.mulf %22, %23 : vector<2x32xf32>
    %25 = vector.broadcast %1 : vector<1x32xf32> to vector<2x32xf32>
    %26 = arith.addf %24, %25 : vector<2x32xf32>
    %27 = vector.extract_strided_slice %26 {offsets = [0, 0], sizes = [1, 32], strides = [1, 1]} : vector<2x32xf32> to vector<1x32xf32>
    %28 = vector.extract_strided_slice %26 {offsets = [1, 0], sizes = [1, 32], strides = [1, 1]} : vector<2x32xf32> to vector<1x32xf32>
    %c0_10 = arith.constant 0 : index
    %c0_11 = arith.constant 0 : index
    %29 = vector.load %arg14[%c0_10, %c0_11] : memref<16x32xf32, #tpu.memory_space<vmem>>, vector<1x32xf32>
    tpu.vector_store %arg14[%c0_10, %c0_11], %27 {strides = array<i32>} : memref<16x32xf32, #tpu.memory_space<vmem>>, vector<1x32xf32>,
    %c0_12 = arith.constant 0 : index
    %c0_13 = arith.constant 0 : index
    %c0_14 = arith.constant 0 : index
    %30 = vector.load %arg0[%c0_12, %c0_13, %c0_14] : memref<2x1x32xf32, #tpu.memory_space<vmem>>, vector<1x1x32xf32>
    %31 = vector.shape_cast %30 : vector<1x1x32xf32> to vector<1x32xf32>
    %c1_15 = arith.constant 1 : index
    %c0_16 = arith.constant 0 : index
    %32 = vector.load %arg14[%c1_15, %c0_16] : memref<16x32xf32, #tpu.memory_space<vmem>>, vector<1x32xf32>
    tpu.vector_store %arg14[%c1_15, %c0_16], %31 {strides = array<i32>} : memref<16x32xf32, #tpu.memory_space<vmem>>, vector<1x32xf32>,
    %c2 = arith.constant 2 : index
    %c0_17 = arith.constant 0 : index
    %33 = vector.load %arg14[%c2, %c0_17] : memref<16x32xf32, #tpu.memory_space<vmem>>, vector<1x32xf32>
    tpu.vector_store %arg14[%c2, %c0_17], %28 {strides = array<i32>} : memref<16x32xf32, #tpu.memory_space<vmem>>, vector<1x32xf32>,
    %c0_18 = arith.constant 0 : index
    %c0_19 = arith.constant 0 : index
    %c0_20 = arith.constant 0 : index
    %34 = vector.load %arg1[%c0_18, %c0_19, %c0_20] : memref<2x4x32xf32, #tpu.memory_space<vmem>>, vector<1x4x32xf32>
    %35 = vector.shape_cast %34 : vector<1x4x32xf32> to vector<4x32xf32>
    %c3 = arith.constant 3 : index
    %c0_21 = arith.constant 0 : index
    %36 = vector.load %arg14[%c3, %c0_21] : memref<16x32xf32, #tpu.memory_space<vmem>>, vector<4x32xf32>
    tpu.vector_store %arg14[%c3, %c0_21], %35 {strides = array<i32>} : memref<16x32xf32, #tpu.memory_space<vmem>>, vector<4x32xf32>,
    %c7 = arith.constant 7 : index
    %c0_22 = arith.constant 0 : index
    %37 = vector.load %arg14[%c7, %c0_22] : memref<16x32xf32, #tpu.memory_space<vmem>>, vector<1x32xf32>
    tpu.vector_store %arg14[%c7, %c0_22], %28 {strides = array<i32>} : memref<16x32xf32, #tpu.memory_space<vmem>>, vector<1x32xf32>,
    %c8 = arith.constant 8 : index
    %c0_23 = arith.constant 0 : index
    %38 = vector.load %arg14[%c8, %c0_23] : memref<16x32xf32, #tpu.memory_space<vmem>>, vector<1x32xf32>
    tpu.vector_store %arg14[%c8, %c0_23], %27 {strides = array<i32>} : memref<16x32xf32, #tpu.memory_space<vmem>>, vector<1x32xf32>,
    %c1_24 = arith.constant 1 : index
    %c0_25 = arith.constant 0 : index
    %c0_26 = arith.constant 0 : index
    %39 = vector.load %arg0[%c1_24, %c0_25, %c0_26] : memref<2x1x32xf32, #tpu.memory_space<vmem>>, vector<1x1x32xf32>
    %40 = vector.shape_cast %39 : vector<1x1x32xf32> to vector<1x32xf32>
    %c9 = arith.constant 9 : index
    %c0_27 = arith.constant 0 : index
    %41 = vector.load %arg14[%c9, %c0_27] : memref<16x32xf32, #tpu.memory_space<vmem>>, vector<1x32xf32>
    tpu.vector_store %arg14[%c9, %c0_27], %40 {strides = array<i32>} : memref<16x32xf32, #tpu.memory_space<vmem>>, vector<1x32xf32>,
    %c10 = arith.constant 10 : index
    %c0_28 = arith.constant 0 : index
    %42 = vector.load %arg14[%c10, %c0_28] : memref<16x32xf32, #tpu.memory_space<vmem>>, vector<1x32xf32>
    tpu.vector_store %arg14[%c10, %c0_28], %28 {strides = array<i32>} : memref<16x32xf32, #tpu.memory_space<vmem>>, vector<1x32xf32>,
    %c1_29 = arith.constant 1 : index
    %c0_30 = arith.constant 0 : index
    %c0_31 = arith.constant 0 : index
    %43 = vector.load %arg1[%c1_29, %c0_30, %c0_31] : memref<2x4x32xf32, #tpu.memory_space<vmem>>, vector<1x4x32xf32>
    %44 = vector.shape_cast %43 : vector<1x4x32xf32> to vector<4x32xf32>
    %c11 = arith.constant 11 : index
    %c0_32 = arith.constant 0 : index
    %45 = vector.load %arg14[%c11, %c0_32] : memref<16x32xf32, #tpu.memory_space<vmem>>, vector<4x32xf32>
    tpu.vector_store %arg14[%c11, %c0_32], %44 {strides = array<i32>} : memref<16x32xf32, #tpu.memory_space<vmem>>, vector<4x32xf32>,
    %c15 = arith.constant 15 : index
    %c0_33 = arith.constant 0 : index
    %46 = vector.load %arg14[%c15, %c0_33] : memref<16x32xf32, #tpu.memory_space<vmem>>, vector<1x32xf32>
    tpu.vector_store %arg14[%c15, %c0_33], %28 {strides = array<i32>} : memref<16x32xf32, #tpu.memory_space<vmem>>, vector<1x32xf32>,
    %c0_34 = arith.constant 0 : index
    %c0_35 = arith.constant 0 : index
    %47 = vector.load %arg14[%c0_34, %c0_35] : memref<16x32xf32, #tpu.memory_space<vmem>>, vector<16x32xf32>
    %c0_36 = arith.constant 0 : index
    %c0_37 = arith.constant 0 : index
    %48 = vector.load %arg3[%c0_36, %c0_37] : memref<16x32xf32, #tpu.memory_space<vmem>>, vector<16x32xf32>
    %49 = arith.addf %47, %48 : vector<16x32xf32>
    %cst_38 = arith.constant dense<0.000000e+00> : vector<16xf32>
    %50 = vector.multi_reduction <add>, %49, %cst_38 [1] : vector<16x32xf32> to vector<16xf32>
    %51 = vector.shape_cast %50 : vector<16xf32> to vector<16x1xf32>
    %cst_39 = arith.constant 3.200000e+01 : f32
    %52 = vector.broadcast %cst_39 : f32 to vector<16x1xf32>
    %53 = arith.divf %51, %52 : vector<16x1xf32>
    %54 = vector.broadcast %53 : vector<16x1xf32> to vector<16x32xf32>
    %55 = arith.subf %49, %54 : vector<16x32xf32>
    %56 = arith.mulf %55, %55 : vector<16x32xf32>
    %cst_40 = arith.constant dense<0.000000e+00> : vector<16xf32>
    %57 = vector.multi_reduction <add>, %56, %cst_40 [1] : vector<16x32xf32> to vector<16xf32>
    %58 = vector.shape_cast %57 : vector<16xf32> to vector<16x1xf32>
    %cst_41 = arith.constant 3.200000e+01 : f32
    %59 = vector.broadcast %cst_41 : f32 to vector<16x1xf32>
    %60 = arith.divf %58, %59 : vector<16x1xf32>
    %61 = vector.broadcast %53 : vector<16x1xf32> to vector<16x32xf32>
    %62 = arith.subf %49, %61 : vector<16x32xf32>
    %cst_42 = arith.constant 9.99999996E-13 : f32
    %63 = vector.broadcast %cst_42 : f32 to vector<16x1xf32>
    %64 = arith.addf %60, %63 : vector<16x1xf32>
    %65 = math.rsqrt %64 : vector<16x1xf32>
    %66 = vector.broadcast %65 : vector<16x1xf32> to vector<16x32xf32>
    %67 = arith.mulf %62, %66 : vector<16x32xf32>
    %68 = vector.broadcast %0 : vector<1x32xf32> to vector<16x32xf32>
    %69 = arith.mulf %67, %68 : vector<16x32xf32>
    %70 = vector.broadcast %1 : vector<1x32xf32> to vector<16x32xf32>
    %71 = arith.addf %69, %70 : vector<16x32xf32>
    %c0_43 = arith.constant 0 : index
    %c0_44 = arith.constant 0 : index
    %72 = vector.load %arg5[%c0_43, %c0_44] : memref<16x16xf32, #tpu.memory_space<vmem>>, vector<16x16xf32>
    %c0_45 = arith.constant 0 : index
    %c0_46 = arith.constant 0 : index
    %c0_47 = arith.constant 0 : index
    %73 = vector.load %arg6[%c0_45, %c0_46, %c0_47] : memref<2x32x192xf32, #tpu.memory_space<vmem>>, vector<1x32x192xf32>
    %74 = vector.shape_cast %73 : vector<1x32x192xf32> to vector<32x192xf32>
    %c0_48 = arith.constant 0 : index
    %c0_49 = arith.constant 0 : index
    %c0_50 = arith.constant 0 : index
    %75 = vector.load %arg8[%c0_48, %c0_49, %c0_50] : memref<2x8x128xf32, #tpu.memory_space<vmem>>, vector<1x8x128xf32>
    %76 = vector.shape_cast %75 : vector<1x8x128xf32> to vector<8x128xf32>
    %c0_51 = arith.constant 0 : index
    %c0_52 = arith.constant 0 : index
    %c0_53 = arith.constant 0 : index
    %77 = vector.load %arg7[%c0_51, %c0_52, %c0_53] : memref<2x64x32xf32, #tpu.memory_space<vmem>>, vector<1x64x32xf32>
    %78 = vector.shape_cast %77 : vector<1x64x32xf32> to vector<64x32xf32>
    %79 = vector.extract_strided_slice %74 {offsets = [0, 0], sizes = [32, 96], strides = [1, 1]} : vector<32x192xf32> to vector<32x96xf32>
    %80 = vector.extract_strided_slice %74 {offsets = [0, 96], sizes = [32, 32], strides = [1, 1]} : vector<32x192xf32> to vector<32x32xf32>
    %81 = vector.extract_strided_slice %74 {offsets = [0, 128], sizes = [32, 64], strides = [1, 1]} : vector<32x192xf32> to vector<32x64xf32>
    %82 = vector.extract_strided_slice %76 {offsets = [0, 0], sizes = [1, 96], strides = [1, 1]} : vector<8x128xf32> to vector<1x96xf32>
    %83 = vector.extract_strided_slice %76 {offsets = [1, 0], sizes = [1, 32], strides = [1, 1]} : vector<8x128xf32> to vector<1x32xf32>
    %84 = vector.extract_strided_slice %76 {offsets = [2, 0], sizes = [1, 32], strides = [1, 1]} : vector<8x128xf32> to vector<1x32xf32>
    %85 = vector.extract_strided_slice %76 {offsets = [3, 0], sizes = [1, 32], strides = [1, 1]} : vector<8x128xf32> to vector<1x32xf32>
    %86 = vector.extract_strided_slice %76 {offsets = [4, 0], sizes = [1, 64], strides = [1, 1]} : vector<8x128xf32> to vector<1x64xf32>
    %87 = vector.extract_strided_slice %76 {offsets = [5, 0], sizes = [1, 32], strides = [1, 1]} : vector<8x128xf32> to vector<1x32xf32>
    %88 = vector.extract_strided_slice %76 {offsets = [6, 0], sizes = [1, 32], strides = [1, 1]} : vector<8x128xf32> to vector<1x32xf32>
    %89 = vector.extract_strided_slice %76 {offsets = [7, 0], sizes = [1, 32], strides = [1, 1]} : vector<8x128xf32> to vector<1x32xf32>
    %cst_54 = arith.constant dense<0.000000e+00> : vector<16x96xf32>
    %90 = tpu.matmul %71, %79, %cst_54 {dimension_numbers = #tpu.dot_dimension_numbers<[1], [0], [0], [1], [0, 0, 1, 1], [], []>} : vector<16x32xf32>, vector<32x96xf32>, vector<16x96xf32> -> vector<16x96xf32>
    %91 = vector.broadcast %82 : vector<1x96xf32> to vector<16x96xf32>
    %92 = arith.addf %90, %91 : vector<16x96xf32>
    %93 = vector.extract_strided_slice %92 {offsets = [0, 0], sizes = [16, 32], strides = [1, 1]} : vector<16x96xf32> to vector<16x32xf32>
    %94 = vector.extract_strided_slice %92 {offsets = [0, 32], sizes = [16, 32], strides = [1, 1]} : vector<16x96xf32> to vector<16x32xf32>
    %95 = vector.extract_strided_slice %92 {offsets = [0, 64], sizes = [16, 32], strides = [1, 1]} : vector<16x96xf32> to vector<16x32xf32>
    %cst_55 = arith.constant 0.000000e+00 : f32
    %96 = vector.broadcast %cst_55 : f32 to vector<16x32xf32>
    %97 = vector.broadcast %83 : vector<1x32xf32> to vector<16x32xf32>
    %98 = arith.addf %96, %97 : vector<16x32xf32>
    %99 = vector.extract_strided_slice %93 {offsets = [0, 0], sizes = [16, 8], strides = [1, 1]} : vector<16x32xf32> to vector<16x8xf32>
    %100 = vector.extract_strided_slice %94 {offsets = [0, 0], sizes = [16, 8], strides = [1, 1]} : vector<16x32xf32> to vector<16x8xf32>
    %cst_56 = arith.constant dense<0.000000e+00> : vector<16x16xf32>
    %101 = tpu.matmul %99, %100, %cst_56 {dimension_numbers = #tpu.dot_dimension_numbers<[1], [1], [0], [0], [0, 0, 1, 0], [], []>} : vector<16x8xf32>, vector<16x8xf32>, vector<16x16xf32> -> vector<16x16xf32>
    %cst_57 = arith.constant 0.353553385 : f32
    %102 = vector.broadcast %cst_57 : f32 to vector<16x16xf32>
    %103 = arith.mulf %101, %102 : vector<16x16xf32>
    %104 = arith.addf %103, %72 : vector<16x16xf32>
    %cst_58 = arith.constant dense<0xFF800000> : vector<16xf32>
    %105 = vector.multi_reduction <maximumf>, %104, %cst_58 [1] : vector<16x16xf32> to vector<16xf32>
    %106 = vector.shape_cast %105 : vector<16xf32> to vector<16x1xf32>
    %107 = vector.broadcast %106 : vector<16x1xf32> to vector<16x16xf32>
    %108 = arith.subf %104, %107 : vector<16x16xf32>
    %109 = math.exp %108 : vector<16x16xf32>
    %cst_59 = arith.constant dense<0.000000e+00> : vector<16xf32>
    %110 = vector.multi_reduction <add>, %109, %cst_59 [1] : vector<16x16xf32> to vector<16xf32>
    %111 = vector.shape_cast %110 : vector<16xf32> to vector<16x1xf32>
    %112 = vector.broadcast %111 : vector<16x1xf32> to vector<16x16xf32>
    %113 = arith.divf %109, %112 : vector<16x16xf32>
    %114 = vector.extract_strided_slice %95 {offsets = [0, 0], sizes = [16, 8], strides = [1, 1]} : vector<16x32xf32> to vector<16x8xf32>
    %cst_60 = arith.constant dense<0.000000e+00> : vector<16x8xf32>
    %115 = tpu.matmul %113, %114, %cst_60 {dimension_numbers = #tpu.dot_dimension_numbers<[1], [0], [0], [1], [0, 0, 1, 1], [], []>} : vector<16x16xf32>, vector<16x8xf32>, vector<16x8xf32> -> vector<16x8xf32>
    %116 = vector.extract_strided_slice %80 {offsets = [0, 0], sizes = [8, 32], strides = [1, 1]} : vector<32x32xf32> to vector<8x32xf32>
    %cst_61 = arith.constant dense<0.000000e+00> : vector<16x32xf32>
    %117 = tpu.matmul %115, %116, %cst_61 {dimension_numbers = #tpu.dot_dimension_numbers<[1], [0], [0], [1], [0, 0, 1, 1], [], []>} : vector<16x8xf32>, vector<8x32xf32>, vector<16x32xf32> -> vector<16x32xf32>
    %118 = arith.addf %98, %117 : vector<16x32xf32>
    %119 = vector.extract_strided_slice %93 {offsets = [0, 8], sizes = [16, 8], strides = [1, 1]} : vector<16x32xf32> to vector<16x8xf32>
    %120 = vector.extract_strided_slice %94 {offsets = [0, 8], sizes = [16, 8], strides = [1, 1]} : vector<16x32xf32> to vector<16x8xf32>
    %cst_62 = arith.constant dense<0.000000e+00> : vector<16x16xf32>
    %121 = tpu.matmul %119, %120, %cst_62 {dimension_numbers = #tpu.dot_dimension_numbers<[1], [1], [0], [0], [0, 0, 1, 0], [], []>} : vector<16x8xf32>, vector<16x8xf32>, vector<16x16xf32> -> vector<16x16xf32>
    %cst_63 = arith.constant 0.353553385 : f32
    %122 = vector.broadcast %cst_63 : f32 to vector<16x16xf32>
    %123 = arith.mulf %121, %122 : vector<16x16xf32>
    %124 = arith.addf %123, %72 : vector<16x16xf32>
    %cst_64 = arith.constant dense<0xFF800000> : vector<16xf32>
    %125 = vector.multi_reduction <maximumf>, %124, %cst_64 [1] : vector<16x16xf32> to vector<16xf32>
    %126 = vector.shape_cast %125 : vector<16xf32> to vector<16x1xf32>
    %127 = vector.broadcast %126 : vector<16x1xf32> to vector<16x16xf32>
    %128 = arith.subf %124, %127 : vector<16x16xf32>
    %129 = math.exp %128 : vector<16x16xf32>
    %cst_65 = arith.constant dense<0.000000e+00> : vector<16xf32>
    %130 = vector.multi_reduction <add>, %129, %cst_65 [1] : vector<16x16xf32> to vector<16xf32>
    %131 = vector.shape_cast %130 : vector<16xf32> to vector<16x1xf32>
    %132 = vector.broadcast %131 : vector<16x1xf32> to vector<16x16xf32>
    %133 = arith.divf %129, %132 : vector<16x16xf32>
    %134 = vector.extract_strided_slice %95 {offsets = [0, 8], sizes = [16, 8], strides = [1, 1]} : vector<16x32xf32> to vector<16x8xf32>
    %cst_66 = arith.constant dense<0.000000e+00> : vector<16x8xf32>
    %135 = tpu.matmul %133, %134, %cst_66 {dimension_numbers = #tpu.dot_dimension_numbers<[1], [0], [0], [1], [0, 0, 1, 1], [], []>} : vector<16x16xf32>, vector<16x8xf32>, vector<16x8xf32> -> vector<16x8xf32>
    %136 = vector.extract_strided_slice %80 {offsets = [8, 0], sizes = [8, 32], strides = [1, 1]} : vector<32x32xf32> to vector<8x32xf32>
    %cst_67 = arith.constant dense<0.000000e+00> : vector<16x32xf32>
    %137 = tpu.matmul %135, %136, %cst_67 {dimension_numbers = #tpu.dot_dimension_numbers<[1], [0], [0], [1], [0, 0, 1, 1], [], []>} : vector<16x8xf32>, vector<8x32xf32>, vector<16x32xf32> -> vector<16x32xf32>
    %138 = arith.addf %118, %137 : vector<16x32xf32>
    %139 = vector.extract_strided_slice %93 {offsets = [0, 16], sizes = [16, 8], strides = [1, 1]} : vector<16x32xf32> to vector<16x8xf32>
    %140 = vector.extract_strided_slice %94 {offsets = [0, 16], sizes = [16, 8], strides = [1, 1]} : vector<16x32xf32> to vector<16x8xf32>
    %cst_68 = arith.constant dense<0.000000e+00> : vector<16x16xf32>
    %141 = tpu.matmul %139, %140, %cst_68 {dimension_numbers = #tpu.dot_dimension_numbers<[1], [1], [0], [0], [0, 0, 1, 0], [], []>} : vector<16x8xf32>, vector<16x8xf32>, vector<16x16xf32> -> vector<16x16xf32>
    %cst_69 = arith.constant 0.353553385 : f32
    %142 = vector.broadcast %cst_69 : f32 to vector<16x16xf32>
    %143 = arith.mulf %141, %142 : vector<16x16xf32>
    %144 = arith.addf %143, %72 : vector<16x16xf32>
    %cst_70 = arith.constant dense<0xFF800000> : vector<16xf32>
    %145 = vector.multi_reduction <maximumf>, %144, %cst_70 [1] : vector<16x16xf32> to vector<16xf32>
    %146 = vector.shape_cast %145 : vector<16xf32> to vector<16x1xf32>
    %147 = vector.broadcast %146 : vector<16x1xf32> to vector<16x16xf32>
    %148 = arith.subf %144, %147 : vector<16x16xf32>
    %149 = math.exp %148 : vector<16x16xf32>
    %cst_71 = arith.constant dense<0.000000e+00> : vector<16xf32>
    %150 = vector.multi_reduction <add>, %149, %cst_71 [1] : vector<16x16xf32> to vector<16xf32>
    %151 = vector.shape_cast %150 : vector<16xf32> to vector<16x1xf32>
    %152 = vector.broadcast %151 : vector<16x1xf32> to vector<16x16xf32>
    %153 = arith.divf %149, %152 : vector<16x16xf32>
    %154 = vector.extract_strided_slice %95 {offsets = [0, 16], sizes = [16, 8], strides = [1, 1]} : vector<16x32xf32> to vector<16x8xf32>
    %cst_72 = arith.constant dense<0.000000e+00> : vector<16x8xf32>
    %155 = tpu.matmul %153, %154, %cst_72 {dimension_numbers = #tpu.dot_dimension_numbers<[1], [0], [0], [1], [0, 0, 1, 1], [], []>} : vector<16x16xf32>, vector<16x8xf32>, vector<16x8xf32> -> vector<16x8xf32>
    %156 = vector.extract_strided_slice %80 {offsets = [16, 0], sizes = [8, 32], strides = [1, 1]} : vector<32x32xf32> to vector<8x32xf32>
    %cst_73 = arith.constant dense<0.000000e+00> : vector<16x32xf32>
    %157 = tpu.matmul %155, %156, %cst_73 {dimension_numbers = #tpu.dot_dimension_numbers<[1], [0], [0], [1], [0, 0, 1, 1], [], []>} : vector<16x8xf32>, vector<8x32xf32>, vector<16x32xf32> -> vector<16x32xf32>
    %158 = arith.addf %138, %157 : vector<16x32xf32>
    %159 = vector.extract_strided_slice %93 {offsets = [0, 24], sizes = [16, 8], strides = [1, 1]} : vector<16x32xf32> to vector<16x8xf32>
    %160 = vector.extract_strided_slice %94 {offsets = [0, 24], sizes = [16, 8], strides = [1, 1]} : vector<16x32xf32> to vector<16x8xf32>
    %cst_74 = arith.constant dense<0.000000e+00> : vector<16x16xf32>
    %161 = tpu.matmul %159, %160, %cst_74 {dimension_numbers = #tpu.dot_dimension_numbers<[1], [1], [0], [0], [0, 0, 1, 0], [], []>} : vector<16x8xf32>, vector<16x8xf32>, vector<16x16xf32> -> vector<16x16xf32>
    %cst_75 = arith.constant 0.353553385 : f32
    %162 = vector.broadcast %cst_75 : f32 to vector<16x16xf32>
    %163 = arith.mulf %161, %162 : vector<16x16xf32>
    %164 = arith.addf %163, %72 : vector<16x16xf32>
    %cst_76 = arith.constant dense<0xFF800000> : vector<16xf32>
    %165 = vector.multi_reduction <maximumf>, %164, %cst_76 [1] : vector<16x16xf32> to vector<16xf32>
    %166 = vector.shape_cast %165 : vector<16xf32> to vector<16x1xf32>
    %167 = vector.broadcast %166 : vector<16x1xf32> to vector<16x16xf32>
    %168 = arith.subf %164, %167 : vector<16x16xf32>
    %169 = math.exp %168 : vector<16x16xf32>
    %cst_77 = arith.constant dense<0.000000e+00> : vector<16xf32>
    %170 = vector.multi_reduction <add>, %169, %cst_77 [1] : vector<16x16xf32> to vector<16xf32>
    %171 = vector.shape_cast %170 : vector<16xf32> to vector<16x1xf32>
    %172 = vector.broadcast %171 : vector<16x1xf32> to vector<16x16xf32>
    %173 = arith.divf %169, %172 : vector<16x16xf32>
    %174 = vector.extract_strided_slice %95 {offsets = [0, 24], sizes = [16, 8], strides = [1, 1]} : vector<16x32xf32> to vector<16x8xf32>
    %cst_78 = arith.constant dense<0.000000e+00> : vector<16x8xf32>
    %175 = tpu.matmul %173, %174, %cst_78 {dimension_numbers = #tpu.dot_dimension_numbers<[1], [0], [0], [1], [0, 0, 1, 1], [], []>} : vector<16x16xf32>, vector<16x8xf32>, vector<16x8xf32> -> vector<16x8xf32>
    %176 = vector.extract_strided_slice %80 {offsets = [24, 0], sizes = [8, 32], strides = [1, 1]} : vector<32x32xf32> to vector<8x32xf32>
    %cst_79 = arith.constant dense<0.000000e+00> : vector<16x32xf32>
    %177 = tpu.matmul %175, %176, %cst_79 {dimension_numbers = #tpu.dot_dimension_numbers<[1], [0], [0], [1], [0, 0, 1, 1], [], []>} : vector<16x8xf32>, vector<8x32xf32>, vector<16x32xf32> -> vector<16x32xf32>
    %178 = arith.addf %158, %177 : vector<16x32xf32>
    %179 = arith.addf %71, %178 : vector<16x32xf32>
    %cst_80 = arith.constant dense<0.000000e+00> : vector<16xf32>
    %180 = vector.multi_reduction <add>, %179, %cst_80 [1] : vector<16x32xf32> to vector<16xf32>
    %181 = vector.shape_cast %180 : vector<16xf32> to vector<16x1xf32>
    %cst_81 = arith.constant 3.200000e+01 : f32
    %182 = vector.broadcast %cst_81 : f32 to vector<16x1xf32>
    %183 = arith.divf %181, %182 : vector<16x1xf32>
    %184 = vector.broadcast %183 : vector<16x1xf32> to vector<16x32xf32>
    %185 = arith.subf %179, %184 : vector<16x32xf32>
    %186 = arith.mulf %185, %185 : vector<16x32xf32>
    %cst_82 = arith.constant dense<0.000000e+00> : vector<16xf32>
    %187 = vector.multi_reduction <add>, %186, %cst_82 [1] : vector<16x32xf32> to vector<16xf32>
    %188 = vector.shape_cast %187 : vector<16xf32> to vector<16x1xf32>
    %cst_83 = arith.constant 3.200000e+01 : f32
    %189 = vector.broadcast %cst_83 : f32 to vector<16x1xf32>
    %190 = arith.divf %188, %189 : vector<16x1xf32>
    %191 = vector.broadcast %183 : vector<16x1xf32> to vector<16x32xf32>
    %192 = arith.subf %179, %191 : vector<16x32xf32>
    %cst_84 = arith.constant 9.99999996E-13 : f32
    %193 = vector.broadcast %cst_84 : f32 to vector<16x1xf32>
    %194 = arith.addf %190, %193 : vector<16x1xf32>
    %195 = math.rsqrt %194 : vector<16x1xf32>
    %196 = vector.broadcast %195 : vector<16x1xf32> to vector<16x32xf32>
    %197 = arith.mulf %192, %196 : vector<16x32xf32>
    %198 = vector.broadcast %84 : vector<1x32xf32> to vector<16x32xf32>
    %199 = arith.mulf %197, %198 : vector<16x32xf32>
    %200 = vector.broadcast %85 : vector<1x32xf32> to vector<16x32xf32>
    %201 = arith.addf %199, %200 : vector<16x32xf32>
    %cst_85 = arith.constant dense<0.000000e+00> : vector<16x64xf32>
    %202 = tpu.matmul %201, %81, %cst_85 {dimension_numbers = #tpu.dot_dimension_numbers<[1], [0], [0], [1], [0, 0, 1, 1], [], []>} : vector<16x32xf32>, vector<32x64xf32>, vector<16x64xf32> -> vector<16x64xf32>
    %203 = vector.broadcast %86 : vector<1x64xf32> to vector<16x64xf32>
    %204 = arith.addf %202, %203 : vector<16x64xf32>
    %cst_86 = arith.constant 5.000000e-01 : f32
    %205 = vector.broadcast %cst_86 : f32 to vector<16x64xf32>
    %206 = arith.mulf %205, %204 : vector<16x64xf32>
    %cst_87 = arith.constant 4.471500e-02 : f32
    %207 = vector.broadcast %cst_87 : f32 to vector<16x64xf32>
    %208 = arith.mulf %207, %204 : vector<16x64xf32>
    %209 = arith.mulf %208, %204 : vector<16x64xf32>
    %210 = arith.mulf %209, %204 : vector<16x64xf32>
    %211 = arith.addf %204, %210 : vector<16x64xf32>
    %cst_88 = arith.constant 0.797884583 : f32
    %212 = vector.broadcast %cst_88 : f32 to vector<16x64xf32>
    %213 = arith.mulf %212, %211 : vector<16x64xf32>
    %214 = math.tanh %213 : vector<16x64xf32>
    %cst_89 = arith.constant 1.000000e+00 : f32
    %215 = vector.broadcast %cst_89 : f32 to vector<16x64xf32>
    %216 = arith.addf %215, %214 : vector<16x64xf32>
    %217 = arith.mulf %206, %216 : vector<16x64xf32>
    %cst_90 = arith.constant dense<0.000000e+00> : vector<16x32xf32>
    %218 = tpu.matmul %217, %78, %cst_90 {dimension_numbers = #tpu.dot_dimension_numbers<[1], [0], [0], [1], [0, 0, 1, 1], [], []>} : vector<16x64xf32>, vector<64x32xf32>, vector<16x32xf32> -> vector<16x32xf32>
    %219 = vector.broadcast %87 : vector<1x32xf32> to vector<16x32xf32>
    %220 = arith.addf %218, %219 : vector<16x32xf32>
    %221 = arith.addf %201, %220 : vector<16x32xf32>
    %cst_91 = arith.constant dense<0.000000e+00> : vector<16xf32>
    %222 = vector.multi_reduction <add>, %221, %cst_91 [1] : vector<16x32xf32> to vector<16xf32>
    %223 = vector.shape_cast %222 : vector<16xf32> to vector<16x1xf32>
    %cst_92 = arith.constant 3.200000e+01 : f32
    %224 = vector.broadcast %cst_92 : f32 to vector<16x1xf32>
    %225 = arith.divf %223, %224 : vector<16x1xf32>
    %226 = vector.broadcast %225 : vector<16x1xf32> to vector<16x32xf32>
    %227 = arith.subf %221, %226 : vector<16x32xf32>
    %228 = arith.mulf %227, %227 : vector<16x32xf32>
    %cst_93 = arith.constant dense<0.000000e+00> : vector<16xf32>
    %229 = vector.multi_reduction <add>, %228, %cst_93 [1] : vector<16x32xf32> to vector<16xf32>
    %230 = vector.shape_cast %229 : vector<16xf32> to vector<16x1xf32>
    %cst_94 = arith.constant 3.200000e+01 : f32
    %231 = vector.broadcast %cst_94 : f32 to vector<16x1xf32>
    %232 = arith.divf %230, %231 : vector<16x1xf32>
    %233 = vector.broadcast %225 : vector<16x1xf32> to vector<16x32xf32>
    %234 = arith.subf %221, %233 : vector<16x32xf32>
    %cst_95 = arith.constant 9.99999996E-13 : f32
    %235 = vector.broadcast %cst_95 : f32 to vector<16x1xf32>
    %236 = arith.addf %232, %235 : vector<16x1xf32>
    %237 = math.rsqrt %236 : vector<16x1xf32>
    %238 = vector.broadcast %237 : vector<16x1xf32> to vector<16x32xf32>
    %239 = arith.mulf %234, %238 : vector<16x32xf32>
    %240 = vector.broadcast %88 : vector<1x32xf32> to vector<16x32xf32>
    %241 = arith.mulf %239, %240 : vector<16x32xf32>
    %242 = vector.broadcast %89 : vector<1x32xf32> to vector<16x32xf32>
    %243 = arith.addf %241, %242 : vector<16x32xf32>
    %c1_96 = arith.constant 1 : index
    %c0_97 = arith.constant 0 : index
    %c0_98 = arith.constant 0 : index
    %244 = vector.load %arg6[%c1_96, %c0_97, %c0_98] : memref<2x32x192xf32, #tpu.memory_space<vmem>>, vector<1x32x192xf32>
    %245 = vector.shape_cast %244 : vector<1x32x192xf32> to vector<32x192xf32>
    %c1_99 = arith.constant 1 : index
    %c0_100 = arith.constant 0 : index
    %c0_101 = arith.constant 0 : index
    %246 = vector.load %arg8[%c1_99, %c0_100, %c0_101] : memref<2x8x128xf32, #tpu.memory_space<vmem>>, vector<1x8x128xf32>
    %247 = vector.shape_cast %246 : vector<1x8x128xf32> to vector<8x128xf32>
    %c1_102 = arith.constant 1 : index
    %c0_103 = arith.constant 0 : index
    %c0_104 = arith.constant 0 : index
    %248 = vector.load %arg7[%c1_102, %c0_103, %c0_104] : memref<2x64x32xf32, #tpu.memory_space<vmem>>, vector<1x64x32xf32>
    %249 = vector.shape_cast %248 : vector<1x64x32xf32> to vector<64x32xf32>
    %250 = vector.extract_strided_slice %245 {offsets = [0, 0], sizes = [32, 96], strides = [1, 1]} : vector<32x192xf32> to vector<32x96xf32>
    %251 = vector.extract_strided_slice %245 {offsets = [0, 96], sizes = [32, 32], strides = [1, 1]} : vector<32x192xf32> to vector<32x32xf32>
    %252 = vector.extract_strided_slice %245 {offsets = [0, 128], sizes = [32, 64], strides = [1, 1]} : vector<32x192xf32> to vector<32x64xf32>
    %253 = vector.extract_strided_slice %247 {offsets = [0, 0], sizes = [1, 96], strides = [1, 1]} : vector<8x128xf32> to vector<1x96xf32>
    %254 = vector.extract_strided_slice %247 {offsets = [1, 0], sizes = [1, 32], strides = [1, 1]} : vector<8x128xf32> to vector<1x32xf32>
    %255 = vector.extract_strided_slice %247 {offsets = [2, 0], sizes = [1, 32], strides = [1, 1]} : vector<8x128xf32> to vector<1x32xf32>
    %256 = vector.extract_strided_slice %247 {offsets = [3, 0], sizes = [1, 32], strides = [1, 1]} : vector<8x128xf32> to vector<1x32xf32>
    %257 = vector.extract_strided_slice %247 {offsets = [4, 0], sizes = [1, 64], strides = [1, 1]} : vector<8x128xf32> to vector<1x64xf32>
    %258 = vector.extract_strided_slice %247 {offsets = [5, 0], sizes = [1, 32], strides = [1, 1]} : vector<8x128xf32> to vector<1x32xf32>
    %259 = vector.extract_strided_slice %247 {offsets = [6, 0], sizes = [1, 32], strides = [1, 1]} : vector<8x128xf32> to vector<1x32xf32>
    %260 = vector.extract_strided_slice %247 {offsets = [7, 0], sizes = [1, 32], strides = [1, 1]} : vector<8x128xf32> to vector<1x32xf32>
    %cst_105 = arith.constant dense<0.000000e+00> : vector<16x96xf32>
    %261 = tpu.matmul %243, %250, %cst_105 {dimension_numbers = #tpu.dot_dimension_numbers<[1], [0], [0], [1], [0, 0, 1, 1], [], []>} : vector<16x32xf32>, vector<32x96xf32>, vector<16x96xf32> -> vector<16x96xf32>
    %262 = vector.broadcast %253 : vector<1x96xf32> to vector<16x96xf32>
    %263 = arith.addf %261, %262 : vector<16x96xf32>
    %264 = vector.extract_strided_slice %263 {offsets = [0, 0], sizes = [16, 32], strides = [1, 1]} : vector<16x96xf32> to vector<16x32xf32>
    %265 = vector.extract_strided_slice %263 {offsets = [0, 32], sizes = [16, 32], strides = [1, 1]} : vector<16x96xf32> to vector<16x32xf32>
    %266 = vector.extract_strided_slice %263 {offsets = [0, 64], sizes = [16, 32], strides = [1, 1]} : vector<16x96xf32> to vector<16x32xf32>
    %cst_106 = arith.constant 0.000000e+00 : f32
    %267 = vector.broadcast %cst_106 : f32 to vector<16x32xf32>
    %268 = vector.broadcast %254 : vector<1x32xf32> to vector<16x32xf32>
    %269 = arith.addf %267, %268 : vector<16x32xf32>
    %270 = vector.extract_strided_slice %264 {offsets = [0, 0], sizes = [16, 8], strides = [1, 1]} : vector<16x32xf32> to vector<16x8xf32>
    %271 = vector.extract_strided_slice %265 {offsets = [0, 0], sizes = [16, 8], strides = [1, 1]} : vector<16x32xf32> to vector<16x8xf32>
    %cst_107 = arith.constant dense<0.000000e+00> : vector<16x16xf32>
    %272 = tpu.matmul %270, %271, %cst_107 {dimension_numbers = #tpu.dot_dimension_numbers<[1], [1], [0], [0], [0, 0, 1, 0], [], []>} : vector<16x8xf32>, vector<16x8xf32>, vector<16x16xf32> -> vector<16x16xf32>
    %cst_108 = arith.constant 0.353553385 : f32
    %273 = vector.broadcast %cst_108 : f32 to vector<16x16xf32>
    %274 = arith.mulf %272, %273 : vector<16x16xf32>
    %275 = arith.addf %274, %72 : vector<16x16xf32>
    %cst_109 = arith.constant dense<0xFF800000> : vector<16xf32>
    %276 = vector.multi_reduction <maximumf>, %275, %cst_109 [1] : vector<16x16xf32> to vector<16xf32>
    %277 = vector.shape_cast %276 : vector<16xf32> to vector<16x1xf32>
    %278 = vector.broadcast %277 : vector<16x1xf32> to vector<16x16xf32>
    %279 = arith.subf %275, %278 : vector<16x16xf32>
    %280 = math.exp %279 : vector<16x16xf32>
    %cst_110 = arith.constant dense<0.000000e+00> : vector<16xf32>
    %281 = vector.multi_reduction <add>, %280, %cst_110 [1] : vector<16x16xf32> to vector<16xf32>
    %282 = vector.shape_cast %281 : vector<16xf32> to vector<16x1xf32>
    %283 = vector.broadcast %282 : vector<16x1xf32> to vector<16x16xf32>
    %284 = arith.divf %280, %283 : vector<16x16xf32>
    %285 = vector.extract_strided_slice %266 {offsets = [0, 0], sizes = [16, 8], strides = [1, 1]} : vector<16x32xf32> to vector<16x8xf32>
    %cst_111 = arith.constant dense<0.000000e+00> : vector<16x8xf32>
    %286 = tpu.matmul %284, %285, %cst_111 {dimension_numbers = #tpu.dot_dimension_numbers<[1], [0], [0], [1], [0, 0, 1, 1], [], []>} : vector<16x16xf32>, vector<16x8xf32>, vector<16x8xf32> -> vector<16x8xf32>
    %287 = vector.extract_strided_slice %251 {offsets = [0, 0], sizes = [8, 32], strides = [1, 1]} : vector<32x32xf32> to vector<8x32xf32>
    %cst_112 = arith.constant dense<0.000000e+00> : vector<16x32xf32>
    %288 = tpu.matmul %286, %287, %cst_112 {dimension_numbers = #tpu.dot_dimension_numbers<[1], [0], [0], [1], [0, 0, 1, 1], [], []>} : vector<16x8xf32>, vector<8x32xf32>, vector<16x32xf32> -> vector<16x32xf32>
    %289 = arith.addf %269, %288 : vector<16x32xf32>
    %290 = vector.extract_strided_slice %264 {offsets = [0, 8], sizes = [16, 8], strides = [1, 1]} : vector<16x32xf32> to vector<16x8xf32>
    %291 = vector.extract_strided_slice %265 {offsets = [0, 8], sizes = [16, 8], strides = [1, 1]} : vector<16x32xf32> to vector<16x8xf32>
    %cst_113 = arith.constant dense<0.000000e+00> : vector<16x16xf32>
    %292 = tpu.matmul %290, %291, %cst_113 {dimension_numbers = #tpu.dot_dimension_numbers<[1], [1], [0], [0], [0, 0, 1, 0], [], []>} : vector<16x8xf32>, vector<16x8xf32>, vector<16x16xf32> -> vector<16x16xf32>
    %cst_114 = arith.constant 0.353553385 : f32
    %293 = vector.broadcast %cst_114 : f32 to vector<16x16xf32>
    %294 = arith.mulf %292, %293 : vector<16x16xf32>
    %295 = arith.addf %294, %72 : vector<16x16xf32>
    %cst_115 = arith.constant dense<0xFF800000> : vector<16xf32>
    %296 = vector.multi_reduction <maximumf>, %295, %cst_115 [1] : vector<16x16xf32> to vector<16xf32>
    %297 = vector.shape_cast %296 : vector<16xf32> to vector<16x1xf32>
    %298 = vector.broadcast %297 : vector<16x1xf32> to vector<16x16xf32>
    %299 = arith.subf %295, %298 : vector<16x16xf32>
    %300 = math.exp %299 : vector<16x16xf32>
    %cst_116 = arith.constant dense<0.000000e+00> : vector<16xf32>
    %301 = vector.multi_reduction <add>, %300, %cst_116 [1] : vector<16x16xf32> to vector<16xf32>
    %302 = vector.shape_cast %301 : vector<16xf32> to vector<16x1xf32>
    %303 = vector.broadcast %302 : vector<16x1xf32> to vector<16x16xf32>
    %304 = arith.divf %300, %303 : vector<16x16xf32>
    %305 = vector.extract_strided_slice %266 {offsets = [0, 8], sizes = [16, 8], strides = [1, 1]} : vector<16x32xf32> to vector<16x8xf32>
    %cst_117 = arith.constant dense<0.000000e+00> : vector<16x8xf32>
    %306 = tpu.matmul %304, %305, %cst_117 {dimension_numbers = #tpu.dot_dimension_numbers<[1], [0], [0], [1], [0, 0, 1, 1], [], []>} : vector<16x16xf32>, vector<16x8xf32>, vector<16x8xf32> -> vector<16x8xf32>
    %307 = vector.extract_strided_slice %251 {offsets = [8, 0], sizes = [8, 32], strides = [1, 1]} : vector<32x32xf32> to vector<8x32xf32>
    %cst_118 = arith.constant dense<0.000000e+00> : vector<16x32xf32>
    %308 = tpu.matmul %306, %307, %cst_118 {dimension_numbers = #tpu.dot_dimension_numbers<[1], [0], [0], [1], [0, 0, 1, 1], [], []>} : vector<16x8xf32>, vector<8x32xf32>, vector<16x32xf32> -> vector<16x32xf32>
    %309 = arith.addf %289, %308 : vector<16x32xf32>
    %310 = vector.extract_strided_slice %264 {offsets = [0, 16], sizes = [16, 8], strides = [1, 1]} : vector<16x32xf32> to vector<16x8xf32>
    %311 = vector.extract_strided_slice %265 {offsets = [0, 16], sizes = [16, 8], strides = [1, 1]} : vector<16x32xf32> to vector<16x8xf32>
    %cst_119 = arith.constant dense<0.000000e+00> : vector<16x16xf32>
    %312 = tpu.matmul %310, %311, %cst_119 {dimension_numbers = #tpu.dot_dimension_numbers<[1], [1], [0], [0], [0, 0, 1, 0], [], []>} : vector<16x8xf32>, vector<16x8xf32>, vector<16x16xf32> -> vector<16x16xf32>
    %cst_120 = arith.constant 0.353553385 : f32
    %313 = vector.broadcast %cst_120 : f32 to vector<16x16xf32>
    %314 = arith.mulf %312, %313 : vector<16x16xf32>
    %315 = arith.addf %314, %72 : vector<16x16xf32>
    %cst_121 = arith.constant dense<0xFF800000> : vector<16xf32>
    %316 = vector.multi_reduction <maximumf>, %315, %cst_121 [1] : vector<16x16xf32> to vector<16xf32>
    %317 = vector.shape_cast %316 : vector<16xf32> to vector<16x1xf32>
    %318 = vector.broadcast %317 : vector<16x1xf32> to vector<16x16xf32>
    %319 = arith.subf %315, %318 : vector<16x16xf32>
    %320 = math.exp %319 : vector<16x16xf32>
    %cst_122 = arith.constant dense<0.000000e+00> : vector<16xf32>
    %321 = vector.multi_reduction <add>, %320, %cst_122 [1] : vector<16x16xf32> to vector<16xf32>
    %322 = vector.shape_cast %321 : vector<16xf32> to vector<16x1xf32>
    %323 = vector.broadcast %322 : vector<16x1xf32> to vector<16x16xf32>
    %324 = arith.divf %320, %323 : vector<16x16xf32>
    %325 = vector.extract_strided_slice %266 {offsets = [0, 16], sizes = [16, 8], strides = [1, 1]} : vector<16x32xf32> to vector<16x8xf32>
    %cst_123 = arith.constant dense<0.000000e+00> : vector<16x8xf32>
    %326 = tpu.matmul %324, %325, %cst_123 {dimension_numbers = #tpu.dot_dimension_numbers<[1], [0], [0], [1], [0, 0, 1, 1], [], []>} : vector<16x16xf32>, vector<16x8xf32>, vector<16x8xf32> -> vector<16x8xf32>
    %327 = vector.extract_strided_slice %251 {offsets = [16, 0], sizes = [8, 32], strides = [1, 1]} : vector<32x32xf32> to vector<8x32xf32>
    %cst_124 = arith.constant dense<0.000000e+00> : vector<16x32xf32>
    %328 = tpu.matmul %326, %327, %cst_124 {dimension_numbers = #tpu.dot_dimension_numbers<[1], [0], [0], [1], [0, 0, 1, 1], [], []>} : vector<16x8xf32>, vector<8x32xf32>, vector<16x32xf32> -> vector<16x32xf32>
    %329 = arith.addf %309, %328 : vector<16x32xf32>
    %330 = vector.extract_strided_slice %264 {offsets = [0, 24], sizes = [16, 8], strides = [1, 1]} : vector<16x32xf32> to vector<16x8xf32>
    %331 = vector.extract_strided_slice %265 {offsets = [0, 24], sizes = [16, 8], strides = [1, 1]} : vector<16x32xf32> to vector<16x8xf32>
    %cst_125 = arith.constant dense<0.000000e+00> : vector<16x16xf32>
    %332 = tpu.matmul %330, %331, %cst_125 {dimension_numbers = #tpu.dot_dimension_numbers<[1], [1], [0], [0], [0, 0, 1, 0], [], []>} : vector<16x8xf32>, vector<16x8xf32>, vector<16x16xf32> -> vector<16x16xf32>
    %cst_126 = arith.constant 0.353553385 : f32
    %333 = vector.broadcast %cst_126 : f32 to vector<16x16xf32>
    %334 = arith.mulf %332, %333 : vector<16x16xf32>
    %335 = arith.addf %334, %72 : vector<16x16xf32>
    %cst_127 = arith.constant dense<0xFF800000> : vector<16xf32>
    %336 = vector.multi_reduction <maximumf>, %335, %cst_127 [1] : vector<16x16xf32> to vector<16xf32>
    %337 = vector.shape_cast %336 : vector<16xf32> to vector<16x1xf32>
    %338 = vector.broadcast %337 : vector<16x1xf32> to vector<16x16xf32>
    %339 = arith.subf %335, %338 : vector<16x16xf32>
    %340 = math.exp %339 : vector<16x16xf32>
    %cst_128 = arith.constant dense<0.000000e+00> : vector<16xf32>
    %341 = vector.multi_reduction <add>, %340, %cst_128 [1] : vector<16x16xf32> to vector<16xf32>
    %342 = vector.shape_cast %341 : vector<16xf32> to vector<16x1xf32>
    %343 = vector.broadcast %342 : vector<16x1xf32> to vector<16x16xf32>
    %344 = arith.divf %340, %343 : vector<16x16xf32>
    %345 = vector.extract_strided_slice %266 {offsets = [0, 24], sizes = [16, 8], strides = [1, 1]} : vector<16x32xf32> to vector<16x8xf32>
    %cst_129 = arith.constant dense<0.000000e+00> : vector<16x8xf32>
    %346 = tpu.matmul %344, %345, %cst_129 {dimension_numbers = #tpu.dot_dimension_numbers<[1], [0], [0], [1], [0, 0, 1, 1], [], []>} : vector<16x16xf32>, vector<16x8xf32>, vector<16x8xf32> -> vector<16x8xf32>
    %347 = vector.extract_strided_slice %251 {offsets = [24, 0], sizes = [8, 32], strides = [1, 1]} : vector<32x32xf32> to vector<8x32xf32>
    %cst_130 = arith.constant dense<0.000000e+00> : vector<16x32xf32>
    %348 = tpu.matmul %346, %347, %cst_130 {dimension_numbers = #tpu.dot_dimension_numbers<[1], [0], [0], [1], [0, 0, 1, 1], [], []>} : vector<16x8xf32>, vector<8x32xf32>, vector<16x32xf32> -> vector<16x32xf32>
    %349 = arith.addf %329, %348 : vector<16x32xf32>
    %350 = arith.addf %243, %349 : vector<16x32xf32>
    %cst_131 = arith.constant dense<0.000000e+00> : vector<16xf32>
    %351 = vector.multi_reduction <add>, %350, %cst_131 [1] : vector<16x32xf32> to vector<16xf32>
    %352 = vector.shape_cast %351 : vector<16xf32> to vector<16x1xf32>
    %cst_132 = arith.constant 3.200000e+01 : f32
    %353 = vector.broadcast %cst_132 : f32 to vector<16x1xf32>
    %354 = arith.divf %352, %353 : vector<16x1xf32>
    %355 = vector.broadcast %354 : vector<16x1xf32> to vector<16x32xf32>
    %356 = arith.subf %350, %355 : vector<16x32xf32>
    %357 = arith.mulf %356, %356 : vector<16x32xf32>
    %cst_133 = arith.constant dense<0.000000e+00> : vector<16xf32>
    %358 = vector.multi_reduction <add>, %357, %cst_133 [1] : vector<16x32xf32> to vector<16xf32>
    %359 = vector.shape_cast %358 : vector<16xf32> to vector<16x1xf32>
    %cst_134 = arith.constant 3.200000e+01 : f32
    %360 = vector.broadcast %cst_134 : f32 to vector<16x1xf32>
    %361 = arith.divf %359, %360 : vector<16x1xf32>
    %362 = vector.broadcast %354 : vector<16x1xf32> to vector<16x32xf32>
    %363 = arith.subf %350, %362 : vector<16x32xf32>
    %cst_135 = arith.constant 9.99999996E-13 : f32
    %364 = vector.broadcast %cst_135 : f32 to vector<16x1xf32>
    %365 = arith.addf %361, %364 : vector<16x1xf32>
    %366 = math.rsqrt %365 : vector<16x1xf32>
    %367 = vector.broadcast %366 : vector<16x1xf32> to vector<16x32xf32>
    %368 = arith.mulf %363, %367 : vector<16x32xf32>
    %369 = vector.broadcast %255 : vector<1x32xf32> to vector<16x32xf32>
    %370 = arith.mulf %368, %369 : vector<16x32xf32>
    %371 = vector.broadcast %256 : vector<1x32xf32> to vector<16x32xf32>
    %372 = arith.addf %370, %371 : vector<16x32xf32>
    %cst_136 = arith.constant dense<0.000000e+00> : vector<16x64xf32>
    %373 = tpu.matmul %372, %252, %cst_136 {dimension_numbers = #tpu.dot_dimension_numbers<[1], [0], [0], [1], [0, 0, 1, 1], [], []>} : vector<16x32xf32>, vector<32x64xf32>, vector<16x64xf32> -> vector<16x64xf32>
    %374 = vector.broadcast %257 : vector<1x64xf32> to vector<16x64xf32>
    %375 = arith.addf %373, %374 : vector<16x64xf32>
    %cst_137 = arith.constant 5.000000e-01 : f32
    %376 = vector.broadcast %cst_137 : f32 to vector<16x64xf32>
    %377 = arith.mulf %376, %375 : vector<16x64xf32>
    %cst_138 = arith.constant 4.471500e-02 : f32
    %378 = vector.broadcast %cst_138 : f32 to vector<16x64xf32>
    %379 = arith.mulf %378, %375 : vector<16x64xf32>
    %380 = arith.mulf %379, %375 : vector<16x64xf32>
    %381 = arith.mulf %380, %375 : vector<16x64xf32>
    %382 = arith.addf %375, %381 : vector<16x64xf32>
    %cst_139 = arith.constant 0.797884583 : f32
    %383 = vector.broadcast %cst_139 : f32 to vector<16x64xf32>
    %384 = arith.mulf %383, %382 : vector<16x64xf32>
    %385 = math.tanh %384 : vector<16x64xf32>
    %cst_140 = arith.constant 1.000000e+00 : f32
    %386 = vector.broadcast %cst_140 : f32 to vector<16x64xf32>
    %387 = arith.addf %386, %385 : vector<16x64xf32>
    %388 = arith.mulf %377, %387 : vector<16x64xf32>
    %cst_141 = arith.constant dense<0.000000e+00> : vector<16x32xf32>
    %389 = tpu.matmul %388, %249, %cst_141 {dimension_numbers = #tpu.dot_dimension_numbers<[1], [0], [0], [1], [0, 0, 1, 1], [], []>} : vector<16x64xf32>, vector<64x32xf32>, vector<16x32xf32> -> vector<16x32xf32>
    %390 = vector.broadcast %258 : vector<1x32xf32> to vector<16x32xf32>
    %391 = arith.addf %389, %390 : vector<16x32xf32>
    %392 = arith.addf %372, %391 : vector<16x32xf32>
    %cst_142 = arith.constant dense<0.000000e+00> : vector<16xf32>
    %393 = vector.multi_reduction <add>, %392, %cst_142 [1] : vector<16x32xf32> to vector<16xf32>
    %394 = vector.shape_cast %393 : vector<16xf32> to vector<16x1xf32>
    %cst_143 = arith.constant 3.200000e+01 : f32
    %395 = vector.broadcast %cst_143 : f32 to vector<16x1xf32>
    %396 = arith.divf %394, %395 : vector<16x1xf32>
    %397 = vector.broadcast %396 : vector<16x1xf32> to vector<16x32xf32>
    %398 = arith.subf %392, %397 : vector<16x32xf32>
    %399 = arith.mulf %398, %398 : vector<16x32xf32>
    %cst_144 = arith.constant dense<0.000000e+00> : vector<16xf32>
    %400 = vector.multi_reduction <add>, %399, %cst_144 [1] : vector<16x32xf32> to vector<16xf32>
    %401 = vector.shape_cast %400 : vector<16xf32> to vector<16x1xf32>
    %cst_145 = arith.constant 3.200000e+01 : f32
    %402 = vector.broadcast %cst_145 : f32 to vector<16x1xf32>
    %403 = arith.divf %401, %402 : vector<16x1xf32>
    %404 = vector.broadcast %396 : vector<16x1xf32> to vector<16x32xf32>
    %405 = arith.subf %392, %404 : vector<16x32xf32>
    %cst_146 = arith.constant 9.99999996E-13 : f32
    %406 = vector.broadcast %cst_146 : f32 to vector<16x1xf32>
    %407 = arith.addf %403, %406 : vector<16x1xf32>
    %408 = math.rsqrt %407 : vector<16x1xf32>
    %409 = vector.broadcast %408 : vector<16x1xf32> to vector<16x32xf32>
    %410 = arith.mulf %405, %409 : vector<16x32xf32>
    %411 = vector.broadcast %259 : vector<1x32xf32> to vector<16x32xf32>
    %412 = arith.mulf %410, %411 : vector<16x32xf32>
    %413 = vector.broadcast %260 : vector<1x32xf32> to vector<16x32xf32>
    %414 = arith.addf %412, %413 : vector<16x32xf32>
    %415 = vector.extract_strided_slice %414 {offsets = [0, 0], sizes = [8, 32], strides = [1, 1]} : vector<16x32xf32> to vector<8x32xf32>
    %c0_147 = arith.constant 0 : index
    %c0_148 = arith.constant 0 : index
    %c0_149 = arith.constant 0 : index
    %416 = vector.load %arg12[%c0_147, %c0_148, %c0_149] : memref<2x8x32xf32, #tpu.memory_space<vmem>>, vector<1x8x32xf32>
    %417 = vector.shape_cast %416 : vector<1x8x32xf32> to vector<8x32xf32>
    %418 = vector.shape_cast %415 : vector<8x32xf32> to vector<1x8x32xf32>
    tpu.vector_store %arg12[%c0_147, %c0_148, %c0_149], %418 {strides = array<i32>} : memref<2x8x32xf32, #tpu.memory_space<vmem>>, vector<1x8x32xf32>,
    %419 = vector.extract_strided_slice %414 {offsets = [8, 0], sizes = [8, 32], strides = [1, 1]} : vector<16x32xf32> to vector<8x32xf32>
    %c1_150 = arith.constant 1 : index
    %c0_151 = arith.constant 0 : index
    %c0_152 = arith.constant 0 : index
    %420 = vector.load %arg12[%c1_150, %c0_151, %c0_152] : memref<2x8x32xf32, #tpu.memory_space<vmem>>, vector<1x8x32xf32>
    %421 = vector.shape_cast %420 : vector<1x8x32xf32> to vector<8x32xf32>
    %422 = vector.shape_cast %419 : vector<8x32xf32> to vector<1x8x32xf32>
    tpu.vector_store %arg12[%c1_150, %c0_151, %c0_152], %422 {strides = array<i32>} : memref<2x8x32xf32, #tpu.memory_space<vmem>>, vector<1x8x32xf32>,
    %c0_153 = arith.constant 0 : index
    %c0_154 = arith.constant 0 : index
    %423 = vector.load %arg11[%c0_153, %c0_154] : memref<2x128xf32, #tpu.memory_space<vmem>>, vector<1x32xf32>
    %c1_155 = arith.constant 1 : index
    %c0_156 = arith.constant 0 : index
    %424 = vector.load %arg11[%c1_155, %c0_156] : memref<2x128xf32, #tpu.memory_space<vmem>>, vector<1x2xf32>
    %c0_157 = arith.constant 0 : index
    %c0_158 = arith.constant 0 : index
    %425 = vector.load %arg9[%c0_157, %c0_158] : memref<32x32xf32, #tpu.memory_space<vmem>>, vector<32x32xf32>
    %cst_159 = arith.constant dense<0.000000e+00> : vector<16x32xf32>
    %426 = tpu.matmul %414, %425, %cst_159 {dimension_numbers = #tpu.dot_dimension_numbers<[1], [0], [0], [1], [0, 0, 1, 1], [], []>} : vector<16x32xf32>, vector<32x32xf32>, vector<16x32xf32> -> vector<16x32xf32>
    %427 = vector.broadcast %423 : vector<1x32xf32> to vector<16x32xf32>
    %428 = arith.addf %426, %427 : vector<16x32xf32>
    %429 = math.tanh %428 : vector<16x32xf32>
    %c0_160 = arith.constant 0 : index
    %c0_161 = arith.constant 0 : index
    %430 = vector.load %arg10[%c0_160, %c0_161] : memref<32x2xf32, #tpu.memory_space<vmem>>, vector<32x2xf32>
    %cst_162 = arith.constant dense<0.000000e+00> : vector<16x2xf32>
    %431 = tpu.matmul %429, %430, %cst_162 {dimension_numbers = #tpu.dot_dimension_numbers<[1], [0], [0], [1], [0, 0, 1, 1], [], []>} : vector<16x32xf32>, vector<32x2xf32>, vector<16x2xf32> -> vector<16x2xf32>
    %432 = vector.broadcast %424 : vector<1x2xf32> to vector<16x2xf32>
    %433 = arith.addf %431, %432 : vector<16x2xf32>
    %cst_163 = arith.constant dense<0xFF800000> : vector<16xf32>
    %434 = vector.multi_reduction <maximumf>, %433, %cst_163 [1] : vector<16x2xf32> to vector<16xf32>
    %435 = vector.shape_cast %434 : vector<16xf32> to vector<16x1xf32>
    %436 = vector.broadcast %435 : vector<16x1xf32> to vector<16x2xf32>
    %437 = arith.subf %433, %436 : vector<16x2xf32>
    %438 = math.exp %437 : vector<16x2xf32>
    %cst_164 = arith.constant dense<0.000000e+00> : vector<16xf32>
    %439 = vector.multi_reduction <add>, %438, %cst_164 [1] : vector<16x2xf32> to vector<16xf32>
    %440 = vector.shape_cast %439 : vector<16xf32> to vector<16x1xf32>
    %441 = vector.broadcast %440 : vector<16x1xf32> to vector<16x2xf32>
    %442 = arith.divf %438, %441 : vector<16x2xf32>
    %443 = vector.broadcast %435 : vector<16x1xf32> to vector<16x2xf32>
    %444 = arith.subf %433, %443 : vector<16x2xf32>
    %445 = math.log %440 : vector<16x1xf32>
    %446 = vector.broadcast %445 : vector<16x1xf32> to vector<16x2xf32>
    %447 = arith.subf %444, %446 : vector<16x2xf32>
    %448 = vector.extract_strided_slice %433 {offsets = [0, 0], sizes = [1, 2], strides = [1, 1]} : vector<16x2xf32> to vector<1x2xf32>
    %c0_165 = arith.constant 0 : index
    %c0_166 = arith.constant 0 : index
    %449 = vector.load %arg13[%c0_165, %c0_166] : memref<6x2xf32, #tpu.memory_space<vmem>>, vector<1x2xf32>
    tpu.vector_store %arg13[%c0_165, %c0_166], %448 {strides = array<i32>} : memref<6x2xf32, #tpu.memory_space<vmem>>, vector<1x2xf32>,
    %450 = vector.extract_strided_slice %442 {offsets = [0, 0], sizes = [1, 2], strides = [1, 1]} : vector<16x2xf32> to vector<1x2xf32>
    %c2_167 = arith.constant 2 : index
    %c0_168 = arith.constant 0 : index
    %451 = vector.load %arg13[%c2_167, %c0_168] : memref<6x2xf32, #tpu.memory_space<vmem>>, vector<1x2xf32>
    tpu.vector_store %arg13[%c2_167, %c0_168], %450 {strides = array<i32>} : memref<6x2xf32, #tpu.memory_space<vmem>>, vector<1x2xf32>,
    %452 = vector.extract_strided_slice %447 {offsets = [0, 0], sizes = [1, 2], strides = [1, 1]} : vector<16x2xf32> to vector<1x2xf32>
    %c4 = arith.constant 4 : index
    %c0_169 = arith.constant 0 : index
    %453 = vector.load %arg13[%c4, %c0_169] : memref<6x2xf32, #tpu.memory_space<vmem>>, vector<1x2xf32>
    tpu.vector_store %arg13[%c4, %c0_169], %452 {strides = array<i32>} : memref<6x2xf32, #tpu.memory_space<vmem>>, vector<1x2xf32>,
    %454 = vector.extract_strided_slice %433 {offsets = [8, 0], sizes = [1, 2], strides = [1, 1]} : vector<16x2xf32> to vector<1x2xf32>
    %c1_170 = arith.constant 1 : index
    %c0_171 = arith.constant 0 : index
    %455 = vector.load %arg13[%c1_170, %c0_171] : memref<6x2xf32, #tpu.memory_space<vmem>>, vector<1x2xf32>
    tpu.vector_store %arg13[%c1_170, %c0_171], %454 {strides = array<i32>} : memref<6x2xf32, #tpu.memory_space<vmem>>, vector<1x2xf32>,
    %456 = vector.extract_strided_slice %442 {offsets = [8, 0], sizes = [1, 2], strides = [1, 1]} : vector<16x2xf32> to vector<1x2xf32>
    %c3_172 = arith.constant 3 : index
    %c0_173 = arith.constant 0 : index
    %457 = vector.load %arg13[%c3_172, %c0_173] : memref<6x2xf32, #tpu.memory_space<vmem>>, vector<1x2xf32>
    tpu.vector_store %arg13[%c3_172, %c0_173], %456 {strides = array<i32>} : memref<6x2xf32, #tpu.memory_space<vmem>>, vector<1x2xf32>,
    %458 = vector.extract_strided_slice %447 {offsets = [8, 0], sizes = [1, 2], strides = [1, 1]} : vector<16x2xf32> to vector<1x2xf32>
    %c5 = arith.constant 5 : index
    %c0_174 = arith.constant 0 : index
    %459 = vector.load %arg13[%c5, %c0_174] : memref<6x2xf32, #tpu.memory_space<vmem>>, vector<1x2xf32>
    tpu.vector_store %arg13[%c5, %c0_174], %458 {strides = array<i32>} : memref<6x2xf32, #tpu.memory_space<vmem>>, vector<1x2xf32>,
    return
  }
}

</mosaic_0001>

<llo_original>
// kernel: tpu_custom_call.1
$region0: #{tpu_custom_call.1}
  #allocation0 [shape = 'u32[]', space=smem, size = 0x4, offset = 0x4, fixed_abs, tag = 'smem constant byte address 0x4 - core index']
  #allocation1 [shape = 'u32[144,128]{1,0:T(1,128)}', space=vmem, size = 0x12000, scoped, tag = 'internal scratch']
  #allocation2 [shape = 'f32[16,32]{1,0:T(8,128)}', space=vmem, size = 0x2000, scoped, tag = 'scratch operand']
  %s0 = inlined_call_operand.vmem [shape: f32[2,1,32], index: 0, kind: input, shape index: {}]
  %s1 = inlined_call_operand.vmem [shape: f32[2,4,32], index: 1, kind: input, shape index: {}]
  %s2 = inlined_call_operand.vmem [shape: f32[2,32], index: 2, kind: input, shape index: {}]
  %s3 = inlined_call_operand.vmem [shape: f32[16,32], index: 3, kind: input, shape index: {}]
  %s4 = inlined_call_operand.vmem [shape: f32[2,32], index: 4, kind: input, shape index: {}]
  %s5 = inlined_call_operand.vmem [shape: f32[16,16], index: 5, kind: input, shape index: {}]
  %s6 = inlined_call_operand.vmem [shape: f32[2,32,192], index: 6, kind: input, shape index: {}]
  %s7 = inlined_call_operand.vmem [shape: f32[2,64,32], index: 7, kind: input, shape index: {}]
  %s8 = inlined_call_operand.vmem [shape: f32[2,8,128], index: 8, kind: input, shape index: {}]
  %s9 = inlined_call_operand.vmem [shape: f32[32,32], index: 9, kind: input, shape index: {}]
  %s10 = inlined_call_operand.vmem [shape: f32[32,2], index: 10, kind: input, shape index: {}]
  %s11 = inlined_call_operand.vmem [shape: f32[2,128], index: 11, kind: input, shape index: {}]
  %s12 = inlined_call_operand.hbm [shape: f32[2,8,32], index: 12, kind: output, shape index: {0}]
  %s13 = inlined_call_operand.vmem [shape: f32[6,2], index: 13, kind: output, shape index: {1}]
  %14 = xla_tuple %s12, %s13
  %s15 = sld [smem:[#allocation0]]
  $region66: #{tpu_custom_call.1} parent=0
    _
  %s17 = ssub.s32 1, %s15
  %s18 = scalar_select 0, %s17, %s15
  $region1: #{tpu_custom_call.1} parent=0
    #allocation3 [shape = 'u8[8192]{0}', space=vmem, size = 0x2000, scoped, tag = 'output window, operand 0, single buffered']
    #allocation4 [shape = 's32[1]{0}', space=sflag, size = 0x4, scoped, tag = 'scoped memory for tpu_custom_call.1']
    %19 = vsyncpa [#allocation4], 0
    // Predicated region
    $region2: #{tpu_custom_call.1} parent=1 // pred_check
      _
    $region3: #{tpu_custom_call.1} parent=1 // pred_check_branch
      %21 = sbr.rel (0) target = $region5
    $region4: #{tpu_custom_call.1} parent=1 // pred_region
      _
    $region5: #{tpu_custom_call.1} parent=1 // pred_fallthru
      _
    // Predicated region
    $region6: #{tpu_custom_call.1} parent=1 // pred_check
      _
    $region7: #{tpu_custom_call.1} parent=1 // pred_check_branch
      %23 = sbr.rel (0) target = $region9
    $region8: #{tpu_custom_call.1} parent=1 // pred_region
      _
    $region9: #{tpu_custom_call.1} parent=1 // pred_fallthru
      _
    // Predicated region
    $region10: #{tpu_custom_call.1} parent=1 // pred_check
      _
    $region11: #{tpu_custom_call.1} parent=1 // pred_check_branch
      %25 = sbr.rel (0) target = $region13
    $region12: #{tpu_custom_call.1} parent=1 // pred_region
      _
    $region13: #{tpu_custom_call.1} parent=1 // pred_fallthru
      _
    // Predicated region
    $region14: #{tpu_custom_call.1} parent=1 // pred_check
      _
    $region15: #{tpu_custom_call.1} parent=1 // pred_check_branch
      %27 = sbr.rel (0) target = $region17
    $region16: #{tpu_custom_call.1} parent=1 // pred_region
      _
    $region17: #{tpu_custom_call.1} parent=1 // pred_fallthru
      _
    // Predicated region
    $region18: #{tpu_custom_call.1} parent=1 // pred_check
      _
    $region19: #{tpu_custom_call.1} parent=1 // pred_check_branch
      %29 = sbr.rel (0) target = $region21
    $region20: #{tpu_custom_call.1} parent=1 // pred_region
      _
    $region21: #{tpu_custom_call.1} parent=1 // pred_fallthru
      _
    // Predicated region
    $region22: #{tpu_custom_call.1} parent=1 // pred_check
      _
    $region23: #{tpu_custom_call.1} parent=1 // pred_check_branch
      %31 = sbr.rel (0) target = $region25
    $region24: #{tpu_custom_call.1} parent=1 // pred_region
      _
    $region25: #{tpu_custom_call.1} parent=1 // pred_fallthru
      _
    // Predicated region
    $region26: #{tpu_custom_call.1} parent=1 // pred_check
      _
    $region27: #{tpu_custom_call.1} parent=1 // pred_check_branch
      %33 = sbr.rel (0) target = $region29
    $region28: #{tpu_custom_call.1} parent=1 // pred_region
      _
    $region29: #{tpu_custom_call.1} parent=1 // pred_fallthru
      _
    // Predicated region
    $region30: #{tpu_custom_call.1} parent=1 // pred_check
      _
    $region31: #{tpu_custom_call.1} parent=1 // pred_check_branch
      %35 = sbr.rel (0) target = $region33
    $region32: #{tpu_custom_call.1} parent=1 // pred_region
      _
    $region33: #{tpu_custom_call.1} parent=1 // pred_fallthru
      _
    // Predicated region
    $region34: #{tpu_custom_call.1} parent=1 // pred_check
      _
    $region35: #{tpu_custom_call.1} parent=1 // pred_check_branch
      %37 = sbr.rel (0) target = $region37
    $region36: #{tpu_custom_call.1} parent=1 // pred_region
      _
    $region37: #{tpu_custom_call.1} parent=1 // pred_fallthru
      _
    // Predicated region
    $region38: #{tpu_custom_call.1} parent=1 // pred_check
      _
    $region39: #{tpu_custom_call.1} parent=1 // pred_check_branch
      %39 = sbr.rel (0) target = $region41
    $region40: #{tpu_custom_call.1} parent=1 // pred_region
      _
    $region41: #{tpu_custom_call.1} parent=1 // pred_fallthru
      _
    // Predicated region
    $region42: #{tpu_custom_call.1} parent=1 // pred_check
      _
    $region43: #{tpu_custom_call.1} parent=1 // pred_check_branch
      %41 = sbr.rel (0) target = $region45
    $region44: #{tpu_custom_call.1} parent=1 // pred_region
      _
    $region45: #{tpu_custom_call.1} parent=1 // pred_fallthru
      _
    // Predicated region
    $region46: #{tpu_custom_call.1} parent=1 // pred_check
      _
    $region47: #{tpu_custom_call.1} parent=1 // pred_check_branch
      %43 = sbr.rel (0) target = $region49
    $region48: #{tpu_custom_call.1} parent=1 // pred_region
      _
    $region49: #{tpu_custom_call.1} parent=1 // pred_fallthru
      _
    %v44 = vld [vmem:[%s4] sm:$0x1]
    %v45 = vld [vmem:[%s4 + $0x1] sm:$0x1]
    %v46 = vld [vmem:[%s2] sm:$0x3]
    %v47 = vld [vmem:[%s3] sm:$0x3]
    %v48 = vadd.f32 %v46, %v47
    %vm49 = vcmask 254976
    %v50 = vsel %vm49, %v48, 0.0
    %51 = vadd.xlane.f32.xlu0 %v50
    %v52 = vpop.xlane.xlu0 %51
    %v53 = vrcp.pop 32.0
    %v54 = vmul.f32 %v52, %v53
    %v55 = vsub.f32 %v48, %v54
    %v56 = vmul.f32 %v55, %v55
    %v57 = vsel %vm49, %v56, 0.0
    %58 = vadd.xlane.f32.xlu0 %v57
    %v59 = vpop.xlane.xlu0 %58
    %v60 = vmul.f32 %v59, %v53
    %v61 = vadd.f32 %v60, 1e-12
    %v62 = vrsqrt.pop %v61
    %v63 = vmul.f32 %v55, %v62
    %v64 = vlaneseq
    %v65 = vshrl.u32 %v64, 7
    %v66 = vsub.s32 0, %v65
    %v67 = vrot.slane %v44, %v66
    %v68 = vmul.f32 %v63, %v67
    %v69 = vlaneseq
    %v70 = vshrl.u32 %v69, 7
    %v71 = vsub.s32 0, %v70
    %v72 = vrot.slane %v45, %v71
    %v73 = vadd.f32 %v68, %v72
    %vm74 = vcmask 253952
    %75 = vst.msk [vmem:[#allocation2] sm:$0x1] %vm74, %v73
    %v76 = vld [vmem:[%s0] sm:$0x1]
    %77 = vst.msk [vmem:[#allocation2 + $0x1] sm:$0x1] %vm74, %v76
    %vm78 = vcmask 254977
    %79 = vst.msk [vmem:[#allocation2 + $0x1] sm:$0x2] %vm78, %v73
    %v80 = vld [vmem:[%s1] sm:$0xf]
    %vm81 = vcmask 257024
    %82 = vst.msk [vmem:[#allocation2 + $0x3] sm:$0xf] %vm81, %v80
    %83 = vst.msk [vmem:[#allocation2 + $0x6] sm:$0x2] %vm78, %v73
    %84 = vst.msk [vmem:[#allocation2 + $0x8] sm:$0x1] %vm74, %v73
    %s85 = scalar_lea.vmem %s0, 1
    %v86 = vld [vmem:[%s85] sm:$0x1]
    %87 = vst.msk [vmem:[#allocation2 + $0x9] sm:$0x1] %vm74, %v86
    %88 = vst.msk [vmem:[#allocation2 + $0x9] sm:$0x2] %vm78, %v73
    %s89 = scalar_lea.vmem %s1, 4
    %v90 = vld [vmem:[%s89] sm:$0xf]
    %91 = vst.msk [vmem:[#allocation2 + $0xb] sm:$0xf] %vm81, %v90
    %92 = vst.msk [vmem:[#allocation2 + $0xe] sm:$0x2] %vm78, %v73
    %v93 = vld [vmem:[#allocation2] sm:$0xff]
    %v94 = vld [vmem:[#allocation2 + $0x8] sm:$0xff]
    %v95 = vld [vmem:[%s3] sm:$0xff]
    %v96 = vld [vmem:[%s3 + $0x8] sm:$0xff]
    %v97 = vadd.f32 %v93, %v95
    %v98 = vadd.f32 %v94, %v96
    %vm99 = vcmask 261120
    %v100 = vsel %vm99, %v97, 0.0
    %101 = vadd.xlane.f32.xlu0 %v100
    %v102 = vpop.xlane.xlu0 %101
    %v103 = vsel %vm99, %v98, 0.0
    %104 = vadd.xlane.f32.xlu0 %v103
    %v105 = vpop.xlane.xlu0 %104
    %v106 = vmul.f32 %v102, %v53
    %v107 = vmul.f32 %v105, %v53
    %v108 = vsub.f32 %v97, %v106
    %v109 = vsub.f32 %v98, %v107
    %v110 = vmul.f32 %v108, %v108
    %v111 = vmul.f32 %v109, %v109
    %v112 = vsel %vm99, %v110, 0.0
    %113 = vadd.xlane.f32.xlu0 %v112
    %v114 = vpop.xlane.xlu0 %113
    %v115 = vsel %vm99, %v111, 0.0
    %116 = vadd.xlane.f32.xlu0 %v115
    %v117 = vpop.xlane.xlu0 %116
    %v118 = vmul.f32 %v114, %v53
    %v119 = vmul.f32 %v117, %v53
    %v120 = vadd.f32 %v118, 1e-12
    %v121 = vadd.f32 %v119, 1e-12
    %v122 = vrsqrt.pop %v120
    %v123 = vrsqrt.pop %v121
    %v124 = vmul.f32 %v108, %v122
    %v125 = vmul.f32 %v109, %v123
    %v126 = vmul.f32 %v124, %v67
    %v127 = vmul.f32 %v125, %v67
    %v128 = vadd.f32 %v126, %v72
    %v129 = vadd.f32 %v127, %v72
    %v130 = vld [vmem:[%s5] sm:$0xff]
    %v131 = vld [vmem:[%s5 + $0x8] sm:$0xff]
    %v132 = vld [vmem:[%s6] sm:$0xff]
    %v133 = vld [vmem:[%s6 + $0x8] sm:$0xff]
    %v134 = vld [vmem:[%s6 + $0x10] sm:$0xff]
    %v135 = vld [vmem:[%s6 + $0x18] sm:$0xff]
    %v136 = vld [vmem:[%s6 + $0x20] sm:$0xff]
    %v137 = vld [vmem:[%s6 + $0x28] sm:$0xff]
    %v138 = vld [vmem:[%s6 + $0x30] sm:$0xff]
    %v139 = vld [vmem:[%s6 + $0x38] sm:$0xff]
    %v140 = vld [vmem:[%s8] sm:$0xff]
    %v141 = vld [vmem:[%s7] sm:$0xff]
    %v142 = vld [vmem:[%s7 + $0x8] sm:$0xff]
    %v143 = vld [vmem:[%s7 + $0x10] sm:$0xff]
    %v144 = vld [vmem:[%s7 + $0x18] sm:$0xff]
    %v145 = vld [vmem:[%s7 + $0x20] sm:$0xff]
    %v146 = vld [vmem:[%s7 + $0x28] sm:$0xff]
    %v147 = vld [vmem:[%s7 + $0x30] sm:$0xff]
    %v148 = vld [vmem:[%s7 + $0x38] sm:$0xff]
    %v149 = vlaneseq
    %v150 = vshrl.u32 %v149, 7
    %v151 = vsub.s32 0, %v150
    %v152 = vrot.slane %v140, %v151
    %v154 = vsel %vm99, %v128, 0
    %v157 = vsel %vm99, %v129, 0
    %159 = vmatprep.subr.mxu0 0.0
    %160 = vmatpush1.msra.mxu0 %v132
    %161 = vmatprep.subr.mxu0 0.0
    %162 = vmatpush1.msra.mxu0 %v134
    %163 = vmatprep.subr.mxu0 0.0
    %164 = vmatpush1.msra.mxu0 %v136
    %165 = vmatprep.subr.mxu0 0.0
    %166 = vmatpush1.msra.mxu0 %v138
    %167 = vmatprep.subr.mxu0 0.0
    %168 = vmatpush1.msra.mxu0 0.0
    %169 = vmatprep.subr.mxu0 0.0
    %170 = vmatpush1.msra.mxu0 0.0
    %171 = vmatprep.subr.mxu0 0.0
    %172 = vmatpush1.msra.mxu0 0.0
    %173 = vmatprep.subr.mxu0 0.0
    %174 = vmatpush1.msra.mxu0 0.0
    %175 = vmatprep.subr.mxu0 0.0
    %176 = vmatpush1.msra.mxu0 0.0
    %177 = vmatprep.subr.mxu0 0.0
    %178 = vmatpush1.msra.mxu0 0.0
    %179 = vmatprep.subr.mxu0 0.0
    %180 = vmatpush1.msra.mxu0 0.0
    %181 = vmatprep.subr.mxu0 0.0
    %182 = vmatpush1.msra.mxu0 0.0
    %183 = vmatprep.subr.mxu0 0.0
    %184 = vmatpush1.msra.mxu0 0.0
    %185 = vmatprep.subr.mxu0 0.0
    %186 = vmatpush1.msra.mxu0 0.0
    %187 = vmatprep.subr.mxu0 0.0
    %188 = vmatpush1.msra.mxu0 0.0
    %189 = vmatprep.subr.mxu0 0.0
    %190 = vmatpush1.msra.mxu0 0.0
    %191 = vmatprep.subr.mxu0 0.0
    %192 = vmatpush1.msra.mxu0 0.0
    %193 = vmatprep.subr.mxu0 0.0
    %194 = vmatpush1.msra.mxu0 0.0
    %195 = vmatprep.subr.mxu0 0.0
    %196 = vmatpush1.msra.mxu0 0.0
    %197 = vmatprep.subr.mxu0 0.0
    %198 = vmatpush1.msra.mxu0 0.0
    %199 = vmatprep.subr.mxu0 0.0
    %200 = vmatpush1.msra.mxu0 0.0
    %201 = vmatprep.subr.mxu0 0.0
    %202 = vmatpush1.msra.mxu0 0.0
    %203 = vmatprep.subr.mxu0 0.0
    %204 = vmatpush1.msra.mxu0 0.0
    %205 = vmatprep.subr.mxu0 0.0
    %206 = vmatpush1.msra.mxu0 0.0
    %207 = vmatprep.subr.mxu0 0.0
    %208 = vmatpush1.msra.mxu0 0.0
    %209 = vmatprep.subr.mxu0 0.0
    %210 = vmatpush1.msra.mxu0 0.0
    %211 = vmatprep.subr.mxu0 0.0
    %212 = vmatpush1.msra.mxu0 0.0
    %213 = vmatprep.subr.mxu0 0.0
    %214 = vmatpush1.msra.mxu0 0.0
    %215 = vmatprep.subr.mxu0 0.0
    %216 = vmatpush1.msra.mxu0 0.0
    %217 = vmatprep.subr.mxu0 0.0
    %218 = vmatpush1.msra.mxu0 0.0
    %219 = vmatprep.subr.mxu0 0.0
    %220 = vmatpush1.msra.mxu0 0.0
    %221 = vmatprep.subr.mxu0 0.0
    %222 = vmatpush1.msra.mxu0 0.0
    %223 = vmatprep.mubr.f32.mxu0 0.0
    %224 = vmatmul.mubr.f32.gmra.mrb[0].mxu0 %v154
    %v225 = vpop.f32.mrb[0].mxu0
    %v226 = vadd.f32 %v152, %v225
    %v227 = vpop.f32.mrb[0].mxu0
    %228 = vmatprep.mubr.f32.mxu0 0.0
    %229 = vmatmul.mubr.f32.gmra.mrb[0].mxu0 %v157
    %v230 = vpop.f32.mrb[0].mxu0
    %v231 = vadd.f32 %v152, %v230
    %v232 = vpop.f32.mrb[0].mxu0
    %233 = vdwg.mxu0
    %v234 = vlaneseq
    %v235 = vshrl.u32 %v234, 7
    %v236 = vsub.s32 1, %v235
    %v237 = vrot.slane %v140, %v236
    %v238 = vadd.f32 %v237, 0.0
    %241 = vrot.lane.b32.xlu0 %v226, 96
    %v242 = vpop.permute.xlu0 %241
    %243 = vrot.lane.b32.xlu0 %v231, 96
    %v244 = vpop.permute.xlu0 %243
    %vm245 = vcmask 64512
    %v246 = vsel %vm245, %v226, 0
    %v248 = vsel %vm245, %v231, 0
    %v250 = vsel %vm245, %v242, 0
    %v252 = vsel %vm245, %v244, 0
    %254 = vmatprep.subr.mxu0 0.0
    %255 = vmatpush1.xpose.msra.mxu0 %v250
    %256 = vmatprep.subr.mxu0 0.0
    %257 = vmatpush1.xpose.msra.mxu0 %v252
    %258 = vmatprep.subr.mxu0 0.0
    %259 = vmatpush1.xpose.msra.mxu0 0.0
    %260 = vmatprep.subr.mxu0 0.0
    %261 = vmatpush1.xpose.msra.mxu0 0.0
    %262 = vmatprep.subr.mxu0 0.0
    %263 = vmatpush1.xpose.msra.mxu0 0.0
    %264 = vmatprep.subr.mxu0 0.0
    %265 = vmatpush1.xpose.msra.mxu0 0.0
    %266 = vmatprep.subr.mxu0 0.0
    %267 = vmatpush1.xpose.msra.mxu0 0.0
    %268 = vmatprep.subr.mxu0 0.0
    %269 = vmatpush1.xpose.msra.mxu0 0.0
    %270 = vmatprep.subr.mxu0 0.0
    %271 = vmatpush1.xpose.msra.mxu0 0.0
    %272 = vmatprep.subr.mxu0 0.0
    %273 = vmatpush1.xpose.msra.mxu0 0.0
    %274 = vmatprep.subr.mxu0 0.0
    %275 = vmatpush1.xpose.msra.mxu0 0.0
    %276 = vmatprep.subr.mxu0 0.0
    %277 = vmatpush1.xpose.msra.mxu0 0.0
    %278 = vmatprep.subr.mxu0 0.0
    %279 = vmatpush1.xpose.msra.mxu0 0.0
    %280 = vmatprep.subr.mxu0 0.0
    %281 = vmatpush1.xpose.msra.mxu0 0.0
    %282 = vmatprep.subr.mxu0 0.0
    %283 = vmatpush1.xpose.msra.mxu0 0.0
    %284 = vmatprep.subr.mxu0 0.0
    %285 = vmatpush1.xpose.msra.mxu0 0.0
    %286 = vmatprep.subr.mxu0 0.0
    %287 = vmatpush1.xpose.msra.mxu0 0.0
    %288 = vmatprep.subr.mxu0 0.0
    %289 = vmatpush1.xpose.msra.mxu0 0.0
    %290 = vmatprep.subr.mxu0 0.0
    %291 = vmatpush1.xpose.msra.mxu0 0.0
    %292 = vmatprep.subr.mxu0 0.0
    %293 = vmatpush1.xpose.msra.mxu0 0.0
    %294 = vmatprep.subr.mxu0 0.0
    %295 = vmatpush1.xpose.msra.mxu0 0.0
    %296 = vmatprep.subr.mxu0 0.0
    %297 = vmatpush1.xpose.msra.mxu0 0.0
    %298 = vmatprep.subr.mxu0 0.0
    %299 = vmatpush1.xpose.msra.mxu0 0.0
    %300 = vmatprep.subr.mxu0 0.0
    %301 = vmatpush1.xpose.msra.mxu0 0.0
    %302 = vmatprep.subr.mxu0 0.0
    %303 = vmatpush1.xpose.msra.mxu0 0.0
    %304 = vmatprep.subr.mxu0 0.0
    %305 = vmatpush1.xpose.msra.mxu0 0.0
    %306 = vmatprep.subr.mxu0 0.0
    %307 = vmatpush1.xpose.msra.mxu0 0.0
    %308 = vmatprep.subr.mxu0 0.0
    %309 = vmatpush1.xpose.msra.mxu0 0.0
    %310 = vmatprep.subr.mxu0 0.0
    %311 = vmatpush1.xpose.msra.mxu0 0.0
    %312 = vmatprep.subr.mxu0 0.0
    %313 = vmatpush1.xpose.msra.mxu0 0.0
    %314 = vmatprep.subr.mxu0 0.0
    %315 = vmatpush1.xpose.msra.mxu0 0.0
    %316 = vmatprep.subr.mxu0 0.0
    %317 = vmatpush1.xpose.msra.mxu0 0.0
    %318 = vmatprep.mubr.f32.mxu0 0.0
    %319 = vmatmul.mubr.f32.gmra.mrb[0].mxu0 %v246
    %v320 = vpop.f32.mrb[0].mxu0
    %v321 = vadd.f32 0.0, %v320
    %v322 = vpop.f32.mrb[0].mxu0
    %323 = vmatprep.mubr.f32.mxu0 0.0
    %324 = vmatmul.mubr.f32.gmra.mrb[0].mxu0 %v248
    %v325 = vpop.f32.mrb[0].mxu0
    %v326 = vadd.f32 0.0, %v325
    %v327 = vpop.f32.mrb[0].mxu0
    %328 = vdwg.mxu0
    %v329 = vmul.f32 %v321, 0.35355338
    %v330 = vmul.f32 %v326, 0.35355338
    %v331 = vadd.f32 %v329, %v130
    %v332 = vadd.f32 %v330, %v131
    %vm333 = vcmask 130048
    %v334 = vsel %vm333, %v331, -inf
    %335 = vmax.xlane.f32.xlu0 %v334
    %v336 = vpop.xlane.xlu0 %335
    %v337 = vsel %vm333, %v332, -inf
    %338 = vmax.xlane.f32.xlu0 %v337
    %v339 = vpop.xlane.xlu0 %338
    %v340 = vsub.f32 %v331, %v336
    %v341 = vsub.f32 %v332, %v339
    %v342 = vmul.f32 %v340, 1.442695
    %v343 = vpow.pop %v342
    %v344 = vmul.f32 %v341, 1.442695
    %v345 = vpow.pop %v344
    %v346 = vsel %vm333, %v343, 0.0
    %347 = vadd.xlane.f32.xlu0 %v346
    %v348 = vpop.xlane.xlu0 %347
    %v349 = vsel %vm333, %v345, 0.0
    %350 = vadd.xlane.f32.xlu0 %v349
    %v351 = vpop.xlane.xlu0 %350
    %v352 = vrcp.pop %v348
    %v353 = vmul.f32 %v343, %v352
    %v354 = vrcp.pop %v351
    %v355 = vmul.f32 %v345, %v354
    %356 = vrot.lane.b32.xlu0 %v226, 64
    %v357 = vpop.permute.xlu0 %356
    %358 = vrot.lane.b32.xlu0 %v231, 64
    %v359 = vpop.permute.xlu0 %358
    %v363 = vsel %vm333, %v353, 0
    %v366 = vsel %vm333, %v355, 0
    %368 = vmatprep.subr.mxu0 0.0
    %369 = vmatpush1.msra.mxu0 %v357
    %370 = vmatprep.subr.mxu0 0.0
    %371 = vmatpush1.msra.mxu0 %v359
    %372 = vmatprep.subr.mxu0 0.0
    %373 = vmatpush1.msra.mxu0 0.0
    %374 = vmatprep.subr.mxu0 0.0
    %375 = vmatpush1.msra.mxu0 0.0
    %376 = vmatprep.subr.mxu0 0.0
    %377 = vmatpush1.msra.mxu0 0.0
    %378 = vmatprep.subr.mxu0 0.0
    %379 = vmatpush1.msra.mxu0 0.0
    %380 = vmatprep.subr.mxu0 0.0
    %381 = vmatpush1.msra.mxu0 0.0
    %382 = vmatprep.subr.mxu0 0.0
    %383 = vmatpush1.msra.mxu0 0.0
    %384 = vmatprep.subr.mxu0 0.0
    %385 = vmatpush1.msra.mxu0 0.0
    %386 = vmatprep.subr.mxu0 0.0
    %387 = vmatpush1.msra.mxu0 0.0
    %388 = vmatprep.subr.mxu0 0.0
    %389 = vmatpush1.msra.mxu0 0.0
    %390 = vmatprep.subr.mxu0 0.0
    %391 = vmatpush1.msra.mxu0 0.0
    %392 = vmatprep.subr.mxu0 0.0
    %393 = vmatpush1.msra.mxu0 0.0
    %394 = vmatprep.subr.mxu0 0.0
    %395 = vmatpush1.msra.mxu0 0.0
    %396 = vmatprep.subr.mxu0 0.0
    %397 = vmatpush1.msra.mxu0 0.0
    %398 = vmatprep.subr.mxu0 0.0
    %399 = vmatpush1.msra.mxu0 0.0
    %400 = vmatprep.subr.mxu0 0.0
    %401 = vmatpush1.msra.mxu0 0.0
    %402 = vmatprep.subr.mxu0 0.0
    %403 = vmatpush1.msra.mxu0 0.0
    %404 = vmatprep.subr.mxu0 0.0
    %405 = vmatpush1.msra.mxu0 0.0
    %406 = vmatprep.subr.mxu0 0.0
    %407 = vmatpush1.msra.mxu0 0.0
    %408 = vmatprep.subr.mxu0 0.0
    %409 = vmatpush1.msra.mxu0 0.0
    %410 = vmatprep.subr.mxu0 0.0
    %411 = vmatpush1.msra.mxu0 0.0
    %412 = vmatprep.subr.mxu0 0.0
    %413 = vmatpush1.msra.mxu0 0.0
    %414 = vmatprep.subr.mxu0 0.0
    %415 = vmatpush1.msra.mxu0 0.0
    %416 = vmatprep.subr.mxu0 0.0
    %417 = vmatpush1.msra.mxu0 0.0
    %418 = vmatprep.subr.mxu0 0.0
    %419 = vmatpush1.msra.mxu0 0.0
    %420 = vmatprep.subr.mxu0 0.0
    %421 = vmatpush1.msra.mxu0 0.0
    %422 = vmatprep.subr.mxu0 0.0
    %423 = vmatpush1.msra.mxu0 0.0
    %424 = vmatprep.subr.mxu0 0.0
    %425 = vmatpush1.msra.mxu0 0.0
    %426 = vmatprep.subr.mxu0 0.0
    %427 = vmatpush1.msra.mxu0 0.0
    %428 = vmatprep.subr.mxu0 0.0
    %429 = vmatpush1.msra.mxu0 0.0
    %430 = vmatprep.subr.mxu0 0.0
    %431 = vmatpush1.msra.mxu0 0.0
    %432 = vmatprep.mubr.f32.mxu0 0.0
    %433 = vmatmul.mubr.f32.gmra.mrb[0].mxu0 %v363
    %v434 = vpop.f32.mrb[0].mxu0
    %v435 = vadd.f32 0.0, %v434
    %v436 = vpop.f32.mrb[0].mxu0
    %437 = vmatprep.mubr.f32.mxu0 0.0
    %438 = vmatmul.mubr.f32.gmra.mrb[0].mxu0 %v366
    %v439 = vpop.f32.mrb[0].mxu0
    %v440 = vadd.f32 0.0, %v439
    %v441 = vpop.f32.mrb[0].mxu0
    %442 = vdwg.mxu0
    %444 = vrot.lane.b32.xlu0 %v132, 32
    %v445 = vpop.permute.xlu0 %444
    %v448 = vsel %vm245, %v435, 0
    %v451 = vsel %vm245, %v440, 0
    %453 = vmatprep.subr.mxu0 0.0
    %454 = vmatpush1.msra.mxu0 %v445
    %455 = vmatprep.subr.mxu0 0.0
    %456 = vmatpush1.msra.mxu0 0.0
    %457 = vmatprep.subr.mxu0 0.0
    %458 = vmatpush1.msra.mxu0 0.0
    %459 = vmatprep.subr.mxu0 0.0
    %460 = vmatpush1.msra.mxu0 0.0
    %461 = vmatprep.subr.mxu0 0.0
    %462 = vmatpush1.msra.mxu0 0.0
    %463 = vmatprep.subr.mxu0 0.0
    %464 = vmatpush1.msra.mxu0 0.0
    %465 = vmatprep.subr.mxu0 0.0
    %466 = vmatpush1.msra.mxu0 0.0
    %467 = vmatprep.subr.mxu0 0.0
    %468 = vmatpush1.msra.mxu0 0.0
    %469 = vmatprep.subr.mxu0 0.0
    %470 = vmatpush1.msra.mxu0 0.0
    %471 = vmatprep.subr.mxu0 0.0
    %472 = vmatpush1.msra.mxu0 0.0
    %473 = vmatprep.subr.mxu0 0.0
    %474 = vmatpush1.msra.mxu0 0.0
    %475 = vmatprep.subr.mxu0 0.0
    %476 = vmatpush1.msra.mxu0 0.0
    %477 = vmatprep.subr.mxu0 0.0
    %478 = vmatpush1.msra.mxu0 0.0
    %479 = vmatprep.subr.mxu0 0.0
    %480 = vmatpush1.msra.mxu0 0.0
    %481 = vmatprep.subr.mxu0 0.0
    %482 = vmatpush1.msra.mxu0 0.0
    %483 = vmatprep.subr.mxu0 0.0
    %484 = vmatpush1.msra.mxu0 0.0
    %485 = vmatprep.subr.mxu0 0.0
    %486 = vmatpush1.msra.mxu0 0.0
    %487 = vmatprep.subr.mxu0 0.0
    %488 = vmatpush1.msra.mxu0 0.0
    %489 = vmatprep.subr.mxu0 0.0
    %490 = vmatpush1.msra.mxu0 0.0
    %491 = vmatprep.subr.mxu0 0.0
    %492 = vmatpush1.msra.mxu0 0.0
    %493 = vmatprep.subr.mxu0 0.0
    %494 = vmatpush1.msra.mxu0 0.0
    %495 = vmatprep.subr.mxu0 0.0
    %496 = vmatpush1.msra.mxu0 0.0
    %497 = vmatprep.subr.mxu0 0.0
    %498 = vmatpush1.msra.mxu0 0.0
    %499 = vmatprep.subr.mxu0 0.0
    %500 = vmatpush1.msra.mxu0 0.0
    %501 = vmatprep.subr.mxu0 0.0
    %502 = vmatpush1.msra.mxu0 0.0
    %503 = vmatprep.subr.mxu0 0.0
    %504 = vmatpush1.msra.mxu0 0.0
    %505 = vmatprep.subr.mxu0 0.0
    %506 = vmatpush1.msra.mxu0 0.0
    %507 = vmatprep.subr.mxu0 0.0
    %508 = vmatpush1.msra.mxu0 0.0
    %509 = vmatprep.subr.mxu0 0.0
    %510 = vmatpush1.msra.mxu0 0.0
    %511 = vmatprep.subr.mxu0 0.0
    %512 = vmatpush1.msra.mxu0 0.0
    %513 = vmatprep.subr.mxu0 0.0
    %514 = vmatpush1.msra.mxu0 0.0
    %515 = vmatprep.subr.mxu0 0.0
    %516 = vmatpush1.msra.mxu0 0.0
    %517 = vmatprep.mubr.f32.mxu0 0.0
    %518 = vmatmul.mubr.f32.gmra.mrb[0].mxu0 %v448
    %v519 = vpop.f32.mrb[0].mxu0
    %v520 = vadd.f32 0.0, %v519
    %v521 = vpop.f32.mrb[0].mxu0
    %522 = vmatprep.mubr.f32.mxu0 0.0
    %523 = vmatmul.mubr.f32.gmra.mrb[0].mxu0 %v451
    %v524 = vpop.f32.mrb[0].mxu0
    %v525 = vadd.f32 0.0, %v524
    %v526 = vpop.f32.mrb[0].mxu0
    %527 = vdwg.mxu0
    %v528 = vadd.f32 %v238, %v520
    %v529 = vadd.f32 %v238, %v525
    %530 = vrot.lane.b32.xlu0 %v226, 120
    %v531 = vpop.permute.xlu0 %530
    %532 = vrot.lane.b32.xlu0 %v231, 120
    %v533 = vpop.permute.xlu0 %532
    %534 = vrot.lane.b32.xlu0 %v226, 88
    %v535 = vpop.permute.xlu0 %534
    %536 = vrot.lane.b32.xlu0 %v231, 88
    %v537 = vpop.permute.xlu0 %536
    %v538 = vsel %vm245, %v531, 0
    %v540 = vsel %vm245, %v533, 0
    %v542 = vsel %vm245, %v535, 0
    %v544 = vsel %vm245, %v537, 0
    %546 = vmatprep.subr.mxu0 0.0
    %547 = vmatpush1.xpose.msra.mxu0 %v542
    %548 = vmatprep.subr.mxu0 0.0
    %549 = vmatpush1.xpose.msra.mxu0 %v544
    %550 = vmatprep.subr.mxu0 0.0
    %551 = vmatpush1.xpose.msra.mxu0 0.0
    %552 = vmatprep.subr.mxu0 0.0
    %553 = vmatpush1.xpose.msra.mxu0 0.0
    %554 = vmatprep.subr.mxu0 0.0
    %555 = vmatpush1.xpose.msra.mxu0 0.0
    %556 = vmatprep.subr.mxu0 0.0
    %557 = vmatpush1.xpose.msra.mxu0 0.0
    %558 = vmatprep.subr.mxu0 0.0
    %559 = vmatpush1.xpose.msra.mxu0 0.0
    %560 = vmatprep.subr.mxu0 0.0
    %561 = vmatpush1.xpose.msra.mxu0 0.0
    %562 = vmatprep.subr.mxu0 0.0
    %563 = vmatpush1.xpose.msra.mxu0 0.0
    %564 = vmatprep.subr.mxu0 0.0
    %565 = vmatpush1.xpose.msra.mxu0 0.0
    %566 = vmatprep.subr.mxu0 0.0
    %567 = vmatpush1.xpose.msra.mxu0 0.0
    %568 = vmatprep.subr.mxu0 0.0
    %569 = vmatpush1.xpose.msra.mxu0 0.0
    %570 = vmatprep.subr.mxu0 0.0
    %571 = vmatpush1.xpose.msra.mxu0 0.0
    %572 = vmatprep.subr.mxu0 0.0
    %573 = vmatpush1.xpose.msra.mxu0 0.0
    %574 = vmatprep.subr.mxu0 0.0
    %575 = vmatpush1.xpose.msra.mxu0 0.0
    %576 = vmatprep.subr.mxu0 0.0
    %577 = vmatpush1.xpose.msra.mxu0 0.0
    %578 = vmatprep.subr.mxu0 0.0
    %579 = vmatpush1.xpose.msra.mxu0 0.0
    %580 = vmatprep.subr.mxu0 0.0
    %581 = vmatpush1.xpose.msra.mxu0 0.0
    %582 = vmatprep.subr.mxu0 0.0
    %583 = vmatpush1.xpose.msra.mxu0 0.0
    %584 = vmatprep.subr.mxu0 0.0
    %585 = vmatpush1.xpose.msra.mxu0 0.0
    %586 = vmatprep.subr.mxu0 0.0
    %587 = vmatpush1.xpose.msra.mxu0 0.0
    %588 = vmatprep.subr.mxu0 0.0
    %589 = vmatpush1.xpose.msra.mxu0 0.0
    %590 = vmatprep.subr.mxu0 0.0
    %591 = vmatpush1.xpose.msra.mxu0 0.0
    %592 = vmatprep.subr.mxu0 0.0
    %593 = vmatpush1.xpose.msra.mxu0 0.0
    %594 = vmatprep.subr.mxu0 0.0
    %595 = vmatpush1.xpose.msra.mxu0 0.0
    %596 = vmatprep.subr.mxu0 0.0
    %597 = vmatpush1.xpose.msra.mxu0 0.0
    %598 = vmatprep.subr.mxu0 0.0
    %599 = vmatpush1.xpose.msra.mxu0 0.0
    %600 = vmatprep.subr.mxu0 0.0
    %601 = vmatpush1.xpose.msra.mxu0 0.0
    %602 = vmatprep.subr.mxu0 0.0
    %603 = vmatpush1.xpose.msra.mxu0 0.0
    %604 = vmatprep.subr.mxu0 0.0
    %605 = vmatpush1.xpose.msra.mxu0 0.0
    %606 = vmatprep.subr.mxu0 0.0
    %607 = vmatpush1.xpose.msra.mxu0 0.0
    %608 = vmatprep.subr.mxu0 0.0
    %609 = vmatpush1.xpose.msra.mxu0 0.0
    %610 = vmatprep.mubr.f32.mxu0 0.0
    %611 = vmatmul.mubr.f32.gmra.mrb[0].mxu0 %v538
    %v612 = vpop.f32.mrb[0].mxu0
    %v613 = vadd.f32 0.0, %v612
    %v614 = vpop.f32.mrb[0].mxu0
    %615 = vmatprep.mubr.f32.mxu0 0.0
    %616 = vmatmul.mubr.f32.gmra.mrb[0].mxu0 %v540
    %v617 = vpop.f32.mrb[0].mxu0
    %v618 = vadd.f32 0.0, %v617
    %v619 = vpop.f32.mrb[0].mxu0
    %620 = vdwg.mxu0
    %v621 = vmul.f32 %v613, 0.35355338
    %v622 = vmul.f32 %v618, 0.35355338
    %v623 = vadd.f32 %v621, %v130
    %v624 = vadd.f32 %v622, %v131
    %v625 = vsel %vm333, %v623, -inf
    %626 = vmax.xlane.f32.xlu0 %v625
    %v627 = vpop.xlane.xlu0 %626
    %v628 = vsel %vm333, %v624, -inf
    %629 = vmax.xlane.f32.xlu0 %v628
    %v630 = vpop.xlane.xlu0 %629
    %v631 = vsub.f32 %v623, %v627
    %v632 = vsub.f32 %v624, %v630
    %v633 = vmul.f32 %v631, 1.442695
    %v634 = vpow.pop %v633
    %v635 = vmul.f32 %v632, 1.442695
    %v636 = vpow.pop %v635
    %v637 = vsel %vm333, %v634, 0.0
    %638 = vadd.xlane.f32.xlu0 %v637
    %v639 = vpop.xlane.xlu0 %638
    %v640 = vsel %vm333, %v636, 0.0
    %641 = vadd.xlane.f32.xlu0 %v640
    %v642 = vpop.xlane.xlu0 %641
    %v643 = vrcp.pop %v639
    %v644 = vmul.f32 %v634, %v643
    %v645 = vrcp.pop %v642
    %v646 = vmul.f32 %v636, %v645
    %647 = vrot.lane.b32.xlu0 %v226, 56
    %v648 = vpop.permute.xlu0 %647
    %649 = vrot.lane.b32.xlu0 %v231, 56
    %v650 = vpop.permute.xlu0 %649
    %v654 = vsel %vm333, %v644, 0
    %v657 = vsel %vm333, %v646, 0
    %659 = vmatprep.subr.mxu0 0.0
    %660 = vmatpush1.msra.mxu0 %v648
    %661 = vmatprep.subr.mxu0 0.0
    %662 = vmatpush1.msra.mxu0 %v650
    %663 = vmatprep.subr.mxu0 0.0
    %664 = vmatpush1.msra.mxu0 0.0
    %665 = vmatprep.subr.mxu0 0.0
    %666 = vmatpush1.msra.mxu0 0.0
    %667 = vmatprep.subr.mxu0 0.0
    %668 = vmatpush1.msra.mxu0 0.0
    %669 = vmatprep.subr.mxu0 0.0
    %670 = vmatpush1.msra.mxu0 0.0
    %671 = vmatprep.subr.mxu0 0.0
    %672 = vmatpush1.msra.mxu0 0.0
    %673 = vmatprep.subr.mxu0 0.0
    %674 = vmatpush1.msra.mxu0 0.0
    %675 = vmatprep.subr.mxu0 0.0
    %676 = vmatpush1.msra.mxu0 0.0
    %677 = vmatprep.subr.mxu0 0.0
    %678 = vmatpush1.msra.mxu0 0.0
    %679 = vmatprep.subr.mxu0 0.0
    %680 = vmatpush1.msra.mxu0 0.0
    %681 = vmatprep.subr.mxu0 0.0
    %682 = vmatpush1.msra.mxu0 0.0
    %683 = vmatprep.subr.mxu0 0.0
    %684 = vmatpush1.msra.mxu0 0.0
    %685 = vmatprep.subr.mxu0 0.0
    %686 = vmatpush1.msra.mxu0 0.0
    %687 = vmatprep.subr.mxu0 0.0
    %688 = vmatpush1.msra.mxu0 0.0
    %689 = vmatprep.subr.mxu0 0.0
    %690 = vmatpush1.msra.mxu0 0.0
    %691 = vmatprep.subr.mxu0 0.0
    %692 = vmatpush1.msra.mxu0 0.0
    %693 = vmatprep.subr.mxu0 0.0
    %694 = vmatpush1.msra.mxu0 0.0
    %695 = vmatprep.subr.mxu0 0.0
    %696 = vmatpush1.msra.mxu0 0.0
    %697 = vmatprep.subr.mxu0 0.0
    %698 = vmatpush1.msra.mxu0 0.0
    %699 = vmatprep.subr.mxu0 0.0
    %700 = vmatpush1.msra.mxu0 0.0
    %701 = vmatprep.subr.mxu0 0.0
    %702 = vmatpush1.msra.mxu0 0.0
    %703 = vmatprep.subr.mxu0 0.0
    %704 = vmatpush1.msra.mxu0 0.0
    %705 = vmatprep.subr.mxu0 0.0
    %706 = vmatpush1.msra.mxu0 0.0
    %707 = vmatprep.subr.mxu0 0.0
    %708 = vmatpush1.msra.mxu0 0.0
    %709 = vmatprep.subr.mxu0 0.0
    %710 = vmatpush1.msra.mxu0 0.0
    %711 = vmatprep.subr.mxu0 0.0
    %712 = vmatpush1.msra.mxu0 0.0
    %713 = vmatprep.subr.mxu0 0.0
    %714 = vmatpush1.msra.mxu0 0.0
    %715 = vmatprep.subr.mxu0 0.0
    %716 = vmatpush1.msra.mxu0 0.0
    %717 = vmatprep.subr.mxu0 0.0
    %718 = vmatpush1.msra.mxu0 0.0
    %719 = vmatprep.subr.mxu0 0.0
    %720 = vmatpush1.msra.mxu0 0.0
    %721 = vmatprep.subr.mxu0 0.0
    %722 = vmatpush1.msra.mxu0 0.0
    %723 = vmatprep.mubr.f32.mxu0 0.0
    %724 = vmatmul.mubr.f32.gmra.mrb[0].mxu0 %v654
    %v725 = vpop.f32.mrb[0].mxu0
    %v726 = vadd.f32 0.0, %v725
    %v727 = vpop.f32.mrb[0].mxu0
    %728 = vmatprep.mubr.f32.mxu0 0.0
    %729 = vmatmul.mubr.f32.gmra.mrb[0].mxu0 %v657
    %v730 = vpop.f32.mrb[0].mxu0
    %v731 = vadd.f32 0.0, %v730
    %v732 = vpop.f32.mrb[0].mxu0
    %733 = vdwg.mxu0
    %735 = vrot.lane.b32.xlu0 %v134, 32
    %v736 = vpop.permute.xlu0 %735
    %v739 = vsel %vm245, %v726, 0
    %v742 = vsel %vm245, %v731, 0
    %744 = vmatprep.subr.mxu0 0.0
    %745 = vmatpush1.msra.mxu0 %v736
    %746 = vmatprep.subr.mxu0 0.0
    %747 = vmatpush1.msra.mxu0 0.0
    %748 = vmatprep.subr.mxu0 0.0
    %749 = vmatpush1.msra.mxu0 0.0
    %750 = vmatprep.subr.mxu0 0.0
    %751 = vmatpush1.msra.mxu0 0.0
    %752 = vmatprep.subr.mxu0 0.0
    %753 = vmatpush1.msra.mxu0 0.0
    %754 = vmatprep.subr.mxu0 0.0
    %755 = vmatpush1.msra.mxu0 0.0
    %756 = vmatprep.subr.mxu0 0.0
    %757 = vmatpush1.msra.mxu0 0.0
    %758 = vmatprep.subr.mxu0 0.0
    %759 = vmatpush1.msra.mxu0 0.0
    %760 = vmatprep.subr.mxu0 0.0
    %761 = vmatpush1.msra.mxu0 0.0
    %762 = vmatprep.subr.mxu0 0.0
    %763 = vmatpush1.msra.mxu0 0.0
    %764 = vmatprep.subr.mxu0 0.0
    %765 = vmatpush1.msra.mxu0 0.0
    %766 = vmatprep.subr.mxu0 0.0
    %767 = vmatpush1.msra.mxu0 0.0
    %768 = vmatprep.subr.mxu0 0.0
    %769 = vmatpush1.msra.mxu0 0.0
    %770 = vmatprep.subr.mxu0 0.0
    %771 = vmatpush1.msra.mxu0 0.0
    %772 = vmatprep.subr.mxu0 0.0
    %773 = vmatpush1.msra.mxu0 0.0
    %774 = vmatprep.subr.mxu0 0.0
    %775 = vmatpush1.msra.mxu0 0.0
    %776 = vmatprep.subr.mxu0 0.0
    %777 = vmatpush1.msra.mxu0 0.0
    %778 = vmatprep.subr.mxu0 0.0
    %779 = vmatpush1.msra.mxu0 0.0
    %780 = vmatprep.subr.mxu0 0.0
    %781 = vmatpush1.msra.mxu0 0.0
    %782 = vmatprep.subr.mxu0 0.0
    %783 = vmatpush1.msra.mxu0 0.0
    %784 = vmatprep.subr.mxu0 0.0
    %785 = vmatpush1.msra.mxu0 0.0
    %786 = vmatprep.subr.mxu0 0.0
    %787 = vmatpush1.msra.mxu0 0.0
    %788 = vmatprep.subr.mxu0 0.0
    %789 = vmatpush1.msra.mxu0 0.0
    %790 = vmatprep.subr.mxu0 0.0
    %791 = vmatpush1.msra.mxu0 0.0
    %792 = vmatprep.subr.mxu0 0.0
    %793 = vmatpush1.msra.mxu0 0.0
    %794 = vmatprep.subr.mxu0 0.0
    %795 = vmatpush1.msra.mxu0 0.0
    %796 = vmatprep.subr.mxu0 0.0
    %797 = vmatpush1.msra.mxu0 0.0
    %798 = vmatprep.subr.mxu0 0.0
    %799 = vmatpush1.msra.mxu0 0.0
    %800 = vmatprep.subr.mxu0 0.0
    %801 = vmatpush1.msra.mxu0 0.0
    %802 = vmatprep.subr.mxu0 0.0
    %803 = vmatpush1.msra.mxu0 0.0
    %804 = vmatprep.subr.mxu0 0.0
    %805 = vmatpush1.msra.mxu0 0.0
    %806 = vmatprep.subr.mxu0 0.0
    %807 = vmatpush1.msra.mxu0 0.0
    %808 = vmatprep.mubr.f32.mxu0 0.0
    %809 = vmatmul.mubr.f32.gmra.mrb[0].mxu0 %v739
    %v810 = vpop.f32.mrb[0].mxu0
    %v811 = vadd.f32 0.0, %v810
    %v812 = vpop.f32.mrb[0].mxu0
    %813 = vmatprep.mubr.f32.mxu0 0.0
    %814 = vmatmul.mubr.f32.gmra.mrb[0].mxu0 %v742
    %v815 = vpop.f32.mrb[0].mxu0
    %v816 = vadd.f32 0.0, %v815
    %v817 = vpop.f32.mrb[0].mxu0
    %818 = vdwg.mxu0
    %v819 = vadd.f32 %v528, %v811
    %v820 = vadd.f32 %v529, %v816
    %821 = vrot.lane.b32.xlu0 %v226, 112
    %v822 = vpop.permute.xlu0 %821
    %823 = vrot.lane.b32.xlu0 %v231, 112
    %v824 = vpop.permute.xlu0 %823
    %825 = vrot.lane.b32.xlu0 %v226, 80
    %v826 = vpop.permute.xlu0 %825
    %827 = vrot.lane.b32.xlu0 %v231, 80
    %v828 = vpop.permute.xlu0 %827
    %v829 = vsel %vm245, %v822, 0
    %v831 = vsel %vm245, %v824, 0
    %v833 = vsel %vm245, %v826, 0
    %v835 = vsel %vm245, %v828, 0
    %837 = vmatprep.subr.mxu0 0.0
    %838 = vmatpush1.xpose.msra.mxu0 %v833
    %839 = vmatprep.subr.mxu0 0.0
    %840 = vmatpush1.xpose.msra.mxu0 %v835
    %841 = vmatprep.subr.mxu0 0.0
    %842 = vmatpush1.xpose.msra.mxu0 0.0
    %843 = vmatprep.subr.mxu0 0.0
    %844 = vmatpush1.xpose.msra.mxu0 0.0
    %845 = vmatprep.subr.mxu0 0.0
    %846 = vmatpush1.xpose.msra.mxu0 0.0
    %847 = vmatprep.subr.mxu0 0.0
    %848 = vmatpush1.xpose.msra.mxu0 0.0
    %849 = vmatprep.subr.mxu0 0.0
    %850 = vmatpush1.xpose.msra.mxu0 0.0
    %851 = vmatprep.subr.mxu0 0.0
    %852 = vmatpush1.xpose.msra.mxu0 0.0
    %853 = vmatprep.subr.mxu0 0.0
    %854 = vmatpush1.xpose.msra.mxu0 0.0
    %855 = vmatprep.subr.mxu0 0.0
    %856 = vmatpush1.xpose.msra.mxu0 0.0
    %857 = vmatprep.subr.mxu0 0.0
    %858 = vmatpush1.xpose.msra.mxu0 0.0
    %859 = vmatprep.subr.mxu0 0.0
    %860 = vmatpush1.xpose.msra.mxu0 0.0
    %861 = vmatprep.subr.mxu0 0.0
    %862 = vmatpush1.xpose.msra.mxu0 0.0
    %863 = vmatprep.subr.mxu0 0.0
    %864 = vmatpush1.xpose.msra.mxu0 0.0
    %865 = vmatprep.subr.mxu0 0.0
    %866 = vmatpush1.xpose.msra.mxu0 0.0
    %867 = vmatprep.subr.mxu0 0.0
    %868 = vmatpush1.xpose.msra.mxu0 0.0
    %869 = vmatprep.subr.mxu0 0.0
    %870 = vmatpush1.xpose.msra.mxu0 0.0
    %871 = vmatprep.subr.mxu0 0.0
    %872 = vmatpush1.xpose.msra.mxu0 0.0
    %873 = vmatprep.subr.mxu0 0.0
    %874 = vmatpush1.xpose.msra.mxu0 0.0
    %875 = vmatprep.subr.mxu0 0.0
    %876 = vmatpush1.xpose.msra.mxu0 0.0
    %877 = vmatprep.subr.mxu0 0.0
    %878 = vmatpush1.xpose.msra.mxu0 0.0
    %879 = vmatprep.subr.mxu0 0.0
    %880 = vmatpush1.xpose.msra.mxu0 0.0
    %881 = vmatprep.subr.mxu0 0.0
    %882 = vmatpush1.xpose.msra.mxu0 0.0
    %883 = vmatprep.subr.mxu0 0.0
    %884 = vmatpush1.xpose.msra.mxu0 0.0
    %885 = vmatprep.subr.mxu0 0.0
    %886 = vmatpush1.xpose.msra.mxu0 0.0
    %887 = vmatprep.subr.mxu0 0.0
    %888 = vmatpush1.xpose.msra.mxu0 0.0
    %889 = vmatprep.subr.mxu0 0.0
    %890 = vmatpush1.xpose.msra.mxu0 0.0
    %891 = vmatprep.subr.mxu0 0.0
    %892 = vmatpush1.xpose.msra.mxu0 0.0
    %893 = vmatprep.subr.mxu0 0.0
    %894 = vmatpush1.xpose.msra.mxu0 0.0
    %895 = vmatprep.subr.mxu0 0.0
    %896 = vmatpush1.xpose.msra.mxu0 0.0
    %897 = vmatprep.subr.mxu0 0.0
    %898 = vmatpush1.xpose.msra.mxu0 0.0
    %899 = vmatprep.subr.mxu0 0.0
    %900 = vmatpush1.xpose.msra.mxu0 0.0
    %901 = vmatprep.mubr.f32.mxu0 0.0
    %902 = vmatmul.mubr.f32.gmra.mrb[0].mxu0 %v829
    %v903 = vpop.f32.mrb[0].mxu0
    %v904 = vadd.f32 0.0, %v903
    %v905 = vpop.f32.mrb[0].mxu0
    %906 = vmatprep.mubr.f32.mxu0 0.0
    %907 = vmatmul.mubr.f32.gmra.mrb[0].mxu0 %v831
    %v908 = vpop.f32.mrb[0].mxu0
    %v909 = vadd.f32 0.0, %v908
    %v910 = vpop.f32.mrb[0].mxu0
    %911 = vdwg.mxu0
    %v912 = vmul.f32 %v904, 0.35355338
    %v913 = vmul.f32 %v909, 0.35355338
    %v914 = vadd.f32 %v912, %v130
    %v915 = vadd.f32 %v913, %v131
    %v916 = vsel %vm333, %v914, -inf
    %917 = vmax.xlane.f32.xlu0 %v916
    %v918 = vpop.xlane.xlu0 %917
    %v919 = vsel %vm333, %v915, -inf
    %920 = vmax.xlane.f32.xlu0 %v919
    %v921 = vpop.xlane.xlu0 %920
    %v922 = vsub.f32 %v914, %v918
    %v923 = vsub.f32 %v915, %v921
    %v924 = vmul.f32 %v922, 1.442695
    %v925 = vpow.pop %v924
    %v926 = vmul.f32 %v923, 1.442695
    %v927 = vpow.pop %v926
    %v928 = vsel %vm333, %v925, 0.0
    %929 = vadd.xlane.f32.xlu0 %v928
    %v930 = vpop.xlane.xlu0 %929
    %v931 = vsel %vm333, %v927, 0.0
    %932 = vadd.xlane.f32.xlu0 %v931
    %v933 = vpop.xlane.xlu0 %932
    %v934 = vrcp.pop %v930
    %v935 = vmul.f32 %v925, %v934
    %v936 = vrcp.pop %v933
    %v937 = vmul.f32 %v927, %v936
    %938 = vrot.lane.b32.xlu0 %v226, 48
    %v939 = vpop.permute.xlu0 %938
    %940 = vrot.lane.b32.xlu0 %v231, 48
    %v941 = vpop.permute.xlu0 %940
    %v945 = vsel %vm333, %v935, 0
    %v948 = vsel %vm333, %v937, 0
    %950 = vmatprep.subr.mxu0 0.0
    %951 = vmatpush1.msra.mxu0 %v939
    %952 = vmatprep.subr.mxu0 0.0
    %953 = vmatpush1.msra.mxu0 %v941
    %954 = vmatprep.subr.mxu0 0.0
    %955 = vmatpush1.msra.mxu0 0.0
    %956 = vmatprep.subr.mxu0 0.0
    %957 = vmatpush1.msra.mxu0 0.0
    %958 = vmatprep.subr.mxu0 0.0
    %959 = vmatpush1.msra.mxu0 0.0
    %960 = vmatprep.subr.mxu0 0.0
    %961 = vmatpush1.msra.mxu0 0.0
    %962 = vmatprep.subr.mxu0 0.0
    %963 = vmatpush1.msra.mxu0 0.0
    %964 = vmatprep.subr.mxu0 0.0
    %965 = vmatpush1.msra.mxu0 0.0
    %966 = vmatprep.subr.mxu0 0.0
    %967 = vmatpush1.msra.mxu0 0.0
    %968 = vmatprep.subr.mxu0 0.0
    %969 = vmatpush1.msra.mxu0 0.0
    %970 = vmatprep.subr.mxu0 0.0
    %971 = vmatpush1.msra.mxu0 0.0
    %972 = vmatprep.subr.mxu0 0.0
    %973 = vmatpush1.msra.mxu0 0.0
    %974 = vmatprep.subr.mxu0 0.0
    %975 = vmatpush1.msra.mxu0 0.0
    %976 = vmatprep.subr.mxu0 0.0
    %977 = vmatpush1.msra.mxu0 0.0
    %978 = vmatprep.subr.mxu0 0.0
    %979 = vmatpush1.msra.mxu0 0.0
    %980 = vmatprep.subr.mxu0 0.0
    %981 = vmatpush1.msra.mxu0 0.0
    %982 = vmatprep.subr.mxu0 0.0
    %983 = vmatpush1.msra.mxu0 0.0
    %984 = vmatprep.subr.mxu0 0.0
    %985 = vmatpush1.msra.mxu0 0.0
    %986 = vmatprep.subr.mxu0 0.0
    %987 = vmatpush1.msra.mxu0 0.0
    %988 = vmatprep.subr.mxu0 0.0
    %989 = vmatpush1.msra.mxu0 0.0
    %990 = vmatprep.subr.mxu0 0.0
    %991 = vmatpush1.msra.mxu0 0.0
    %992 = vmatprep.subr.mxu0 0.0
    %993 = vmatpush1.msra.mxu0 0.0
    %994 = vmatprep.subr.mxu0 0.0
    %995 = vmatpush1.msra.mxu0 0.0
    %996 = vmatprep.subr.mxu0 0.0
    %997 = vmatpush1.msra.mxu0 0.0
    %998 = vmatprep.subr.mxu0 0.0
    %999 = vmatpush1.msra.mxu0 0.0
    %1000 = vmatprep.subr.mxu0 0.0
    %1001 = vmatpush1.msra.mxu0 0.0
    %1002 = vmatprep.subr.mxu0 0.0
    %1003 = vmatpush1.msra.mxu0 0.0
    %1004 = vmatprep.subr.mxu0 0.0
    %1005 = vmatpush1.msra.mxu0 0.0
    %1006 = vmatprep.subr.mxu0 0.0
    %1007 = vmatpush1.msra.mxu0 0.0
    %1008 = vmatprep.subr.mxu0 0.0
    %1009 = vmatpush1.msra.mxu0 0.0
    %1010 = vmatprep.subr.mxu0 0.0
    %1011 = vmatpush1.msra.mxu0 0.0
    %1012 = vmatprep.subr.mxu0 0.0
    %1013 = vmatpush1.msra.mxu0 0.0
    %1014 = vmatprep.mubr.f32.mxu0 0.0
    %1015 = vmatmul.mubr.f32.gmra.mrb[0].mxu0 %v945
    %v1016 = vpop.f32.mrb[0].mxu0
    %v1017 = vadd.f32 0.0, %v1016
    %v1018 = vpop.f32.mrb[0].mxu0
    %1019 = vmatprep.mubr.f32.mxu0 0.0
    %1020 = vmatmul.mubr.f32.gmra.mrb[0].mxu0 %v948
    %v1021 = vpop.f32.mrb[0].mxu0
    %v1022 = vadd.f32 0.0, %v1021
    %v1023 = vpop.f32.mrb[0].mxu0
    %1024 = vdwg.mxu0
    %1026 = vrot.lane.b32.xlu0 %v136, 32
    %v1027 = vpop.permute.xlu0 %1026
    %v1030 = vsel %vm245, %v1017, 0
    %v1033 = vsel %vm245, %v1022, 0
    %1035 = vmatprep.subr.mxu0 0.0
    %1036 = vmatpush1.msra.mxu0 %v1027
    %1037 = vmatprep.subr.mxu0 0.0
    %1038 = vmatpush1.msra.mxu0 0.0
    %1039 = vmatprep.subr.mxu0 0.0
    %1040 = vmatpush1.msra.mxu0 0.0
    %1041 = vmatprep.subr.mxu0 0.0
    %1042 = vmatpush1.msra.mxu0 0.0
    %1043 = vmatprep.subr.mxu0 0.0
    %1044 = vmatpush1.msra.mxu0 0.0
    %1045 = vmatprep.subr.mxu0 0.0
    %1046 = vmatpush1.msra.mxu0 0.0
    %1047 = vmatprep.subr.mxu0 0.0
    %1048 = vmatpush1.msra.mxu0 0.0
    %1049 = vmatprep.subr.mxu0 0.0
    %1050 = vmatpush1.msra.mxu0 0.0
    %1051 = vmatprep.subr.mxu0 0.0
    %1052 = vmatpush1.msra.mxu0 0.0
    %1053 = vmatprep.subr.mxu0 0.0
    %1054 = vmatpush1.msra.mxu0 0.0
    %1055 = vmatprep.subr.mxu0 0.0
    %1056 = vmatpush1.msra.mxu0 0.0
    %1057 = vmatprep.subr.mxu0 0.0
    %1058 = vmatpush1.msra.mxu0 0.0
    %1059 = vmatprep.subr.mxu0 0.0
    %1060 = vmatpush1.msra.mxu0 0.0
    %1061 = vmatprep.subr.mxu0 0.0
    %1062 = vmatpush1.msra.mxu0 0.0
    %1063 = vmatprep.subr.mxu0 0.0
    %1064 = vmatpush1.msra.mxu0 0.0
    %1065 = vmatprep.subr.mxu0 0.0
    %1066 = vmatpush1.msra.mxu0 0.0
    %1067 = vmatprep.subr.mxu0 0.0
    %1068 = vmatpush1.msra.mxu0 0.0
    %1069 = vmatprep.subr.mxu0 0.0
    %1070 = vmatpush1.msra.mxu0 0.0
    %1071 = vmatprep.subr.mxu0 0.0
    %1072 = vmatpush1.msra.mxu0 0.0
    %1073 = vmatprep.subr.mxu0 0.0
    %1074 = vmatpush1.msra.mxu0 0.0
    %1075 = vmatprep.subr.mxu0 0.0
    %1076 = vmatpush1.msra.mxu0 0.0
    %1077 = vmatprep.subr.mxu0 0.0
    %1078 = vmatpush1.msra.mxu0 0.0
    %1079 = vmatprep.subr.mxu0 0.0
    %1080 = vmatpush1.msra.mxu0 0.0
    %1081 = vmatprep.subr.mxu0 0.0
    %1082 = vmatpush1.msra.mxu0 0.0
    %1083 = vmatprep.subr.mxu0 0.0
    %1084 = vmatpush1.msra.mxu0 0.0
    %1085 = vmatprep.subr.mxu0 0.0
    %1086 = vmatpush1.msra.mxu0 0.0
    %1087 = vmatprep.subr.mxu0 0.0
    %1088 = vmatpush1.msra.mxu0 0.0
    %1089 = vmatprep.subr.mxu0 0.0
    %1090 = vmatpush1.msra.mxu0 0.0
    %1091 = vmatprep.subr.mxu0 0.0
    %1092 = vmatpush1.msra.mxu0 0.0
    %1093 = vmatprep.subr.mxu0 0.0
    %1094 = vmatpush1.msra.mxu0 0.0
    %1095 = vmatprep.subr.mxu0 0.0
    %1096 = vmatpush1.msra.mxu0 0.0
    %1097 = vmatprep.subr.mxu0 0.0
    %1098 = vmatpush1.msra.mxu0 0.0
    %1099 = vmatprep.mubr.f32.mxu0 0.0
    %1100 = vmatmul.mubr.f32.gmra.mrb[0].mxu0 %v1030
    %v1101 = vpop.f32.mrb[0].mxu0
    %v1102 = vadd.f32 0.0, %v1101
    %v1103 = vpop.f32.mrb[0].mxu0
    %1104 = vmatprep.mubr.f32.mxu0 0.0
    %1105 = vmatmul.mubr.f32.gmra.mrb[0].mxu0 %v1033
    %v1106 = vpop.f32.mrb[0].mxu0
    %v1107 = vadd.f32 0.0, %v1106
    %v1108 = vpop.f32.mrb[0].mxu0
    %1109 = vdwg.mxu0
    %v1110 = vadd.f32 %v819, %v1102
    %v1111 = vadd.f32 %v820, %v1107
    %1112 = vrot.lane.b32.xlu0 %v226, 104
    %v1113 = vpop.permute.xlu0 %1112
    %1114 = vrot.lane.b32.xlu0 %v231, 104
    %v1115 = vpop.permute.xlu0 %1114
    %1116 = vrot.lane.b32.xlu0 %v226, 72
    %v1117 = vpop.permute.xlu0 %1116
    %1118 = vrot.lane.b32.xlu0 %v231, 72
    %v1119 = vpop.permute.xlu0 %1118
    %v1120 = vsel %vm245, %v1113, 0
    %v1122 = vsel %vm245, %v1115, 0
    %v1124 = vsel %vm245, %v1117, 0
    %v1126 = vsel %vm245, %v1119, 0
    %1128 = vmatprep.subr.mxu0 0.0
    %1129 = vmatpush1.xpose.msra.mxu0 %v1124
    %1130 = vmatprep.subr.mxu0 0.0
    %1131 = vmatpush1.xpose.msra.mxu0 %v1126
    %1132 = vmatprep.subr.mxu0 0.0
    %1133 = vmatpush1.xpose.msra.mxu0 0.0
    %1134 = vmatprep.subr.mxu0 0.0
    %1135 = vmatpush1.xpose.msra.mxu0 0.0
    %1136 = vmatprep.subr.mxu0 0.0
    %1137 = vmatpush1.xpose.msra.mxu0 0.0
    %1138 = vmatprep.subr.mxu0 0.0
    %1139 = vmatpush1.xpose.msra.mxu0 0.0
    %1140 = vmatprep.subr.mxu0 0.0
    %1141 = vmatpush1.xpose.msra.mxu0 0.0
    %1142 = vmatprep.subr.mxu0 0.0
    %1143 = vmatpush1.xpose.msra.mxu0 0.0
    %1144 = vmatprep.subr.mxu0 0.0
    %1145 = vmatpush1.xpose.msra.mxu0 0.0
    %1146 = vmatprep.subr.mxu0 0.0
    %1147 = vmatpush1.xpose.msra.mxu0 0.0
    %1148 = vmatprep.subr.mxu0 0.0
    %1149 = vmatpush1.xpose.msra.mxu0 0.0
    %1150 = vmatprep.subr.mxu0 0.0
    %1151 = vmatpush1.xpose.msra.mxu0 0.0
    %1152 = vmatprep.subr.mxu0 0.0
    %1153 = vmatpush1.xpose.msra.mxu0 0.0
    %1154 = vmatprep.subr.mxu0 0.0
    %1155 = vmatpush1.xpose.msra.mxu0 0.0
    %1156 = vmatprep.subr.mxu0 0.0
    %1157 = vmatpush1.xpose.msra.mxu0 0.0
    %1158 = vmatprep.subr.mxu0 0.0
    %1159 = vmatpush1.xpose.msra.mxu0 0.0
    %1160 = vmatprep.subr.mxu0 0.0
    %1161 = vmatpush1.xpose.msra.mxu0 0.0
    %1162 = vmatprep.subr.mxu0 0.0
    %1163 = vmatpush1.xpose.msra.mxu0 0.0
    %1164 = vmatprep.subr.mxu0 0.0
    %1165 = vmatpush1.xpose.msra.mxu0 0.0
    %1166 = vmatprep.subr.mxu0 0.0
    %1167 = vmatpush1.xpose.msra.mxu0 0.0
    %1168 = vmatprep.subr.mxu0 0.0
    %1169 = vmatpush1.xpose.msra.mxu0 0.0
    %1170 = vmatprep.subr.mxu0 0.0
    %1171 = vmatpush1.xpose.msra.mxu0 0.0
    %1172 = vmatprep.subr.mxu0 0.0
    %1173 = vmatpush1.xpose.msra.mxu0 0.0
    %1174 = vmatprep.subr.mxu0 0.0
    %1175 = vmatpush1.xpose.msra.mxu0 0.0
    %1176 = vmatprep.subr.mxu0 0.0
    %1177 = vmatpush1.xpose.msra.mxu0 0.0
    %1178 = vmatprep.subr.mxu0 0.0
    %1179 = vmatpush1.xpose.msra.mxu0 0.0
    %1180 = vmatprep.subr.mxu0 0.0
    %1181 = vmatpush1.xpose.msra.mxu0 0.0
    %1182 = vmatprep.subr.mxu0 0.0
    %1183 = vmatpush1.xpose.msra.mxu0 0.0
    %1184 = vmatprep.subr.mxu0 0.0
    %1185 = vmatpush1.xpose.msra.mxu0 0.0
    %1186 = vmatprep.subr.mxu0 0.0
    %1187 = vmatpush1.xpose.msra.mxu0 0.0
    %1188 = vmatprep.subr.mxu0 0.0
    %1189 = vmatpush1.xpose.msra.mxu0 0.0
    %1190 = vmatprep.subr.mxu0 0.0
    %1191 = vmatpush1.xpose.msra.mxu0 0.0
    %1192 = vmatprep.mubr.f32.mxu0 0.0
    %1193 = vmatmul.mubr.f32.gmra.mrb[0].mxu0 %v1120
    %v1194 = vpop.f32.mrb[0].mxu0
    %v1195 = vadd.f32 0.0, %v1194
    %v1196 = vpop.f32.mrb[0].mxu0
    %1197 = vmatprep.mubr.f32.mxu0 0.0
    %1198 = vmatmul.mubr.f32.gmra.mrb[0].mxu0 %v1122
    %v1199 = vpop.f32.mrb[0].mxu0
    %v1200 = vadd.f32 0.0, %v1199
    %v1201 = vpop.f32.mrb[0].mxu0
    %1202 = vdwg.mxu0
    %v1203 = vmul.f32 %v1195, 0.35355338
    %v1204 = vmul.f32 %v1200, 0.35355338
    %v1205 = vadd.f32 %v1203, %v130
    %v1206 = vadd.f32 %v1204, %v131
    %v1207 = vsel %vm333, %v1205, -inf
    %1208 = vmax.xlane.f32.xlu0 %v1207
    %v1209 = vpop.xlane.xlu0 %1208
    %v1210 = vsel %vm333, %v1206, -inf
    %1211 = vmax.xlane.f32.xlu0 %v1210
    %v1212 = vpop.xlane.xlu0 %1211
    %v1213 = vsub.f32 %v1205, %v1209
    %v1214 = vsub.f32 %v1206, %v1212
    %v1215 = vmul.f32 %v1213, 1.442695
    %v1216 = vpow.pop %v1215
    %v1217 = vmul.f32 %v1214, 1.442695
    %v1218 = vpow.pop %v1217
    %v1219 = vsel %vm333, %v1216, 0.0
    %1220 = vadd.xlane.f32.xlu0 %v1219
    %v1221 = vpop.xlane.xlu0 %1220
    %v1222 = vsel %vm333, %v1218, 0.0
    %1223 = vadd.xlane.f32.xlu0 %v1222
    %v1224 = vpop.xlane.xlu0 %1223
    %v1225 = vrcp.pop %v1221
    %v1226 = vmul.f32 %v1216, %v1225
    %v1227 = vrcp.pop %v1224
    %v1228 = vmul.f32 %v1218, %v1227
    %1229 = vrot.lane.b32.xlu0 %v226, 40
    %v1230 = vpop.permute.xlu0 %1229
    %1231 = vrot.lane.b32.xlu0 %v231, 40
    %v1232 = vpop.permute.xlu0 %1231
    %v1236 = vsel %vm333, %v1226, 0
    %v1239 = vsel %vm333, %v1228, 0
    %1241 = vmatprep.subr.mxu0 0.0
    %1242 = vmatpush1.msra.mxu0 %v1230
    %1243 = vmatprep.subr.mxu0 0.0
    %1244 = vmatpush1.msra.mxu0 %v1232
    %1245 = vmatprep.subr.mxu0 0.0
    %1246 = vmatpush1.msra.mxu0 0.0
    %1247 = vmatprep.subr.mxu0 0.0
    %1248 = vmatpush1.msra.mxu0 0.0
    %1249 = vmatprep.subr.mxu0 0.0
    %1250 = vmatpush1.msra.mxu0 0.0
    %1251 = vmatprep.subr.mxu0 0.0
    %1252 = vmatpush1.msra.mxu0 0.0
    %1253 = vmatprep.subr.mxu0 0.0
    %1254 = vmatpush1.msra.mxu0 0.0
    %1255 = vmatprep.subr.mxu0 0.0
    %1256 = vmatpush1.msra.mxu0 0.0
    %1257 = vmatprep.subr.mxu0 0.0
    %1258 = vmatpush1.msra.mxu0 0.0
    %1259 = vmatprep.subr.mxu0 0.0
    %1260 = vmatpush1.msra.mxu0 0.0
    %1261 = vmatprep.subr.mxu0 0.0
    %1262 = vmatpush1.msra.mxu0 0.0
    %1263 = vmatprep.subr.mxu0 0.0
    %1264 = vmatpush1.msra.mxu0 0.0
    %1265 = vmatprep.subr.mxu0 0.0
    %1266 = vmatpush1.msra.mxu0 0.0
    %1267 = vmatprep.subr.mxu0 0.0
    %1268 = vmatpush1.msra.mxu0 0.0
    %1269 = vmatprep.subr.mxu0 0.0
    %1270 = vmatpush1.msra.mxu0 0.0
    %1271 = vmatprep.subr.mxu0 0.0
    %1272 = vmatpush1.msra.mxu0 0.0
    %1273 = vmatprep.subr.mxu0 0.0
    %1274 = vmatpush1.msra.mxu0 0.0
    %1275 = vmatprep.subr.mxu0 0.0
    %1276 = vmatpush1.msra.mxu0 0.0
    %1277 = vmatprep.subr.mxu0 0.0
    %1278 = vmatpush1.msra.mxu0 0.0
    %1279 = vmatprep.subr.mxu0 0.0
    %1280 = vmatpush1.msra.mxu0 0.0
    %1281 = vmatprep.subr.mxu0 0.0
    %1282 = vmatpush1.msra.mxu0 0.0
    %1283 = vmatprep.subr.mxu0 0.0
    %1284 = vmatpush1.msra.mxu0 0.0
    %1285 = vmatprep.subr.mxu0 0.0
    %1286 = vmatpush1.msra.mxu0 0.0
    %1287 = vmatprep.subr.mxu0 0.0
    %1288 = vmatpush1.msra.mxu0 0.0
    %1289 = vmatprep.subr.mxu0 0.0
    %1290 = vmatpush1.msra.mxu0 0.0
    %1291 = vmatprep.subr.mxu0 0.0
    %1292 = vmatpush1.msra.mxu0 0.0
    %1293 = vmatprep.subr.mxu0 0.0
    %1294 = vmatpush1.msra.mxu0 0.0
    %1295 = vmatprep.subr.mxu0 0.0
    %1296 = vmatpush1.msra.mxu0 0.0
    %1297 = vmatprep.subr.mxu0 0.0
    %1298 = vmatpush1.msra.mxu0 0.0
    %1299 = vmatprep.subr.mxu0 0.0
    %1300 = vmatpush1.msra.mxu0 0.0
    %1301 = vmatprep.subr.mxu0 0.0
    %1302 = vmatpush1.msra.mxu0 0.0
    %1303 = vmatprep.subr.mxu0 0.0
    %1304 = vmatpush1.msra.mxu0 0.0
    %1305 = vmatprep.mubr.f32.mxu0 0.0
    %1306 = vmatmul.mubr.f32.gmra.mrb[0].mxu0 %v1236
    %v1307 = vpop.f32.mrb[0].mxu0
    %v1308 = vadd.f32 0.0, %v1307
    %v1309 = vpop.f32.mrb[0].mxu0
    %1310 = vmatprep.mubr.f32.mxu0 0.0
    %1311 = vmatmul.mubr.f32.gmra.mrb[0].mxu0 %v1239
    %v1312 = vpop.f32.mrb[0].mxu0
    %v1313 = vadd.f32 0.0, %v1312
    %v1314 = vpop.f32.mrb[0].mxu0
    %1315 = vdwg.mxu0
    %1317 = vrot.lane.b32.xlu0 %v138, 32
    %v1318 = vpop.permute.xlu0 %1317
    %v1321 = vsel %vm245, %v1308, 0
    %v1324 = vsel %vm245, %v1313, 0
    %1326 = vmatprep.subr.mxu0 0.0
    %1327 = vmatpush1.msra.mxu0 %v1318
    %1328 = vmatprep.subr.mxu0 0.0
    %1329 = vmatpush1.msra.mxu0 0.0
    %1330 = vmatprep.subr.mxu0 0.0
    %1331 = vmatpush1.msra.mxu0 0.0
    %1332 = vmatprep.subr.mxu0 0.0
    %1333 = vmatpush1.msra.mxu0 0.0
    %1334 = vmatprep.subr.mxu0 0.0
    %1335 = vmatpush1.msra.mxu0 0.0
    %1336 = vmatprep.subr.mxu0 0.0
    %1337 = vmatpush1.msra.mxu0 0.0
    %1338 = vmatprep.subr.mxu0 0.0
    %1339 = vmatpush1.msra.mxu0 0.0
    %1340 = vmatprep.subr.mxu0 0.0
    %1341 = vmatpush1.msra.mxu0 0.0
    %1342 = vmatprep.subr.mxu0 0.0
    %1343 = vmatpush1.msra.mxu0 0.0
    %1344 = vmatprep.subr.mxu0 0.0
    %1345 = vmatpush1.msra.mxu0 0.0
    %1346 = vmatprep.subr.mxu0 0.0
    %1347 = vmatpush1.msra.mxu0 0.0
    %1348 = vmatprep.subr.mxu0 0.0
    %1349 = vmatpush1.msra.mxu0 0.0
    %1350 = vmatprep.subr.mxu0 0.0
    %1351 = vmatpush1.msra.mxu0 0.0
    %1352 = vmatprep.subr.mxu0 0.0
    %1353 = vmatpush1.msra.mxu0 0.0
    %1354 = vmatprep.subr.mxu0 0.0
    %1355 = vmatpush1.msra.mxu0 0.0
    %1356 = vmatprep.subr.mxu0 0.0
    %1357 = vmatpush1.msra.mxu0 0.0
    %1358 = vmatprep.subr.mxu0 0.0
    %1359 = vmatpush1.msra.mxu0 0.0
    %1360 = vmatprep.subr.mxu0 0.0
    %1361 = vmatpush1.msra.mxu0 0.0
    %1362 = vmatprep.subr.mxu0 0.0
    %1363 = vmatpush1.msra.mxu0 0.0
    %1364 = vmatprep.subr.mxu0 0.0
    %1365 = vmatpush1.msra.mxu0 0.0
    %1366 = vmatprep.subr.mxu0 0.0
    %1367 = vmatpush1.msra.mxu0 0.0
    %1368 = vmatprep.subr.mxu0 0.0
    %1369 = vmatpush1.msra.mxu0 0.0
    %1370 = vmatprep.subr.mxu0 0.0
    %1371 = vmatpush1.msra.mxu0 0.0
    %1372 = vmatprep.subr.mxu0 0.0
    %1373 = vmatpush1.msra.mxu0 0.0
    %1374 = vmatprep.subr.mxu0 0.0
    %1375 = vmatpush1.msra.mxu0 0.0
    %1376 = vmatprep.subr.mxu0 0.0
    %1377 = vmatpush1.msra.mxu0 0.0
    %1378 = vmatprep.subr.mxu0 0.0
    %1379 = vmatpush1.msra.mxu0 0.0
    %1380 = vmatprep.subr.mxu0 0.0
    %1381 = vmatpush1.msra.mxu0 0.0
    %1382 = vmatprep.subr.mxu0 0.0
    %1383 = vmatpush1.msra.mxu0 0.0
    %1384 = vmatprep.subr.mxu0 0.0
    %1385 = vmatpush1.msra.mxu0 0.0
    %1386 = vmatprep.subr.mxu0 0.0
    %1387 = vmatpush1.msra.mxu0 0.0
    %1388 = vmatprep.subr.mxu0 0.0
    %1389 = vmatpush1.msra.mxu0 0.0
    %1390 = vmatprep.mubr.f32.mxu0 0.0
    %1391 = vmatmul.mubr.f32.gmra.mrb[0].mxu0 %v1321
    %v1392 = vpop.f32.mrb[0].mxu0
    %v1393 = vadd.f32 0.0, %v1392
    %v1394 = vpop.f32.mrb[0].mxu0
    %1395 = vmatprep.mubr.f32.mxu0 0.0
    %1396 = vmatmul.mubr.f32.gmra.mrb[0].mxu0 %v1324
    %v1397 = vpop.f32.mrb[0].mxu0
    %v1398 = vadd.f32 0.0, %v1397
    %v1399 = vpop.f32.mrb[0].mxu0
    %1400 = vdwg.mxu0
    %v1401 = vadd.f32 %v1110, %v1393
    %v1402 = vadd.f32 %v1111, %v1398
    %v1403 = vadd.f32 %v128, %v1401
    %v1404 = vadd.f32 %v129, %v1402
    %v1405 = vsel %vm99, %v1403, 0.0
    %1406 = vadd.xlane.f32.xlu0 %v1405
    %v1407 = vpop.xlane.xlu0 %1406
    %v1408 = vsel %vm99, %v1404, 0.0
    %1409 = vadd.xlane.f32.xlu0 %v1408
    %v1410 = vpop.xlane.xlu0 %1409
    %v1411 = vmul.f32 %v1407, %v53
    %v1412 = vmul.f32 %v1410, %v53
    %v1413 = vsub.f32 %v1403, %v1411
    %v1414 = vsub.f32 %v1404, %v1412
    %v1415 = vmul.f32 %v1413, %v1413
    %v1416 = vmul.f32 %v1414, %v1414
    %v1417 = vsel %vm99, %v1415, 0.0
    %1418 = vadd.xlane.f32.xlu0 %v1417
    %v1419 = vpop.xlane.xlu0 %1418
    %v1420 = vsel %vm99, %v1416, 0.0
    %1421 = vadd.xlane.f32.xlu0 %v1420
    %v1422 = vpop.xlane.xlu0 %1421
    %v1423 = vmul.f32 %v1419, %v53
    %v1424 = vmul.f32 %v1422, %v53
    %v1425 = vadd.f32 %v1423, 1e-12
    %v1426 = vadd.f32 %v1424, 1e-12
    %v1427 = vrsqrt.pop %v1425
    %v1428 = vrsqrt.pop %v1426
    %v1429 = vmul.f32 %v1413, %v1427
    %v1430 = vmul.f32 %v1414, %v1428
    %v1431 = vlaneseq
    %v1432 = vshrl.u32 %v1431, 7
    %v1433 = vsub.s32 2, %v1432
    %v1434 = vrot.slane %v140, %v1433
    %v1435 = vmul.f32 %v1429, %v1434
    %v1436 = vmul.f32 %v1430, %v1434
    %v1437 = vlaneseq
    %v1438 = vshrl.u32 %v1437, 7
    %v1439 = vsub.s32 3, %v1438
    %v1440 = vrot.slane %v140, %v1439
    %v1441 = vadd.f32 %v1435, %v1440
    %v1442 = vadd.f32 %v1436, %v1440
    %v1443 = vlaneseq
    %v1444 = vshrl.u32 %v1443, 7
    %v1445 = vsub.s32 4, %v1444
    %v1446 = vrot.slane %v140, %v1445
    %v1448 = vsel %vm99, %v1441, 0
    %v1451 = vsel %vm99, %v1442, 0
    %1453 = vmatprep.subr.mxu0 0.0
    %1454 = vmatpush1.msra.mxu0 %v133
    %1455 = vmatprep.subr.mxu0 0.0
    %1456 = vmatpush1.msra.mxu0 %v135
    %1457 = vmatprep.subr.mxu0 0.0
    %1458 = vmatpush1.msra.mxu0 %v137
    %1459 = vmatprep.subr.mxu0 0.0
    %1460 = vmatpush1.msra.mxu0 %v139
    %1461 = vmatprep.subr.mxu0 0.0
    %1462 = vmatpush1.msra.mxu0 0.0
    %1463 = vmatprep.subr.mxu0 0.0
    %1464 = vmatpush1.msra.mxu0 0.0
    %1465 = vmatprep.subr.mxu0 0.0
    %1466 = vmatpush1.msra.mxu0 0.0
    %1467 = vmatprep.subr.mxu0 0.0
    %1468 = vmatpush1.msra.mxu0 0.0
    %1469 = vmatprep.subr.mxu0 0.0
    %1470 = vmatpush1.msra.mxu0 0.0
    %1471 = vmatprep.subr.mxu0 0.0
    %1472 = vmatpush1.msra.mxu0 0.0
    %1473 = vmatprep.subr.mxu0 0.0
    %1474 = vmatpush1.msra.mxu0 0.0
    %1475 = vmatprep.subr.mxu0 0.0
    %1476 = vmatpush1.msra.mxu0 0.0
    %1477 = vmatprep.subr.mxu0 0.0
    %1478 = vmatpush1.msra.mxu0 0.0
    %1479 = vmatprep.subr.mxu0 0.0
    %1480 = vmatpush1.msra.mxu0 0.0
    %1481 = vmatprep.subr.mxu0 0.0
    %1482 = vmatpush1.msra.mxu0 0.0
    %1483 = vmatprep.subr.mxu0 0.0
    %1484 = vmatpush1.msra.mxu0 0.0
    %1485 = vmatprep.subr.mxu0 0.0
    %1486 = vmatpush1.msra.mxu0 0.0
    %1487 = vmatprep.subr.mxu0 0.0
    %1488 = vmatpush1.msra.mxu0 0.0
    %1489 = vmatprep.subr.mxu0 0.0
    %1490 = vmatpush1.msra.mxu0 0.0
    %1491 = vmatprep.subr.mxu0 0.0
    %1492 = vmatpush1.msra.mxu0 0.0
    %1493 = vmatprep.subr.mxu0 0.0
    %1494 = vmatpush1.msra.mxu0 0.0
    %1495 = vmatprep.subr.mxu0 0.0
    %1496 = vmatpush1.msra.mxu0 0.0
    %1497 = vmatprep.subr.mxu0 0.0
    %1498 = vmatpush1.msra.mxu0 0.0
    %1499 = vmatprep.subr.mxu0 0.0
    %1500 = vmatpush1.msra.mxu0 0.0
    %1501 = vmatprep.subr.mxu0 0.0
    %1502 = vmatpush1.msra.mxu0 0.0
    %1503 = vmatprep.subr.mxu0 0.0
    %1504 = vmatpush1.msra.mxu0 0.0
    %1505 = vmatprep.subr.mxu0 0.0
    %1506 = vmatpush1.msra.mxu0 0.0
    %1507 = vmatprep.subr.mxu0 0.0
    %1508 = vmatpush1.msra.mxu0 0.0
    %1509 = vmatprep.subr.mxu0 0.0
    %1510 = vmatpush1.msra.mxu0 0.0
    %1511 = vmatprep.subr.mxu0 0.0
    %1512 = vmatpush1.msra.mxu0 0.0
    %1513 = vmatprep.subr.mxu0 0.0
    %1514 = vmatpush1.msra.mxu0 0.0
    %1515 = vmatprep.subr.mxu0 0.0
    %1516 = vmatpush1.msra.mxu0 0.0
    %1517 = vmatprep.mubr.f32.mxu0 0.0
    %1518 = vmatmul.mubr.f32.gmra.mrb[0].mxu0 %v1448
    %v1519 = vpop.f32.mrb[0].mxu0
    %v1520 = vadd.f32 %v1446, %v1519
    %v1521 = vpop.f32.mrb[0].mxu0
    %1522 = vmatprep.mubr.f32.mxu0 0.0
    %1523 = vmatmul.mubr.f32.gmra.mrb[0].mxu0 %v1451
    %v1524 = vpop.f32.mrb[0].mxu0
    %v1525 = vadd.f32 %v1446, %v1524
    %v1526 = vpop.f32.mrb[0].mxu0
    %1527 = vdwg.mxu0
    %v1528 = vmul.f32 %v1520, 0.5
    %v1529 = vmul.f32 %v1525, 0.5
    %v1530 = vmul.f32 %v1520, 0.044715
    %v1531 = vmul.f32 %v1525, 0.044715
    %v1532 = vmul.f32 %v1530, %v1520
    %v1533 = vmul.f32 %v1531, %v1525
    %v1534 = vmul.f32 %v1532, %v1520
    %v1535 = vmul.f32 %v1533, %v1525
    %v1536 = vadd.f32 %v1520, %v1534
    %v1537 = vadd.f32 %v1525, %v1535
    %v1538 = vmul.f32 %v1536, 0.7978846
    %v1539 = vmul.f32 %v1537, 0.7978846
    %v1540 = vtanh.pop %v1538
    %v1541 = vtanh.pop %v1539
    %v1542 = vadd.f32 %v1540, 1.0
    %v1543 = vadd.f32 %v1541, 1.0
    %v1544 = vmul.f32 %v1528, %v1542
    %v1545 = vmul.f32 %v1529, %v1543
    %v1546 = vlaneseq
    %v1547 = vshrl.u32 %v1546, 7
    %v1548 = vsub.s32 5, %v1547
    %v1549 = vrot.slane %v140, %v1548
    %vm1550 = vcmask 523264
    %v1552 = vsel %vm1550, %v1544, 0
    %v1555 = vsel %vm1550, %v1545, 0
    %1557 = vmatprep.subr.mxu0 0.0
    %1558 = vmatpush1.msra.mxu0 %v141
    %1559 = vmatprep.subr.mxu0 0.0
    %1560 = vmatpush1.msra.mxu0 %v142
    %1561 = vmatprep.subr.mxu0 0.0
    %1562 = vmatpush1.msra.mxu0 %v143
    %1563 = vmatprep.subr.mxu0 0.0
    %1564 = vmatpush1.msra.mxu0 %v144
    %1565 = vmatprep.subr.mxu0 0.0
    %1566 = vmatpush1.msra.mxu0 %v145
    %1567 = vmatprep.subr.mxu0 0.0
    %1568 = vmatpush1.msra.mxu0 %v146
    %1569 = vmatprep.subr.mxu0 0.0
    %1570 = vmatpush1.msra.mxu0 %v147
    %1571 = vmatprep.subr.mxu0 0.0
    %1572 = vmatpush1.msra.mxu0 %v148
    %1573 = vmatprep.subr.mxu0 0.0
    %1574 = vmatpush1.msra.mxu0 0.0
    %1575 = vmatprep.subr.mxu0 0.0
    %1576 = vmatpush1.msra.mxu0 0.0
    %1577 = vmatprep.subr.mxu0 0.0
    %1578 = vmatpush1.msra.mxu0 0.0
    %1579 = vmatprep.subr.mxu0 0.0
    %1580 = vmatpush1.msra.mxu0 0.0
    %1581 = vmatprep.subr.mxu0 0.0
    %1582 = vmatpush1.msra.mxu0 0.0
    %1583 = vmatprep.subr.mxu0 0.0
    %1584 = vmatpush1.msra.mxu0 0.0
    %1585 = vmatprep.subr.mxu0 0.0
    %1586 = vmatpush1.msra.mxu0 0.0
    %1587 = vmatprep.subr.mxu0 0.0
    %1588 = vmatpush1.msra.mxu0 0.0
    %1589 = vmatprep.subr.mxu0 0.0
    %1590 = vmatpush1.msra.mxu0 0.0
    %1591 = vmatprep.subr.mxu0 0.0
    %1592 = vmatpush1.msra.mxu0 0.0
    %1593 = vmatprep.subr.mxu0 0.0
    %1594 = vmatpush1.msra.mxu0 0.0
    %1595 = vmatprep.subr.mxu0 0.0
    %1596 = vmatpush1.msra.mxu0 0.0
    %1597 = vmatprep.subr.mxu0 0.0
    %1598 = vmatpush1.msra.mxu0 0.0
    %1599 = vmatprep.subr.mxu0 0.0
    %1600 = vmatpush1.msra.mxu0 0.0
    %1601 = vmatprep.subr.mxu0 0.0
    %1602 = vmatpush1.msra.mxu0 0.0
    %1603 = vmatprep.subr.mxu0 0.0
    %1604 = vmatpush1.msra.mxu0 0.0
    %1605 = vmatprep.subr.mxu0 0.0
    %1606 = vmatpush1.msra.mxu0 0.0
    %1607 = vmatprep.subr.mxu0 0.0
    %1608 = vmatpush1.msra.mxu0 0.0
    %1609 = vmatprep.subr.mxu0 0.0
    %1610 = vmatpush1.msra.mxu0 0.0
    %1611 = vmatprep.subr.mxu0 0.0
    %1612 = vmatpush1.msra.mxu0 0.0
    %1613 = vmatprep.subr.mxu0 0.0
    %1614 = vmatpush1.msra.mxu0 0.0
    %1615 = vmatprep.subr.mxu0 0.0
    %1616 = vmatpush1.msra.mxu0 0.0
    %1617 = vmatprep.subr.mxu0 0.0
    %1618 = vmatpush1.msra.mxu0 0.0
    %1619 = vmatprep.subr.mxu0 0.0
    %1620 = vmatpush1.msra.mxu0 0.0
    %1621 = vmatprep.mubr.f32.mxu0 0.0
    %1622 = vmatmul.mubr.f32.gmra.mrb[0].mxu0 %v1552
    %v1623 = vpop.f32.mrb[0].mxu0
    %v1624 = vadd.f32 %v1549, %v1623
    %v1625 = vpop.f32.mrb[0].mxu0
    %1626 = vmatprep.mubr.f32.mxu0 0.0
    %1627 = vmatmul.mubr.f32.gmra.mrb[0].mxu0 %v1555
    %v1628 = vpop.f32.mrb[0].mxu0
    %v1629 = vadd.f32 %v1549, %v1628
    %v1630 = vpop.f32.mrb[0].mxu0
    %1631 = vdwg.mxu0
    %v1632 = vadd.f32 %v1441, %v1624
    %v1633 = vadd.f32 %v1442, %v1629
    %v1634 = vsel %vm99, %v1632, 0.0
    %1635 = vadd.xlane.f32.xlu0 %v1634
    %v1636 = vpop.xlane.xlu0 %1635
    %v1637 = vsel %vm99, %v1633, 0.0
    %1638 = vadd.xlane.f32.xlu0 %v1637
    %v1639 = vpop.xlane.xlu0 %1638
    %v1640 = vmul.f32 %v1636, %v53
    %v1641 = vmul.f32 %v1639, %v53
    %v1642 = vsub.f32 %v1632, %v1640
    %v1643 = vsub.f32 %v1633, %v1641
    %v1644 = vmul.f32 %v1642, %v1642
    %v1645 = vmul.f32 %v1643, %v1643
    %v1646 = vsel %vm99, %v1644, 0.0
    %1647 = vadd.xlane.f32.xlu0 %v1646
    %v1648 = vpop.xlane.xlu0 %1647
    %v1649 = vsel %vm99, %v1645, 0.0
    %1650 = vadd.xlane.f32.xlu0 %v1649
    %v1651 = vpop.xlane.xlu0 %1650
    %v1652 = vmul.f32 %v1648, %v53
    %v1653 = vmul.f32 %v1651, %v53
    %v1654 = vadd.f32 %v1652, 1e-12
    %v1655 = vadd.f32 %v1653, 1e-12
    %v1656 = vrsqrt.pop %v1654
    %v1657 = vrsqrt.pop %v1655
    %v1658 = vmul.f32 %v1642, %v1656
    %v1659 = vmul.f32 %v1643, %v1657
    %v1660 = vlaneseq
    %v1661 = vshrl.u32 %v1660, 7
    %v1662 = vsub.s32 6, %v1661
    %v1663 = vrot.slane %v140, %v1662
    %v1664 = vmul.f32 %v1658, %v1663
    %v1665 = vmul.f32 %v1659, %v1663
    %v1666 = vlaneseq
    %v1667 = vshrl.u32 %v1666, 7
    %v1668 = vsub.s32 7, %v1667
    %v1669 = vrot.slane %v140, %v1668
    %v1670 = vadd.f32 %v1664, %v1669
    %v1671 = vadd.f32 %v1665, %v1669
    %s1672 = scalar_lea.vmem %s6, 64
    %v1673 = vld [vmem:[%s1672] sm:$0xff]
    %v1674 = vld [vmem:[%s1672 + $0x8] sm:$0xff]
    %v1675 = vld [vmem:[%s1672 + $0x10] sm:$0xff]
    %v1676 = vld [vmem:[%s1672 + $0x18] sm:$0xff]
    %v1677 = vld [vmem:[%s1672 + $0x20] sm:$0xff]
    %v1678 = vld [vmem:[%s1672 + $0x28] sm:$0xff]
    %v1679 = vld [vmem:[%s1672 + $0x30] sm:$0xff]
    %v1680 = vld [vmem:[%s1672 + $0x38] sm:$0xff]
    %s1681 = scalar_lea.vmem %s8, 8
    %v1682 = vld [vmem:[%s1681] sm:$0xff]
    %s1683 = scalar_lea.vmem %s7, 64
    %v1684 = vld [vmem:[%s1683] sm:$0xff]
    %v1685 = vld [vmem:[%s1683 + $0x8] sm:$0xff]
    %v1686 = vld [vmem:[%s1683 + $0x10] sm:$0xff]
    %v1687 = vld [vmem:[%s1683 + $0x18] sm:$0xff]
    %v1688 = vld [vmem:[%s1683 + $0x20] sm:$0xff]
    %v1689 = vld [vmem:[%s1683 + $0x28] sm:$0xff]
    %v1690 = vld [vmem:[%s1683 + $0x30] sm:$0xff]
    %v1691 = vld [vmem:[%s1683 + $0x38] sm:$0xff]
    %v1692 = vlaneseq
    %v1693 = vshrl.u32 %v1692, 7
    %v1694 = vsub.s32 0, %v1693
    %v1695 = vrot.slane %v1682, %v1694
    %v1697 = vsel %vm99, %v1670, 0
    %v1700 = vsel %vm99, %v1671, 0
    %1702 = vmatprep.subr.mxu0 0.0
    %1703 = vmatpush1.msra.mxu0 %v1673
    %1704 = vmatprep.subr.mxu0 0.0
    %1705 = vmatpush1.msra.mxu0 %v1675
    %1706 = vmatprep.subr.mxu0 0.0
    %1707 = vmatpush1.msra.mxu0 %v1677
    %1708 = vmatprep.subr.mxu0 0.0
    %1709 = vmatpush1.msra.mxu0 %v1679
    %1710 = vmatprep.subr.mxu0 0.0
    %1711 = vmatpush1.msra.mxu0 0.0
    %1712 = vmatprep.subr.mxu0 0.0
    %1713 = vmatpush1.msra.mxu0 0.0
    %1714 = vmatprep.subr.mxu0 0.0
    %1715 = vmatpush1.msra.mxu0 0.0
    %1716 = vmatprep.subr.mxu0 0.0
    %1717 = vmatpush1.msra.mxu0 0.0
    %1718 = vmatprep.subr.mxu0 0.0
    %1719 = vmatpush1.msra.mxu0 0.0
    %1720 = vmatprep.subr.mxu0 0.0
    %1721 = vmatpush1.msra.mxu0 0.0
    %1722 = vmatprep.subr.mxu0 0.0
    %1723 = vmatpush1.msra.mxu0 0.0
    %1724 = vmatprep.subr.mxu0 0.0
    %1725 = vmatpush1.msra.mxu0 0.0
    %1726 = vmatprep.subr.mxu0 0.0
    %1727 = vmatpush1.msra.mxu0 0.0
    %1728 = vmatprep.subr.mxu0 0.0
    %1729 = vmatpush1.msra.mxu0 0.0
    %1730 = vmatprep.subr.mxu0 0.0
    %1731 = vmatpush1.msra.mxu0 0.0
    %1732 = vmatprep.subr.mxu0 0.0
    %1733 = vmatpush1.msra.mxu0 0.0
    %1734 = vmatprep.subr.mxu0 0.0
    %1735 = vmatpush1.msra.mxu0 0.0
    %1736 = vmatprep.subr.mxu0 0.0
    %1737 = vmatpush1.msra.mxu0 0.0
    %1738 = vmatprep.subr.mxu0 0.0
    %1739 = vmatpush1.msra.mxu0 0.0
    %1740 = vmatprep.subr.mxu0 0.0
    %1741 = vmatpush1.msra.mxu0 0.0
    %1742 = vmatprep.subr.mxu0 0.0
    %1743 = vmatpush1.msra.mxu0 0.0
    %1744 = vmatprep.subr.mxu0 0.0
    %1745 = vmatpush1.msra.mxu0 0.0
    %1746 = vmatprep.subr.mxu0 0.0
    %1747 = vmatpush1.msra.mxu0 0.0
    %1748 = vmatprep.subr.mxu0 0.0
    %1749 = vmatpush1.msra.mxu0 0.0
    %1750 = vmatprep.subr.mxu0 0.0
    %1751 = vmatpush1.msra.mxu0 0.0
    %1752 = vmatprep.subr.mxu0 0.0
    %1753 = vmatpush1.msra.mxu0 0.0
    %1754 = vmatprep.subr.mxu0 0.0
    %1755 = vmatpush1.msra.mxu0 0.0
    %1756 = vmatprep.subr.mxu0 0.0
    %1757 = vmatpush1.msra.mxu0 0.0
    %1758 = vmatprep.subr.mxu0 0.0
    %1759 = vmatpush1.msra.mxu0 0.0
    %1760 = vmatprep.subr.mxu0 0.0
    %1761 = vmatpush1.msra.mxu0 0.0
    %1762 = vmatprep.subr.mxu0 0.0
    %1763 = vmatpush1.msra.mxu0 0.0
    %1764 = vmatprep.subr.mxu0 0.0
    %1765 = vmatpush1.msra.mxu0 0.0
    %1766 = vmatprep.mubr.f32.mxu0 0.0
    %1767 = vmatmul.mubr.f32.gmra.mrb[0].mxu0 %v1697
    %v1768 = vpop.f32.mrb[0].mxu0
    %v1769 = vadd.f32 %v1695, %v1768
    %v1770 = vpop.f32.mrb[0].mxu0
    %1771 = vmatprep.mubr.f32.mxu0 0.0
    %1772 = vmatmul.mubr.f32.gmra.mrb[0].mxu0 %v1700
    %v1773 = vpop.f32.mrb[0].mxu0
    %v1774 = vadd.f32 %v1695, %v1773
    %v1775 = vpop.f32.mrb[0].mxu0
    %1776 = vdwg.mxu0
    %v1777 = vlaneseq
    %v1778 = vshrl.u32 %v1777, 7
    %v1779 = vsub.s32 1, %v1778
    %v1780 = vrot.slane %v1682, %v1779
    %v1781 = vadd.f32 %v1780, 0.0
    %1784 = vrot.lane.b32.xlu0 %v1769, 96
    %v1785 = vpop.permute.xlu0 %1784
    %1786 = vrot.lane.b32.xlu0 %v1774, 96
    %v1787 = vpop.permute.xlu0 %1786
    %v1788 = vsel %vm245, %v1769, 0
    %v1790 = vsel %vm245, %v1774, 0
    %v1792 = vsel %vm245, %v1785, 0
    %v1794 = vsel %vm245, %v1787, 0
    %1796 = vmatprep.subr.mxu0 0.0
    %1797 = vmatpush1.xpose.msra.mxu0 %v1792
    %1798 = vmatprep.subr.mxu0 0.0
    %1799 = vmatpush1.xpose.msra.mxu0 %v1794
    %1800 = vmatprep.subr.mxu0 0.0
    %1801 = vmatpush1.xpose.msra.mxu0 0.0
    %1802 = vmatprep.subr.mxu0 0.0
    %1803 = vmatpush1.xpose.msra.mxu0 0.0
    %1804 = vmatprep.subr.mxu0 0.0
    %1805 = vmatpush1.xpose.msra.mxu0 0.0
    %1806 = vmatprep.subr.mxu0 0.0
    %1807 = vmatpush1.xpose.msra.mxu0 0.0
    %1808 = vmatprep.subr.mxu0 0.0
    %1809 = vmatpush1.xpose.msra.mxu0 0.0
    %1810 = vmatprep.subr.mxu0 0.0
    %1811 = vmatpush1.xpose.msra.mxu0 0.0
    %1812 = vmatprep.subr.mxu0 0.0
    %1813 = vmatpush1.xpose.msra.mxu0 0.0
    %1814 = vmatprep.subr.mxu0 0.0
    %1815 = vmatpush1.xpose.msra.mxu0 0.0
    %1816 = vmatprep.subr.mxu0 0.0
    %1817 = vmatpush1.xpose.msra.mxu0 0.0
    %1818 = vmatprep.subr.mxu0 0.0
    %1819 = vmatpush1.xpose.msra.mxu0 0.0
    %1820 = vmatprep.subr.mxu0 0.0
    %1821 = vmatpush1.xpose.msra.mxu0 0.0
    %1822 = vmatprep.subr.mxu0 0.0
    %1823 = vmatpush1.xpose.msra.mxu0 0.0
    %1824 = vmatprep.subr.mxu0 0.0
    %1825 = vmatpush1.xpose.msra.mxu0 0.0
    %1826 = vmatprep.subr.mxu0 0.0
    %1827 = vmatpush1.xpose.msra.mxu0 0.0
    %1828 = vmatprep.subr.mxu0 0.0
    %1829 = vmatpush1.xpose.msra.mxu0 0.0
    %1830 = vmatprep.subr.mxu0 0.0
    %1831 = vmatpush1.xpose.msra.mxu0 0.0
    %1832 = vmatprep.subr.mxu0 0.0
    %1833 = vmatpush1.xpose.msra.mxu0 0.0
    %1834 = vmatprep.subr.mxu0 0.0
    %1835 = vmatpush1.xpose.msra.mxu0 0.0
    %1836 = vmatprep.subr.mxu0 0.0
    %1837 = vmatpush1.xpose.msra.mxu0 0.0
    %1838 = vmatprep.subr.mxu0 0.0
    %1839 = vmatpush1.xpose.msra.mxu0 0.0
    %1840 = vmatprep.subr.mxu0 0.0
    %1841 = vmatpush1.xpose.msra.mxu0 0.0
    %1842 = vmatprep.subr.mxu0 0.0
    %1843 = vmatpush1.xpose.msra.mxu0 0.0
    %1844 = vmatprep.subr.mxu0 0.0
    %1845 = vmatpush1.xpose.msra.mxu0 0.0
    %1846 = vmatprep.subr.mxu0 0.0
    %1847 = vmatpush1.xpose.msra.mxu0 0.0
    %1848 = vmatprep.subr.mxu0 0.0
    %1849 = vmatpush1.xpose.msra.mxu0 0.0
    %1850 = vmatprep.subr.mxu0 0.0
    %1851 = vmatpush1.xpose.msra.mxu0 0.0
    %1852 = vmatprep.subr.mxu0 0.0
    %1853 = vmatpush1.xpose.msra.mxu0 0.0
    %1854 = vmatprep.subr.mxu0 0.0
    %1855 = vmatpush1.xpose.msra.mxu0 0.0
    %1856 = vmatprep.subr.mxu0 0.0
    %1857 = vmatpush1.xpose.msra.mxu0 0.0
    %1858 = vmatprep.subr.mxu0 0.0
    %1859 = vmatpush1.xpose.msra.mxu0 0.0
    %1860 = vmatprep.mubr.f32.mxu0 0.0
    %1861 = vmatmul.mubr.f32.gmra.mrb[0].mxu0 %v1788
    %v1862 = vpop.f32.mrb[0].mxu0
    %v1863 = vadd.f32 0.0, %v1862
    %v1864 = vpop.f32.mrb[0].mxu0
    %1865 = vmatprep.mubr.f32.mxu0 0.0
    %1866 = vmatmul.mubr.f32.gmra.mrb[0].mxu0 %v1790
    %v1867 = vpop.f32.mrb[0].mxu0
    %v1868 = vadd.f32 0.0, %v1867
    %v1869 = vpop.f32.mrb[0].mxu0
    %1870 = vdwg.mxu0
    %v1871 = vmul.f32 %v1863, 0.35355338
    %v1872 = vmul.f32 %v1868, 0.35355338
    %v1873 = vadd.f32 %v1871, %v130
    %v1874 = vadd.f32 %v1872, %v131
    %v1875 = vsel %vm333, %v1873, -inf
    %1876 = vmax.xlane.f32.xlu0 %v1875
    %v1877 = vpop.xlane.xlu0 %1876
    %v1878 = vsel %vm333, %v1874, -inf
    %1879 = vmax.xlane.f32.xlu0 %v1878
    %v1880 = vpop.xlane.xlu0 %1879
    %v1881 = vsub.f32 %v1873, %v1877
    %v1882 = vsub.f32 %v1874, %v1880
    %v1883 = vmul.f32 %v1881, 1.442695
    %v1884 = vpow.pop %v1883
    %v1885 = vmul.f32 %v1882, 1.442695
    %v1886 = vpow.pop %v1885
    %v1887 = vsel %vm333, %v1884, 0.0
    %1888 = vadd.xlane.f32.xlu0 %v1887
    %v1889 = vpop.xlane.xlu0 %1888
    %v1890 = vsel %vm333, %v1886, 0.0
    %1891 = vadd.xlane.f32.xlu0 %v1890
    %v1892 = vpop.xlane.xlu0 %1891
    %v1893 = vrcp.pop %v1889
    %v1894 = vmul.f32 %v1884, %v1893
    %v1895 = vrcp.pop %v1892
    %v1896 = vmul.f32 %v1886, %v1895
    %1897 = vrot.lane.b32.xlu0 %v1769, 64
    %v1898 = vpop.permute.xlu0 %1897
    %1899 = vrot.lane.b32.xlu0 %v1774, 64
    %v1900 = vpop.permute.xlu0 %1899
    %v1904 = vsel %vm333, %v1894, 0
    %v1907 = vsel %vm333, %v1896, 0
    %1909 = vmatprep.subr.mxu0 0.0
    %1910 = vmatpush1.msra.mxu0 %v1898
    %1911 = vmatprep.subr.mxu0 0.0
    %1912 = vmatpush1.msra.mxu0 %v1900
    %1913 = vmatprep.subr.mxu0 0.0
    %1914 = vmatpush1.msra.mxu0 0.0
    %1915 = vmatprep.subr.mxu0 0.0
    %1916 = vmatpush1.msra.mxu0 0.0
    %1917 = vmatprep.subr.mxu0 0.0
    %1918 = vmatpush1.msra.mxu0 0.0
    %1919 = vmatprep.subr.mxu0 0.0
    %1920 = vmatpush1.msra.mxu0 0.0
    %1921 = vmatprep.subr.mxu0 0.0
    %1922 = vmatpush1.msra.mxu0 0.0
    %1923 = vmatprep.subr.mxu0 0.0
    %1924 = vmatpush1.msra.mxu0 0.0
    %1925 = vmatprep.subr.mxu0 0.0
    %1926 = vmatpush1.msra.mxu0 0.0
    %1927 = vmatprep.subr.mxu0 0.0
    %1928 = vmatpush1.msra.mxu0 0.0
    %1929 = vmatprep.subr.mxu0 0.0
    %1930 = vmatpush1.msra.mxu0 0.0
    %1931 = vmatprep.subr.mxu0 0.0
    %1932 = vmatpush1.msra.mxu0 0.0
    %1933 = vmatprep.subr.mxu0 0.0
    %1934 = vmatpush1.msra.mxu0 0.0
    %1935 = vmatprep.subr.mxu0 0.0
    %1936 = vmatpush1.msra.mxu0 0.0
    %1937 = vmatprep.subr.mxu0 0.0
    %1938 = vmatpush1.msra.mxu0 0.0
    %1939 = vmatprep.subr.mxu0 0.0
    %1940 = vmatpush1.msra.mxu0 0.0
    %1941 = vmatprep.subr.mxu0 0.0
    %1942 = vmatpush1.msra.mxu0 0.0
    %1943 = vmatprep.subr.mxu0 0.0
    %1944 = vmatpush1.msra.mxu0 0.0
    %1945 = vmatprep.subr.mxu0 0.0
    %1946 = vmatpush1.msra.mxu0 0.0
    %1947 = vmatprep.subr.mxu0 0.0
    %1948 = vmatpush1.msra.mxu0 0.0
    %1949 = vmatprep.subr.mxu0 0.0
    %1950 = vmatpush1.msra.mxu0 0.0
    %1951 = vmatprep.subr.mxu0 0.0
    %1952 = vmatpush1.msra.mxu0 0.0
    %1953 = vmatprep.subr.mxu0 0.0
    %1954 = vmatpush1.msra.mxu0 0.0
    %1955 = vmatprep.subr.mxu0 0.0
    %1956 = vmatpush1.msra.mxu0 0.0
    %1957 = vmatprep.subr.mxu0 0.0
    %1958 = vmatpush1.msra.mxu0 0.0
    %1959 = vmatprep.subr.mxu0 0.0
    %1960 = vmatpush1.msra.mxu0 0.0
    %1961 = vmatprep.subr.mxu0 0.0
    %1962 = vmatpush1.msra.mxu0 0.0
    %1963 = vmatprep.subr.mxu0 0.0
    %1964 = vmatpush1.msra.mxu0 0.0
    %1965 = vmatprep.subr.mxu0 0.0
    %1966 = vmatpush1.msra.mxu0 0.0
    %1967 = vmatprep.subr.mxu0 0.0
    %1968 = vmatpush1.msra.mxu0 0.0
    %1969 = vmatprep.subr.mxu0 0.0
    %1970 = vmatpush1.msra.mxu0 0.0
    %1971 = vmatprep.subr.mxu0 0.0
    %1972 = vmatpush1.msra.mxu0 0.0
    %1973 = vmatprep.mubr.f32.mxu0 0.0
    %1974 = vmatmul.mubr.f32.gmra.mrb[0].mxu0 %v1904
    %v1975 = vpop.f32.mrb[0].mxu0
    %v1976 = vadd.f32 0.0, %v1975
    %v1977 = vpop.f32.mrb[0].mxu0
    %1978 = vmatprep.mubr.f32.mxu0 0.0
    %1979 = vmatmul.mubr.f32.gmra.mrb[0].mxu0 %v1907
    %v1980 = vpop.f32.mrb[0].mxu0
    %v1981 = vadd.f32 0.0, %v1980
    %v1982 = vpop.f32.mrb[0].mxu0
    %1983 = vdwg.mxu0
    %1985 = vrot.lane.b32.xlu0 %v1673, 32
    %v1986 = vpop.permute.xlu0 %1985
    %v1989 = vsel %vm245, %v1976, 0
    %v1992 = vsel %vm245, %v1981, 0
    %1994 = vmatprep.subr.mxu0 0.0
    %1995 = vmatpush1.msra.mxu0 %v1986
    %1996 = vmatprep.subr.mxu0 0.0
    %1997 = vmatpush1.msra.mxu0 0.0
    %1998 = vmatprep.subr.mxu0 0.0
    %1999 = vmatpush1.msra.mxu0 0.0
    %2000 = vmatprep.subr.mxu0 0.0
    %2001 = vmatpush1.msra.mxu0 0.0
    %2002 = vmatprep.subr.mxu0 0.0
    %2003 = vmatpush1.msra.mxu0 0.0
    %2004 = vmatprep.subr.mxu0 0.0
    %2005 = vmatpush1.msra.mxu0 0.0
    %2006 = vmatprep.subr.mxu0 0.0
    %2007 = vmatpush1.msra.mxu0 0.0
    %2008 = vmatprep.subr.mxu0 0.0
    %2009 = vmatpush1.msra.mxu0 0.0
    %2010 = vmatprep.subr.mxu0 0.0
    %2011 = vmatpush1.msra.mxu0 0.0
    %2012 = vmatprep.subr.mxu0 0.0
    %2013 = vmatpush1.msra.mxu0 0.0
    %2014 = vmatprep.subr.mxu0 0.0
    %2015 = vmatpush1.msra.mxu0 0.0
    %2016 = vmatprep.subr.mxu0 0.0
    %2017 = vmatpush1.msra.mxu0 0.0
    %2018 = vmatprep.subr.mxu0 0.0
    %2019 = vmatpush1.msra.mxu0 0.0
    %2020 = vmatprep.subr.mxu0 0.0
    %2021 = vmatpush1.msra.mxu0 0.0
    %2022 = vmatprep.subr.mxu0 0.0
    %2023 = vmatpush1.msra.mxu0 0.0
    %2024 = vmatprep.subr.mxu0 0.0
    %2025 = vmatpush1.msra.mxu0 0.0
    %2026 = vmatprep.subr.mxu0 0.0
    %2027 = vmatpush1.msra.mxu0 0.0
    %2028 = vmatprep.subr.mxu0 0.0
    %2029 = vmatpush1.msra.mxu0 0.0
    %2030 = vmatprep.subr.mxu0 0.0
    %2031 = vmatpush1.msra.mxu0 0.0
    %2032 = vmatprep.subr.mxu0 0.0
    %2033 = vmatpush1.msra.mxu0 0.0
    %2034 = vmatprep.subr.mxu0 0.0
    %2035 = vmatpush1.msra.mxu0 0.0
    %2036 = vmatprep.subr.mxu0 0.0
    %2037 = vmatpush1.msra.mxu0 0.0
    %2038 = vmatprep.subr.mxu0 0.0
    %2039 = vmatpush1.msra.mxu0 0.0
    %2040 = vmatprep.subr.mxu0 0.0
    %2041 = vmatpush1.msra.mxu0 0.0
    %2042 = vmatprep.subr.mxu0 0.0
    %2043 = vmatpush1.msra.mxu0 0.0
    %2044 = vmatprep.subr.mxu0 0.0
    %2045 = vmatpush1.msra.mxu0 0.0
    %2046 = vmatprep.subr.mxu0 0.0
    %2047 = vmatpush1.msra.mxu0 0.0
    %2048 = vmatprep.subr.mxu0 0.0
    %2049 = vmatpush1.msra.mxu0 0.0
    %2050 = vmatprep.subr.mxu0 0.0
    %2051 = vmatpush1.msra.mxu0 0.0
    %2052 = vmatprep.subr.mxu0 0.0
    %2053 = vmatpush1.msra.mxu0 0.0
    %2054 = vmatprep.subr.mxu0 0.0
    %2055 = vmatpush1.msra.mxu0 0.0
    %2056 = vmatprep.subr.mxu0 0.0
    %2057 = vmatpush1.msra.mxu0 0.0
    %2058 = vmatprep.mubr.f32.mxu0 0.0
    %2059 = vmatmul.mubr.f32.gmra.mrb[0].mxu0 %v1989
    %v2060 = vpop.f32.mrb[0].mxu0
    %v2061 = vadd.f32 0.0, %v2060
    %v2062 = vpop.f32.mrb[0].mxu0
    %2063 = vmatprep.mubr.f32.mxu0 0.0
    %2064 = vmatmul.mubr.f32.gmra.mrb[0].mxu0 %v1992
    %v2065 = vpop.f32.mrb[0].mxu0
    %v2066 = vadd.f32 0.0, %v2065
    %v2067 = vpop.f32.mrb[0].mxu0
    %2068 = vdwg.mxu0
    %v2069 = vadd.f32 %v1781, %v2061
    %v2070 = vadd.f32 %v1781, %v2066
    %2071 = vrot.lane.b32.xlu0 %v1769, 120
    %v2072 = vpop.permute.xlu0 %2071
    %2073 = vrot.lane.b32.xlu0 %v1774, 120
    %v2074 = vpop.permute.xlu0 %2073
    %2075 = vrot.lane.b32.xlu0 %v1769, 88
    %v2076 = vpop.permute.xlu0 %2075
    %2077 = vrot.lane.b32.xlu0 %v1774, 88
    %v2078 = vpop.permute.xlu0 %2077
    %v2079 = vsel %vm245, %v2072, 0
    %v2081 = vsel %vm245, %v2074, 0
    %v2083 = vsel %vm245, %v2076, 0
    %v2085 = vsel %vm245, %v2078, 0
    %2087 = vmatprep.subr.mxu0 0.0
    %2088 = vmatpush1.xpose.msra.mxu0 %v2083
    %2089 = vmatprep.subr.mxu0 0.0
    %2090 = vmatpush1.xpose.msra.mxu0 %v2085
    %2091 = vmatprep.subr.mxu0 0.0
    %2092 = vmatpush1.xpose.msra.mxu0 0.0
    %2093 = vmatprep.subr.mxu0 0.0
    %2094 = vmatpush1.xpose.msra.mxu0 0.0
    %2095 = vmatprep.subr.mxu0 0.0
    %2096 = vmatpush1.xpose.msra.mxu0 0.0
    %2097 = vmatprep.subr.mxu0 0.0
    %2098 = vmatpush1.xpose.msra.mxu0 0.0
    %2099 = vmatprep.subr.mxu0 0.0
    %2100 = vmatpush1.xpose.msra.mxu0 0.0
    %2101 = vmatprep.subr.mxu0 0.0
    %2102 = vmatpush1.xpose.msra.mxu0 0.0
    %2103 = vmatprep.subr.mxu0 0.0
    %2104 = vmatpush1.xpose.msra.mxu0 0.0
    %2105 = vmatprep.subr.mxu0 0.0
    %2106 = vmatpush1.xpose.msra.mxu0 0.0
    %2107 = vmatprep.subr.mxu0 0.0
    %2108 = vmatpush1.xpose.msra.mxu0 0.0
    %2109 = vmatprep.subr.mxu0 0.0
    %2110 = vmatpush1.xpose.msra.mxu0 0.0
    %2111 = vmatprep.subr.mxu0 0.0
    %2112 = vmatpush1.xpose.msra.mxu0 0.0
    %2113 = vmatprep.subr.mxu0 0.0
    %2114 = vmatpush1.xpose.msra.mxu0 0.0
    %2115 = vmatprep.subr.mxu0 0.0
    %2116 = vmatpush1.xpose.msra.mxu0 0.0
    %2117 = vmatprep.subr.mxu0 0.0
    %2118 = vmatpush1.xpose.msra.mxu0 0.0
    %2119 = vmatprep.subr.mxu0 0.0
    %2120 = vmatpush1.xpose.msra.mxu0 0.0
    %2121 = vmatprep.subr.mxu0 0.0
    %2122 = vmatpush1.xpose.msra.mxu0 0.0
    %2123 = vmatprep.subr.mxu0 0.0
    %2124 = vmatpush1.xpose.msra.mxu0 0.0
    %2125 = vmatprep.subr.mxu0 0.0
    %2126 = vmatpush1.xpose.msra.mxu0 0.0
    %2127 = vmatprep.subr.mxu0 0.0
    %2128 = vmatpush1.xpose.msra.mxu0 0.0
    %2129 = vmatprep.subr.mxu0 0.0
    %2130 = vmatpush1.xpose.msra.mxu0 0.0
    %2131 = vmatprep.subr.mxu0 0.0
    %2132 = vmatpush1.xpose.msra.mxu0 0.0
    %2133 = vmatprep.subr.mxu0 0.0
    %2134 = vmatpush1.xpose.msra.mxu0 0.0
    %2135 = vmatprep.subr.mxu0 0.0
    %2136 = vmatpush1.xpose.msra.mxu0 0.0
    %2137 = vmatprep.subr.mxu0 0.0
    %2138 = vmatpush1.xpose.msra.mxu0 0.0
    %2139 = vmatprep.subr.mxu0 0.0
    %2140 = vmatpush1.xpose.msra.mxu0 0.0
    %2141 = vmatprep.subr.mxu0 0.0
    %2142 = vmatpush1.xpose.msra.mxu0 0.0
    %2143 = vmatprep.subr.mxu0 0.0
    %2144 = vmatpush1.xpose.msra.mxu0 0.0
    %2145 = vmatprep.subr.mxu0 0.0
    %2146 = vmatpush1.xpose.msra.mxu0 0.0
    %2147 = vmatprep.subr.mxu0 0.0
    %2148 = vmatpush1.xpose.msra.mxu0 0.0
    %2149 = vmatprep.subr.mxu0 0.0
    %2150 = vmatpush1.xpose.msra.mxu0 0.0
    %2151 = vmatprep.mubr.f32.mxu0 0.0
    %2152 = vmatmul.mubr.f32.gmra.mrb[0].mxu0 %v2079
    %v2153 = vpop.f32.mrb[0].mxu0
    %v2154 = vadd.f32 0.0, %v2153
    %v2155 = vpop.f32.mrb[0].mxu0
    %2156 = vmatprep.mubr.f32.mxu0 0.0
    %2157 = vmatmul.mubr.f32.gmra.mrb[0].mxu0 %v2081
    %v2158 = vpop.f32.mrb[0].mxu0
    %v2159 = vadd.f32 0.0, %v2158
    %v2160 = vpop.f32.mrb[0].mxu0
    %2161 = vdwg.mxu0
    %v2162 = vmul.f32 %v2154, 0.35355338
    %v2163 = vmul.f32 %v2159, 0.35355338
    %v2164 = vadd.f32 %v2162, %v130
    %v2165 = vadd.f32 %v2163, %v131
    %v2166 = vsel %vm333, %v2164, -inf
    %2167 = vmax.xlane.f32.xlu0 %v2166
    %v2168 = vpop.xlane.xlu0 %2167
    %v2169 = vsel %vm333, %v2165, -inf
    %2170 = vmax.xlane.f32.xlu0 %v2169
    %v2171 = vpop.xlane.xlu0 %2170
    %v2172 = vsub.f32 %v2164, %v2168
    %v2173 = vsub.f32 %v2165, %v2171
    %v2174 = vmul.f32 %v2172, 1.442695
    %v2175 = vpow.pop %v2174
    %v2176 = vmul.f32 %v2173, 1.442695
    %v2177 = vpow.pop %v2176
    %v2178 = vsel %vm333, %v2175, 0.0
    %2179 = vadd.xlane.f32.xlu0 %v2178
    %v2180 = vpop.xlane.xlu0 %2179
    %v2181 = vsel %vm333, %v2177, 0.0
    %2182 = vadd.xlane.f32.xlu0 %v2181
    %v2183 = vpop.xlane.xlu0 %2182
    %v2184 = vrcp.pop %v2180
    %v2185 = vmul.f32 %v2175, %v2184
    %v2186 = vrcp.pop %v2183
    %v2187 = vmul.f32 %v2177, %v2186
    %2188 = vrot.lane.b32.xlu0 %v1769, 56
    %v2189 = vpop.permute.xlu0 %2188
    %2190 = vrot.lane.b32.xlu0 %v1774, 56
    %v2191 = vpop.permute.xlu0 %2190
    %v2195 = vsel %vm333, %v2185, 0
    %v2198 = vsel %vm333, %v2187, 0
    %2200 = vmatprep.subr.mxu0 0.0
    %2201 = vmatpush1.msra.mxu0 %v2189
    %2202 = vmatprep.subr.mxu0 0.0
    %2203 = vmatpush1.msra.mxu0 %v2191
    %2204 = vmatprep.subr.mxu0 0.0
    %2205 = vmatpush1.msra.mxu0 0.0
    %2206 = vmatprep.subr.mxu0 0.0
    %2207 = vmatpush1.msra.mxu0 0.0
    %2208 = vmatprep.subr.mxu0 0.0
    %2209 = vmatpush1.msra.mxu0 0.0
    %2210 = vmatprep.subr.mxu0 0.0
    %2211 = vmatpush1.msra.mxu0 0.0
    %2212 = vmatprep.subr.mxu0 0.0
    %2213 = vmatpush1.msra.mxu0 0.0
    %2214 = vmatprep.subr.mxu0 0.0
    %2215 = vmatpush1.msra.mxu0 0.0
    %2216 = vmatprep.subr.mxu0 0.0
    %2217 = vmatpush1.msra.mxu0 0.0
    %2218 = vmatprep.subr.mxu0 0.0
    %2219 = vmatpush1.msra.mxu0 0.0
    %2220 = vmatprep.subr.mxu0 0.0
    %2221 = vmatpush1.msra.mxu0 0.0
    %2222 = vmatprep.subr.mxu0 0.0
    %2223 = vmatpush1.msra.mxu0 0.0
    %2224 = vmatprep.subr.mxu0 0.0
    %2225 = vmatpush1.msra.mxu0 0.0
    %2226 = vmatprep.subr.mxu0 0.0
    %2227 = vmatpush1.msra.mxu0 0.0
    %2228 = vmatprep.subr.mxu0 0.0
    %2229 = vmatpush1.msra.mxu0 0.0
    %2230 = vmatprep.subr.mxu0 0.0
    %2231 = vmatpush1.msra.mxu0 0.0
    %2232 = vmatprep.subr.mxu0 0.0
    %2233 = vmatpush1.msra.mxu0 0.0
    %2234 = vmatprep.subr.mxu0 0.0
    %2235 = vmatpush1.msra.mxu0 0.0
    %2236 = vmatprep.subr.mxu0 0.0
    %2237 = vmatpush1.msra.mxu0 0.0
    %2238 = vmatprep.subr.mxu0 0.0
    %2239 = vmatpush1.msra.mxu0 0.0
    %2240 = vmatprep.subr.mxu0 0.0
    %2241 = vmatpush1.msra.mxu0 0.0
    %2242 = vmatprep.subr.mxu0 0.0
    %2243 = vmatpush1.msra.mxu0 0.0
    %2244 = vmatprep.subr.mxu0 0.0
    %2245 = vmatpush1.msra.mxu0 0.0
    %2246 = vmatprep.subr.mxu0 0.0
    %2247 = vmatpush1.msra.mxu0 0.0
    %2248 = vmatprep.subr.mxu0 0.0
    %2249 = vmatpush1.msra.mxu0 0.0
    %2250 = vmatprep.subr.mxu0 0.0
    %2251 = vmatpush1.msra.mxu0 0.0
    %2252 = vmatprep.subr.mxu0 0.0
    %2253 = vmatpush1.msra.mxu0 0.0
    %2254 = vmatprep.subr.mxu0 0.0
    %2255 = vmatpush1.msra.mxu0 0.0
    %2256 = vmatprep.subr.mxu0 0.0
    %2257 = vmatpush1.msra.mxu0 0.0
    %2258 = vmatprep.subr.mxu0 0.0
    %2259 = vmatpush1.msra.mxu0 0.0
    %2260 = vmatprep.subr.mxu0 0.0
    %2261 = vmatpush1.msra.mxu0 0.0
    %2262 = vmatprep.subr.mxu0 0.0
    %2263 = vmatpush1.msra.mxu0 0.0
    %2264 = vmatprep.mubr.f32.mxu0 0.0
    %2265 = vmatmul.mubr.f32.gmra.mrb[0].mxu0 %v2195
    %v2266 = vpop.f32.mrb[0].mxu0
    %v2267 = vadd.f32 0.0, %v2266
    %v2268 = vpop.f32.mrb[0].mxu0
    %2269 = vmatprep.mubr.f32.mxu0 0.0
    %2270 = vmatmul.mubr.f32.gmra.mrb[0].mxu0 %v2198
    %v2271 = vpop.f32.mrb[0].mxu0
    %v2272 = vadd.f32 0.0, %v2271
    %v2273 = vpop.f32.mrb[0].mxu0
    %2274 = vdwg.mxu0
    %2276 = vrot.lane.b32.xlu0 %v1675, 32
    %v2277 = vpop.permute.xlu0 %2276
    %v2280 = vsel %vm245, %v2267, 0
    %v2283 = vsel %vm245, %v2272, 0
    %2285 = vmatprep.subr.mxu0 0.0
    %2286 = vmatpush1.msra.mxu0 %v2277
    %2287 = vmatprep.subr.mxu0 0.0
    %2288 = vmatpush1.msra.mxu0 0.0
    %2289 = vmatprep.subr.mxu0 0.0
    %2290 = vmatpush1.msra.mxu0 0.0
    %2291 = vmatprep.subr.mxu0 0.0
    %2292 = vmatpush1.msra.mxu0 0.0
    %2293 = vmatprep.subr.mxu0 0.0
    %2294 = vmatpush1.msra.mxu0 0.0
    %2295 = vmatprep.subr.mxu0 0.0
    %2296 = vmatpush1.msra.mxu0 0.0
    %2297 = vmatprep.subr.mxu0 0.0
    %2298 = vmatpush1.msra.mxu0 0.0
    %2299 = vmatprep.subr.mxu0 0.0
    %2300 = vmatpush1.msra.mxu0 0.0
    %2301 = vmatprep.subr.mxu0 0.0
    %2302 = vmatpush1.msra.mxu0 0.0
    %2303 = vmatprep.subr.mxu0 0.0
    %2304 = vmatpush1.msra.mxu0 0.0
    %2305 = vmatprep.subr.mxu0 0.0
    %2306 = vmatpush1.msra.mxu0 0.0
    %2307 = vmatprep.subr.mxu0 0.0
    %2308 = vmatpush1.msra.mxu0 0.0
    %2309 = vmatprep.subr.mxu0 0.0
    %2310 = vmatpush1.msra.mxu0 0.0
    %2311 = vmatprep.subr.mxu0 0.0
    %2312 = vmatpush1.msra.mxu0 0.0
    %2313 = vmatprep.subr.mxu0 0.0
    %2314 = vmatpush1.msra.mxu0 0.0
    %2315 = vmatprep.subr.mxu0 0.0
    %2316 = vmatpush1.msra.mxu0 0.0
    %2317 = vmatprep.subr.mxu0 0.0
    %2318 = vmatpush1.msra.mxu0 0.0
    %2319 = vmatprep.subr.mxu0 0.0
    %2320 = vmatpush1.msra.mxu0 0.0
    %2321 = vmatprep.subr.mxu0 0.0
    %2322 = vmatpush1.msra.mxu0 0.0
    %2323 = vmatprep.subr.mxu0 0.0
    %2324 = vmatpush1.msra.mxu0 0.0
    %2325 = vmatprep.subr.mxu0 0.0
    %2326 = vmatpush1.msra.mxu0 0.0
    %2327 = vmatprep.subr.mxu0 0.0
    %2328 = vmatpush1.msra.mxu0 0.0
    %2329 = vmatprep.subr.mxu0 0.0
    %2330 = vmatpush1.msra.mxu0 0.0
    %2331 = vmatprep.subr.mxu0 0.0
    %2332 = vmatpush1.msra.mxu0 0.0
    %2333 = vmatprep.subr.mxu0 0.0
    %2334 = vmatpush1.msra.mxu0 0.0
    %2335 = vmatprep.subr.mxu0 0.0
    %2336 = vmatpush1.msra.mxu0 0.0
    %2337 = vmatprep.subr.mxu0 0.0
    %2338 = vmatpush1.msra.mxu0 0.0
    %2339 = vmatprep.subr.mxu0 0.0
    %2340 = vmatpush1.msra.mxu0 0.0
    %2341 = vmatprep.subr.mxu0 0.0
    %2342 = vmatpush1.msra.mxu0 0.0
    %2343 = vmatprep.subr.mxu0 0.0
    %2344 = vmatpush1.msra.mxu0 0.0
    %2345 = vmatprep.subr.mxu0 0.0
    %2346 = vmatpush1.msra.mxu0 0.0
    %2347 = vmatprep.subr.mxu0 0.0
    %2348 = vmatpush1.msra.mxu0 0.0
    %2349 = vmatprep.mubr.f32.mxu0 0.0
    %2350 = vmatmul.mubr.f32.gmra.mrb[0].mxu0 %v2280
    %v2351 = vpop.f32.mrb[0].mxu0
    %v2352 = vadd.f32 0.0, %v2351
    %v2353 = vpop.f32.mrb[0].mxu0
    %2354 = vmatprep.mubr.f32.mxu0 0.0
    %2355 = vmatmul.mubr.f32.gmra.mrb[0].mxu0 %v2283
    %v2356 = vpop.f32.mrb[0].mxu0
    %v2357 = vadd.f32 0.0, %v2356
    %v2358 = vpop.f32.mrb[0].mxu0
    %2359 = vdwg.mxu0
    %v2360 = vadd.f32 %v2069, %v2352
    %v2361 = vadd.f32 %v2070, %v2357
    %2362 = vrot.lane.b32.xlu0 %v1769, 112
    %v2363 = vpop.permute.xlu0 %2362
    %2364 = vrot.lane.b32.xlu0 %v1774, 112
    %v2365 = vpop.permute.xlu0 %2364
    %2366 = vrot.lane.b32.xlu0 %v1769, 80
    %v2367 = vpop.permute.xlu0 %2366
    %2368 = vrot.lane.b32.xlu0 %v1774, 80
    %v2369 = vpop.permute.xlu0 %2368
    %v2370 = vsel %vm245, %v2363, 0
    %v2372 = vsel %vm245, %v2365, 0
    %v2374 = vsel %vm245, %v2367, 0
    %v2376 = vsel %vm245, %v2369, 0
    %2378 = vmatprep.subr.mxu0 0.0
    %2379 = vmatpush1.xpose.msra.mxu0 %v2374
    %2380 = vmatprep.subr.mxu0 0.0
    %2381 = vmatpush1.xpose.msra.mxu0 %v2376
    %2382 = vmatprep.subr.mxu0 0.0
    %2383 = vmatpush1.xpose.msra.mxu0 0.0
    %2384 = vmatprep.subr.mxu0 0.0
    %2385 = vmatpush1.xpose.msra.mxu0 0.0
    %2386 = vmatprep.subr.mxu0 0.0
    %2387 = vmatpush1.xpose.msra.mxu0 0.0
    %2388 = vmatprep.subr.mxu0 0.0
    %2389 = vmatpush1.xpose.msra.mxu0 0.0
    %2390 = vmatprep.subr.mxu0 0.0
    %2391 = vmatpush1.xpose.msra.mxu0 0.0
    %2392 = vmatprep.subr.mxu0 0.0
    %2393 = vmatpush1.xpose.msra.mxu0 0.0
    %2394 = vmatprep.subr.mxu0 0.0
    %2395 = vmatpush1.xpose.msra.mxu0 0.0
    %2396 = vmatprep.subr.mxu0 0.0
    %2397 = vmatpush1.xpose.msra.mxu0 0.0
    %2398 = vmatprep.subr.mxu0 0.0
    %2399 = vmatpush1.xpose.msra.mxu0 0.0
    %2400 = vmatprep.subr.mxu0 0.0
    %2401 = vmatpush1.xpose.msra.mxu0 0.0
    %2402 = vmatprep.subr.mxu0 0.0
    %2403 = vmatpush1.xpose.msra.mxu0 0.0
    %2404 = vmatprep.subr.mxu0 0.0
    %2405 = vmatpush1.xpose.msra.mxu0 0.0
    %2406 = vmatprep.subr.mxu0 0.0
    %2407 = vmatpush1.xpose.msra.mxu0 0.0
    %2408 = vmatprep.subr.mxu0 0.0
    %2409 = vmatpush1.xpose.msra.mxu0 0.0
    %2410 = vmatprep.subr.mxu0 0.0
    %2411 = vmatpush1.xpose.msra.mxu0 0.0
    %2412 = vmatprep.subr.mxu0 0.0
    %2413 = vmatpush1.xpose.msra.mxu0 0.0
    %2414 = vmatprep.subr.mxu0 0.0
    %2415 = vmatpush1.xpose.msra.mxu0 0.0
    %2416 = vmatprep.subr.mxu0 0.0
    %2417 = vmatpush1.xpose.msra.mxu0 0.0
    %2418 = vmatprep.subr.mxu0 0.0
    %2419 = vmatpush1.xpose.msra.mxu0 0.0
    %2420 = vmatprep.subr.mxu0 0.0
    %2421 = vmatpush1.xpose.msra.mxu0 0.0
    %2422 = vmatprep.subr.mxu0 0.0
    %2423 = vmatpush1.xpose.msra.mxu0 0.0
    %2424 = vmatprep.subr.mxu0 0.0
    %2425 = vmatpush1.xpose.msra.mxu0 0.0
    %2426 = vmatprep.subr.mxu0 0.0
    %2427 = vmatpush1.xpose.msra.mxu0 0.0
    %2428 = vmatprep.subr.mxu0 0.0
    %2429 = vmatpush1.xpose.msra.mxu0 0.0
    %2430 = vmatprep.subr.mxu0 0.0
    %2431 = vmatpush1.xpose.msra.mxu0 0.0
    %2432 = vmatprep.subr.mxu0 0.0
    %2433 = vmatpush1.xpose.msra.mxu0 0.0
    %2434 = vmatprep.subr.mxu0 0.0
    %2435 = vmatpush1.xpose.msra.mxu0 0.0
    %2436 = vmatprep.subr.mxu0 0.0
    %2437 = vmatpush1.xpose.msra.mxu0 0.0
    %2438 = vmatprep.subr.mxu0 0.0
    %2439 = vmatpush1.xpose.msra.mxu0 0.0
    %2440 = vmatprep.subr.mxu0 0.0
    %2441 = vmatpush1.xpose.msra.mxu0 0.0
    %2442 = vmatprep.mubr.f32.mxu0 0.0
    %2443 = vmatmul.mubr.f32.gmra.mrb[0].mxu0 %v2370
    %v2444 = vpop.f32.mrb[0].mxu0
    %v2445 = vadd.f32 0.0, %v2444
    %v2446 = vpop.f32.mrb[0].mxu0
    %2447 = vmatprep.mubr.f32.mxu0 0.0
    %2448 = vmatmul.mubr.f32.gmra.mrb[0].mxu0 %v2372
    %v2449 = vpop.f32.mrb[0].mxu0
    %v2450 = vadd.f32 0.0, %v2449
    %v2451 = vpop.f32.mrb[0].mxu0
    %2452 = vdwg.mxu0
    %v2453 = vmul.f32 %v2445, 0.35355338
    %v2454 = vmul.f32 %v2450, 0.35355338
    %v2455 = vadd.f32 %v2453, %v130
    %v2456 = vadd.f32 %v2454, %v131
    %v2457 = vsel %vm333, %v2455, -inf
    %2458 = vmax.xlane.f32.xlu0 %v2457
    %v2459 = vpop.xlane.xlu0 %2458
    %v2460 = vsel %vm333, %v2456, -inf
    %2461 = vmax.xlane.f32.xlu0 %v2460
    %v2462 = vpop.xlane.xlu0 %2461
    %v2463 = vsub.f32 %v2455, %v2459
    %v2464 = vsub.f32 %v2456, %v2462
    %v2465 = vmul.f32 %v2463, 1.442695
    %v2466 = vpow.pop %v2465
    %v2467 = vmul.f32 %v2464, 1.442695
    %v2468 = vpow.pop %v2467
    %v2469 = vsel %vm333, %v2466, 0.0
    %2470 = vadd.xlane.f32.xlu0 %v2469
    %v2471 = vpop.xlane.xlu0 %2470
    %v2472 = vsel %vm333, %v2468, 0.0
    %2473 = vadd.xlane.f32.xlu0 %v2472
    %v2474 = vpop.xlane.xlu0 %2473
    %v2475 = vrcp.pop %v2471
    %v2476 = vmul.f32 %v2466, %v2475
    %v2477 = vrcp.pop %v2474
    %v2478 = vmul.f32 %v2468, %v2477
    %2479 = vrot.lane.b32.xlu0 %v1769, 48
    %v2480 = vpop.permute.xlu0 %2479
    %2481 = vrot.lane.b32.xlu0 %v1774, 48
    %v2482 = vpop.permute.xlu0 %2481
    %v2486 = vsel %vm333, %v2476, 0
    %v2489 = vsel %vm333, %v2478, 0
    %2491 = vmatprep.subr.mxu0 0.0
    %2492 = vmatpush1.msra.mxu0 %v2480
    %2493 = vmatprep.subr.mxu0 0.0
    %2494 = vmatpush1.msra.mxu0 %v2482
    %2495 = vmatprep.subr.mxu0 0.0
    %2496 = vmatpush1.msra.mxu0 0.0
    %2497 = vmatprep.subr.mxu0 0.0
    %2498 = vmatpush1.msra.mxu0 0.0
    %2499 = vmatprep.subr.mxu0 0.0
    %2500 = vmatpush1.msra.mxu0 0.0
    %2501 = vmatprep.subr.mxu0 0.0
    %2502 = vmatpush1.msra.mxu0 0.0
    %2503 = vmatprep.subr.mxu0 0.0
    %2504 = vmatpush1.msra.mxu0 0.0
    %2505 = vmatprep.subr.mxu0 0.0
    %2506 = vmatpush1.msra.mxu0 0.0
    %2507 = vmatprep.subr.mxu0 0.0
    %2508 = vmatpush1.msra.mxu0 0.0
    %2509 = vmatprep.subr.mxu0 0.0
    %2510 = vmatpush1.msra.mxu0 0.0
    %2511 = vmatprep.subr.mxu0 0.0
    %2512 = vmatpush1.msra.mxu0 0.0
    %2513 = vmatprep.subr.mxu0 0.0
    %2514 = vmatpush1.msra.mxu0 0.0
    %2515 = vmatprep.subr.mxu0 0.0
    %2516 = vmatpush1.msra.mxu0 0.0
    %2517 = vmatprep.subr.mxu0 0.0
    %2518 = vmatpush1.msra.mxu0 0.0
    %2519 = vmatprep.subr.mxu0 0.0
    %2520 = vmatpush1.msra.mxu0 0.0
    %2521 = vmatprep.subr.mxu0 0.0
    %2522 = vmatpush1.msra.mxu0 0.0
    %2523 = vmatprep.subr.mxu0 0.0
    %2524 = vmatpush1.msra.mxu0 0.0
    %2525 = vmatprep.subr.mxu0 0.0
    %2526 = vmatpush1.msra.mxu0 0.0
    %2527 = vmatprep.subr.mxu0 0.0
    %2528 = vmatpush1.msra.mxu0 0.0
    %2529 = vmatprep.subr.mxu0 0.0
    %2530 = vmatpush1.msra.mxu0 0.0
    %2531 = vmatprep.subr.mxu0 0.0
    %2532 = vmatpush1.msra.mxu0 0.0
    %2533 = vmatprep.subr.mxu0 0.0
    %2534 = vmatpush1.msra.mxu0 0.0
    %2535 = vmatprep.subr.mxu0 0.0
    %2536 = vmatpush1.msra.mxu0 0.0
    %2537 = vmatprep.subr.mxu0 0.0
    %2538 = vmatpush1.msra.mxu0 0.0
    %2539 = vmatprep.subr.mxu0 0.0
    %2540 = vmatpush1.msra.mxu0 0.0
    %2541 = vmatprep.subr.mxu0 0.0
    %2542 = vmatpush1.msra.mxu0 0.0
    %2543 = vmatprep.subr.mxu0 0.0
    %2544 = vmatpush1.msra.mxu0 0.0
    %2545 = vmatprep.subr.mxu0 0.0
    %2546 = vmatpush1.msra.mxu0 0.0
    %2547 = vmatprep.subr.mxu0 0.0
    %2548 = vmatpush1.msra.mxu0 0.0
    %2549 = vmatprep.subr.mxu0 0.0
    %2550 = vmatpush1.msra.mxu0 0.0
    %2551 = vmatprep.subr.mxu0 0.0
    %2552 = vmatpush1.msra.mxu0 0.0
    %2553 = vmatprep.subr.mxu0 0.0
    %2554 = vmatpush1.msra.mxu0 0.0
    %2555 = vmatprep.mubr.f32.mxu0 0.0
    %2556 = vmatmul.mubr.f32.gmra.mrb[0].mxu0 %v2486
    %v2557 = vpop.f32.mrb[0].mxu0
    %v2558 = vadd.f32 0.0, %v2557
    %v2559 = vpop.f32.mrb[0].mxu0
    %2560 = vmatprep.mubr.f32.mxu0 0.0
    %2561 = vmatmul.mubr.f32.gmra.mrb[0].mxu0 %v2489
    %v2562 = vpop.f32.mrb[0].mxu0
    %v2563 = vadd.f32 0.0, %v2562
    %v2564 = vpop.f32.mrb[0].mxu0
    %2565 = vdwg.mxu0
    %2567 = vrot.lane.b32.xlu0 %v1677, 32
    %v2568 = vpop.permute.xlu0 %2567
    %v2571 = vsel %vm245, %v2558, 0
    %v2574 = vsel %vm245, %v2563, 0
    %2576 = vmatprep.subr.mxu0 0.0
    %2577 = vmatpush1.msra.mxu0 %v2568
    %2578 = vmatprep.subr.mxu0 0.0
    %2579 = vmatpush1.msra.mxu0 0.0
    %2580 = vmatprep.subr.mxu0 0.0
    %2581 = vmatpush1.msra.mxu0 0.0
    %2582 = vmatprep.subr.mxu0 0.0
    %2583 = vmatpush1.msra.mxu0 0.0
    %2584 = vmatprep.subr.mxu0 0.0
    %2585 = vmatpush1.msra.mxu0 0.0
    %2586 = vmatprep.subr.mxu0 0.0
    %2587 = vmatpush1.msra.mxu0 0.0
    %2588 = vmatprep.subr.mxu0 0.0
    %2589 = vmatpush1.msra.mxu0 0.0
    %2590 = vmatprep.subr.mxu0 0.0
    %2591 = vmatpush1.msra.mxu0 0.0
    %2592 = vmatprep.subr.mxu0 0.0
    %2593 = vmatpush1.msra.mxu0 0.0
    %2594 = vmatprep.subr.mxu0 0.0
    %2595 = vmatpush1.msra.mxu0 0.0
    %2596 = vmatprep.subr.mxu0 0.0
    %2597 = vmatpush1.msra.mxu0 0.0
    %2598 = vmatprep.subr.mxu0 0.0
    %2599 = vmatpush1.msra.mxu0 0.0
    %2600 = vmatprep.subr.mxu0 0.0
    %2601 = vmatpush1.msra.mxu0 0.0
    %2602 = vmatprep.subr.mxu0 0.0
    %2603 = vmatpush1.msra.mxu0 0.0
    %2604 = vmatprep.subr.mxu0 0.0
    %2605 = vmatpush1.msra.mxu0 0.0
    %2606 = vmatprep.subr.mxu0 0.0
    %2607 = vmatpush1.msra.mxu0 0.0
    %2608 = vmatprep.subr.mxu0 0.0
    %2609 = vmatpush1.msra.mxu0 0.0
    %2610 = vmatprep.subr.mxu0 0.0
    %2611 = vmatpush1.msra.mxu0 0.0
    %2612 = vmatprep.subr.mxu0 0.0
    %2613 = vmatpush1.msra.mxu0 0.0
    %2614 = vmatprep.subr.mxu0 0.0
    %2615 = vmatpush1.msra.mxu0 0.0
    %2616 = vmatprep.subr.mxu0 0.0
    %2617 = vmatpush1.msra.mxu0 0.0
    %2618 = vmatprep.subr.mxu0 0.0
    %2619 = vmatpush1.msra.mxu0 0.0
    %2620 = vmatprep.subr.mxu0 0.0
    %2621 = vmatpush1.msra.mxu0 0.0
    %2622 = vmatprep.subr.mxu0 0.0
    %2623 = vmatpush1.msra.mxu0 0.0
    %2624 = vmatprep.subr.mxu0 0.0
    %2625 = vmatpush1.msra.mxu0 0.0
    %2626 = vmatprep.subr.mxu0 0.0
    %2627 = vmatpush1.msra.mxu0 0.0
    %2628 = vmatprep.subr.mxu0 0.0
    %2629 = vmatpush1.msra.mxu0 0.0
    %2630 = vmatprep.subr.mxu0 0.0
    %2631 = vmatpush1.msra.mxu0 0.0
    %2632 = vmatprep.subr.mxu0 0.0
    %2633 = vmatpush1.msra.mxu0 0.0
    %2634 = vmatprep.subr.mxu0 0.0
    %2635 = vmatpush1.msra.mxu0 0.0
    %2636 = vmatprep.subr.mxu0 0.0
    %2637 = vmatpush1.msra.mxu0 0.0
    %2638 = vmatprep.subr.mxu0 0.0
    %2639 = vmatpush1.msra.mxu0 0.0
    %2640 = vmatprep.mubr.f32.mxu0 0.0
    %2641 = vmatmul.mubr.f32.gmra.mrb[0].mxu0 %v2571
    %v2642 = vpop.f32.mrb[0].mxu0
    %v2643 = vadd.f32 0.0, %v2642
    %v2644 = vpop.f32.mrb[0].mxu0
    %2645 = vmatprep.mubr.f32.mxu0 0.0
    %2646 = vmatmul.mubr.f32.gmra.mrb[0].mxu0 %v2574
    %v2647 = vpop.f32.mrb[0].mxu0
    %v2648 = vadd.f32 0.0, %v2647
    %v2649 = vpop.f32.mrb[0].mxu0
    %2650 = vdwg.mxu0
    %v2651 = vadd.f32 %v2360, %v2643
    %v2652 = vadd.f32 %v2361, %v2648
    %2653 = vrot.lane.b32.xlu0 %v1769, 104
    %v2654 = vpop.permute.xlu0 %2653
    %2655 = vrot.lane.b32.xlu0 %v1774, 104
    %v2656 = vpop.permute.xlu0 %2655
    %2657 = vrot.lane.b32.xlu0 %v1769, 72
    %v2658 = vpop.permute.xlu0 %2657
    %2659 = vrot.lane.b32.xlu0 %v1774, 72
    %v2660 = vpop.permute.xlu0 %2659
    %v2661 = vsel %vm245, %v2654, 0
    %v2663 = vsel %vm245, %v2656, 0
    %v2665 = vsel %vm245, %v2658, 0
    %v2667 = vsel %vm245, %v2660, 0
    %2669 = vmatprep.subr.mxu0 0.0
    %2670 = vmatpush1.xpose.msra.mxu0 %v2665
    %2671 = vmatprep.subr.mxu0 0.0
    %2672 = vmatpush1.xpose.msra.mxu0 %v2667
    %2673 = vmatprep.subr.mxu0 0.0
    %2674 = vmatpush1.xpose.msra.mxu0 0.0
    %2675 = vmatprep.subr.mxu0 0.0
    %2676 = vmatpush1.xpose.msra.mxu0 0.0
    %2677 = vmatprep.subr.mxu0 0.0
    %2678 = vmatpush1.xpose.msra.mxu0 0.0
    %2679 = vmatprep.subr.mxu0 0.0
    %2680 = vmatpush1.xpose.msra.mxu0 0.0
    %2681 = vmatprep.subr.mxu0 0.0
    %2682 = vmatpush1.xpose.msra.mxu0 0.0
    %2683 = vmatprep.subr.mxu0 0.0
    %2684 = vmatpush1.xpose.msra.mxu0 0.0
    %2685 = vmatprep.subr.mxu0 0.0
    %2686 = vmatpush1.xpose.msra.mxu0 0.0
    %2687 = vmatprep.subr.mxu0 0.0
    %2688 = vmatpush1.xpose.msra.mxu0 0.0
    %2689 = vmatprep.subr.mxu0 0.0
    %2690 = vmatpush1.xpose.msra.mxu0 0.0
    %2691 = vmatprep.subr.mxu0 0.0
    %2692 = vmatpush1.xpose.msra.mxu0 0.0
    %2693 = vmatprep.subr.mxu0 0.0
    %2694 = vmatpush1.xpose.msra.mxu0 0.0
    %2695 = vmatprep.subr.mxu0 0.0
    %2696 = vmatpush1.xpose.msra.mxu0 0.0
    %2697 = vmatprep.subr.mxu0 0.0
    %2698 = vmatpush1.xpose.msra.mxu0 0.0
    %2699 = vmatprep.subr.mxu0 0.0
    %2700 = vmatpush1.xpose.msra.mxu0 0.0
    %2701 = vmatprep.subr.mxu0 0.0
    %2702 = vmatpush1.xpose.msra.mxu0 0.0
    %2703 = vmatprep.subr.mxu0 0.0
    %2704 = vmatpush1.xpose.msra.mxu0 0.0
    %2705 = vmatprep.subr.mxu0 0.0
    %2706 = vmatpush1.xpose.msra.mxu0 0.0
    %2707 = vmatprep.subr.mxu0 0.0
    %2708 = vmatpush1.xpose.msra.mxu0 0.0
    %2709 = vmatprep.subr.mxu0 0.0
    %2710 = vmatpush1.xpose.msra.mxu0 0.0
    %2711 = vmatprep.subr.mxu0 0.0
    %2712 = vmatpush1.xpose.msra.mxu0 0.0
    %2713 = vmatprep.subr.mxu0 0.0
    %2714 = vmatpush1.xpose.msra.mxu0 0.0
    %2715 = vmatprep.subr.mxu0 0.0
    %2716 = vmatpush1.xpose.msra.mxu0 0.0
    %2717 = vmatprep.subr.mxu0 0.0
    %2718 = vmatpush1.xpose.msra.mxu0 0.0
    %2719 = vmatprep.subr.mxu0 0.0
    %2720 = vmatpush1.xpose.msra.mxu0 0.0
    %2721 = vmatprep.subr.mxu0 0.0
    %2722 = vmatpush1.xpose.msra.mxu0 0.0
    %2723 = vmatprep.subr.mxu0 0.0
    %2724 = vmatpush1.xpose.msra.mxu0 0.0
    %2725 = vmatprep.subr.mxu0 0.0
    %2726 = vmatpush1.xpose.msra.mxu0 0.0
    %2727 = vmatprep.subr.mxu0 0.0
    %2728 = vmatpush1.xpose.msra.mxu0 0.0
    %2729 = vmatprep.subr.mxu0 0.0
    %2730 = vmatpush1.xpose.msra.mxu0 0.0
    %2731 = vmatprep.subr.mxu0 0.0
    %2732 = vmatpush1.xpose.msra.mxu0 0.0
    %2733 = vmatprep.mubr.f32.mxu0 0.0
    %2734 = vmatmul.mubr.f32.gmra.mrb[0].mxu0 %v2661
    %v2735 = vpop.f32.mrb[0].mxu0
    %v2736 = vadd.f32 0.0, %v2735
    %v2737 = vpop.f32.mrb[0].mxu0
    %2738 = vmatprep.mubr.f32.mxu0 0.0
    %2739 = vmatmul.mubr.f32.gmra.mrb[0].mxu0 %v2663
    %v2740 = vpop.f32.mrb[0].mxu0
    %v2741 = vadd.f32 0.0, %v2740
    %v2742 = vpop.f32.mrb[0].mxu0
    %2743 = vdwg.mxu0
    %v2744 = vmul.f32 %v2736, 0.35355338
    %v2745 = vmul.f32 %v2741, 0.35355338
    %v2746 = vadd.f32 %v2744, %v130
    %v2747 = vadd.f32 %v2745, %v131
    %v2748 = vsel %vm333, %v2746, -inf
    %2749 = vmax.xlane.f32.xlu0 %v2748
    %v2750 = vpop.xlane.xlu0 %2749
    %v2751 = vsel %vm333, %v2747, -inf
    %2752 = vmax.xlane.f32.xlu0 %v2751
    %v2753 = vpop.xlane.xlu0 %2752
    %v2754 = vsub.f32 %v2746, %v2750
    %v2755 = vsub.f32 %v2747, %v2753
    %v2756 = vmul.f32 %v2754, 1.442695
    %v2757 = vpow.pop %v2756
    %v2758 = vmul.f32 %v2755, 1.442695
    %v2759 = vpow.pop %v2758
    %v2760 = vsel %vm333, %v2757, 0.0
    %2761 = vadd.xlane.f32.xlu0 %v2760
    %v2762 = vpop.xlane.xlu0 %2761
    %v2763 = vsel %vm333, %v2759, 0.0
    %2764 = vadd.xlane.f32.xlu0 %v2763
    %v2765 = vpop.xlane.xlu0 %2764
    %v2766 = vrcp.pop %v2762
    %v2767 = vmul.f32 %v2757, %v2766
    %v2768 = vrcp.pop %v2765
    %v2769 = vmul.f32 %v2759, %v2768
    %2770 = vrot.lane.b32.xlu0 %v1769, 40
    %v2771 = vpop.permute.xlu0 %2770
    %2772 = vrot.lane.b32.xlu0 %v1774, 40
    %v2773 = vpop.permute.xlu0 %2772
    %v2777 = vsel %vm333, %v2767, 0
    %v2780 = vsel %vm333, %v2769, 0
    %2782 = vmatprep.subr.mxu0 0.0
    %2783 = vmatpush1.msra.mxu0 %v2771
    %2784 = vmatprep.subr.mxu0 0.0
    %2785 = vmatpush1.msra.mxu0 %v2773
    %2786 = vmatprep.subr.mxu0 0.0
    %2787 = vmatpush1.msra.mxu0 0.0
    %2788 = vmatprep.subr.mxu0 0.0
    %2789 = vmatpush1.msra.mxu0 0.0
    %2790 = vmatprep.subr.mxu0 0.0
    %2791 = vmatpush1.msra.mxu0 0.0
    %2792 = vmatprep.subr.mxu0 0.0
    %2793 = vmatpush1.msra.mxu0 0.0
    %2794 = vmatprep.subr.mxu0 0.0
    %2795 = vmatpush1.msra.mxu0 0.0
    %2796 = vmatprep.subr.mxu0 0.0
    %2797 = vmatpush1.msra.mxu0 0.0
    %2798 = vmatprep.subr.mxu0 0.0
    %2799 = vmatpush1.msra.mxu0 0.0
    %2800 = vmatprep.subr.mxu0 0.0
    %2801 = vmatpush1.msra.mxu0 0.0
    %2802 = vmatprep.subr.mxu0 0.0
    %2803 = vmatpush1.msra.mxu0 0.0
    %2804 = vmatprep.subr.mxu0 0.0
    %2805 = vmatpush1.msra.mxu0 0.0
    %2806 = vmatprep.subr.mxu0 0.0
    %2807 = vmatpush1.msra.mxu0 0.0
    %2808 = vmatprep.subr.mxu0 0.0
    %2809 = vmatpush1.msra.mxu0 0.0
    %2810 = vmatprep.subr.mxu0 0.0
    %2811 = vmatpush1.msra.mxu0 0.0
    %2812 = vmatprep.subr.mxu0 0.0
    %2813 = vmatpush1.msra.mxu0 0.0
    %2814 = vmatprep.subr.mxu0 0.0
    %2815 = vmatpush1.msra.mxu0 0.0
    %2816 = vmatprep.subr.mxu0 0.0
    %2817 = vmatpush1.msra.mxu0 0.0
    %2818 = vmatprep.subr.mxu0 0.0
    %2819 = vmatpush1.msra.mxu0 0.0
    %2820 = vmatprep.subr.mxu0 0.0
    %2821 = vmatpush1.msra.mxu0 0.0
    %2822 = vmatprep.subr.mxu0 0.0
    %2823 = vmatpush1.msra.mxu0 0.0
    %2824 = vmatprep.subr.mxu0 0.0
    %2825 = vmatpush1.msra.mxu0 0.0
    %2826 = vmatprep.subr.mxu0 0.0
    %2827 = vmatpush1.msra.mxu0 0.0
    %2828 = vmatprep.subr.mxu0 0.0
    %2829 = vmatpush1.msra.mxu0 0.0
    %2830 = vmatprep.subr.mxu0 0.0
    %2831 = vmatpush1.msra.mxu0 0.0
    %2832 = vmatprep.subr.mxu0 0.0
    %2833 = vmatpush1.msra.mxu0 0.0
    %2834 = vmatprep.subr.mxu0 0.0
    %2835 = vmatpush1.msra.mxu0 0.0
    %2836 = vmatprep.subr.mxu0 0.0
    %2837 = vmatpush1.msra.mxu0 0.0
    %2838 = vmatprep.subr.mxu0 0.0
    %2839 = vmatpush1.msra.mxu0 0.0
    %2840 = vmatprep.subr.mxu0 0.0
    %2841 = vmatpush1.msra.mxu0 0.0
    %2842 = vmatprep.subr.mxu0 0.0
    %2843 = vmatpush1.msra.mxu0 0.0
    %2844 = vmatprep.subr.mxu0 0.0
    %2845 = vmatpush1.msra.mxu0 0.0
    %2846 = vmatprep.mubr.f32.mxu0 0.0
    %2847 = vmatmul.mubr.f32.gmra.mrb[0].mxu0 %v2777
    %v2848 = vpop.f32.mrb[0].mxu0
    %v2849 = vadd.f32 0.0, %v2848
    %v2850 = vpop.f32.mrb[0].mxu0
    %2851 = vmatprep.mubr.f32.mxu0 0.0
    %2852 = vmatmul.mubr.f32.gmra.mrb[0].mxu0 %v2780
    %v2853 = vpop.f32.mrb[0].mxu0
    %v2854 = vadd.f32 0.0, %v2853
    %v2855 = vpop.f32.mrb[0].mxu0
    %2856 = vdwg.mxu0
    %2858 = vrot.lane.b32.xlu0 %v1679, 32
    %v2859 = vpop.permute.xlu0 %2858
    %v2862 = vsel %vm245, %v2849, 0
    %v2865 = vsel %vm245, %v2854, 0
    %2867 = vmatprep.subr.mxu0 0.0
    %2868 = vmatpush1.msra.mxu0 %v2859
    %2869 = vmatprep.subr.mxu0 0.0
    %2870 = vmatpush1.msra.mxu0 0.0
    %2871 = vmatprep.subr.mxu0 0.0
    %2872 = vmatpush1.msra.mxu0 0.0
    %2873 = vmatprep.subr.mxu0 0.0
    %2874 = vmatpush1.msra.mxu0 0.0
    %2875 = vmatprep.subr.mxu0 0.0
    %2876 = vmatpush1.msra.mxu0 0.0
    %2877 = vmatprep.subr.mxu0 0.0
    %2878 = vmatpush1.msra.mxu0 0.0
    %2879 = vmatprep.subr.mxu0 0.0
    %2880 = vmatpush1.msra.mxu0 0.0
    %2881 = vmatprep.subr.mxu0 0.0
    %2882 = vmatpush1.msra.mxu0 0.0
    %2883 = vmatprep.subr.mxu0 0.0
    %2884 = vmatpush1.msra.mxu0 0.0
    %2885 = vmatprep.subr.mxu0 0.0
    %2886 = vmatpush1.msra.mxu0 0.0
    %2887 = vmatprep.subr.mxu0 0.0
    %2888 = vmatpush1.msra.mxu0 0.0
    %2889 = vmatprep.subr.mxu0 0.0
    %2890 = vmatpush1.msra.mxu0 0.0
    %2891 = vmatprep.subr.mxu0 0.0
    %2892 = vmatpush1.msra.mxu0 0.0
    %2893 = vmatprep.subr.mxu0 0.0
    %2894 = vmatpush1.msra.mxu0 0.0
    %2895 = vmatprep.subr.mxu0 0.0
    %2896 = vmatpush1.msra.mxu0 0.0
    %2897 = vmatprep.subr.mxu0 0.0
    %2898 = vmatpush1.msra.mxu0 0.0
    %2899 = vmatprep.subr.mxu0 0.0
    %2900 = vmatpush1.msra.mxu0 0.0
    %2901 = vmatprep.subr.mxu0 0.0
    %2902 = vmatpush1.msra.mxu0 0.0
    %2903 = vmatprep.subr.mxu0 0.0
    %2904 = vmatpush1.msra.mxu0 0.0
    %2905 = vmatprep.subr.mxu0 0.0
    %2906 = vmatpush1.msra.mxu0 0.0
    %2907 = vmatprep.subr.mxu0 0.0
    %2908 = vmatpush1.msra.mxu0 0.0
    %2909 = vmatprep.subr.mxu0 0.0
    %2910 = vmatpush1.msra.mxu0 0.0
    %2911 = vmatprep.subr.mxu0 0.0
    %2912 = vmatpush1.msra.mxu0 0.0
    %2913 = vmatprep.subr.mxu0 0.0
    %2914 = vmatpush1.msra.mxu0 0.0
    %2915 = vmatprep.subr.mxu0 0.0
    %2916 = vmatpush1.msra.mxu0 0.0
    %2917 = vmatprep.subr.mxu0 0.0
    %2918 = vmatpush1.msra.mxu0 0.0
    %2919 = vmatprep.subr.mxu0 0.0
    %2920 = vmatpush1.msra.mxu0 0.0
    %2921 = vmatprep.subr.mxu0 0.0
    %2922 = vmatpush1.msra.mxu0 0.0
    %2923 = vmatprep.subr.mxu0 0.0
    %2924 = vmatpush1.msra.mxu0 0.0
    %2925 = vmatprep.subr.mxu0 0.0
    %2926 = vmatpush1.msra.mxu0 0.0
    %2927 = vmatprep.subr.mxu0 0.0
    %2928 = vmatpush1.msra.mxu0 0.0
    %2929 = vmatprep.subr.mxu0 0.0
    %2930 = vmatpush1.msra.mxu0 0.0
    %2931 = vmatprep.mubr.f32.mxu0 0.0
    %2932 = vmatmul.mubr.f32.gmra.mrb[0].mxu0 %v2862
    %v2933 = vpop.f32.mrb[0].mxu0
    %v2934 = vadd.f32 0.0, %v2933
    %v2935 = vpop.f32.mrb[0].mxu0
    %2936 = vmatprep.mubr.f32.mxu0 0.0
    %2937 = vmatmul.mubr.f32.gmra.mrb[0].mxu0 %v2865
    %v2938 = vpop.f32.mrb[0].mxu0
    %v2939 = vadd.f32 0.0, %v2938
    %v2940 = vpop.f32.mrb[0].mxu0
    %2941 = vdwg.mxu0
    %v2942 = vadd.f32 %v2651, %v2934
    %v2943 = vadd.f32 %v2652, %v2939
    %v2944 = vadd.f32 %v1670, %v2942
    %v2945 = vadd.f32 %v1671, %v2943
    %v2946 = vsel %vm99, %v2944, 0.0
    %2947 = vadd.xlane.f32.xlu0 %v2946
    %v2948 = vpop.xlane.xlu0 %2947
    %v2949 = vsel %vm99, %v2945, 0.0
    %2950 = vadd.xlane.f32.xlu0 %v2949
    %v2951 = vpop.xlane.xlu0 %2950
    %v2952 = vmul.f32 %v2948, %v53
    %v2953 = vmul.f32 %v2951, %v53
    %v2954 = vsub.f32 %v2944, %v2952
    %v2955 = vsub.f32 %v2945, %v2953
    %v2956 = vmul.f32 %v2954, %v2954
    %v2957 = vmul.f32 %v2955, %v2955
    %v2958 = vsel %vm99, %v2956, 0.0
    %2959 = vadd.xlane.f32.xlu0 %v2958
    %v2960 = vpop.xlane.xlu0 %2959
    %v2961 = vsel %vm99, %v2957, 0.0
    %2962 = vadd.xlane.f32.xlu0 %v2961
    %v2963 = vpop.xlane.xlu0 %2962
    %v2964 = vmul.f32 %v2960, %v53
    %v2965 = vmul.f32 %v2963, %v53
    %v2966 = vadd.f32 %v2964, 1e-12
    %v2967 = vadd.f32 %v2965, 1e-12
    %v2968 = vrsqrt.pop %v2966
    %v2969 = vrsqrt.pop %v2967
    %v2970 = vmul.f32 %v2954, %v2968
    %v2971 = vmul.f32 %v2955, %v2969
    %v2972 = vlaneseq
    %v2973 = vshrl.u32 %v2972, 7
    %v2974 = vsub.s32 2, %v2973
    %v2975 = vrot.slane %v1682, %v2974
    %v2976 = vmul.f32 %v2970, %v2975
    %v2977 = vmul.f32 %v2971, %v2975
    %v2978 = vlaneseq
    %v2979 = vshrl.u32 %v2978, 7
    %v2980 = vsub.s32 3, %v2979
    %v2981 = vrot.slane %v1682, %v2980
    %v2982 = vadd.f32 %v2976, %v2981
    %v2983 = vadd.f32 %v2977, %v2981
    %v2984 = vlaneseq
    %v2985 = vshrl.u32 %v2984, 7
    %v2986 = vsub.s32 4, %v2985
    %v2987 = vrot.slane %v1682, %v2986
    %v2989 = vsel %vm99, %v2982, 0
    %v2992 = vsel %vm99, %v2983, 0
    %2994 = vmatprep.subr.mxu0 0.0
    %2995 = vmatpush1.msra.mxu0 %v1674
    %2996 = vmatprep.subr.mxu0 0.0
    %2997 = vmatpush1.msra.mxu0 %v1676
    %2998 = vmatprep.subr.mxu0 0.0
    %2999 = vmatpush1.msra.mxu0 %v1678
    %3000 = vmatprep.subr.mxu0 0.0
    %3001 = vmatpush1.msra.mxu0 %v1680
    %3002 = vmatprep.subr.mxu0 0.0
    %3003 = vmatpush1.msra.mxu0 0.0
    %3004 = vmatprep.subr.mxu0 0.0
    %3005 = vmatpush1.msra.mxu0 0.0
    %3006 = vmatprep.subr.mxu0 0.0
    %3007 = vmatpush1.msra.mxu0 0.0
    %3008 = vmatprep.subr.mxu0 0.0
    %3009 = vmatpush1.msra.mxu0 0.0
    %3010 = vmatprep.subr.mxu0 0.0
    %3011 = vmatpush1.msra.mxu0 0.0
    %3012 = vmatprep.subr.mxu0 0.0
    %3013 = vmatpush1.msra.mxu0 0.0
    %3014 = vmatprep.subr.mxu0 0.0
    %3015 = vmatpush1.msra.mxu0 0.0
    %3016 = vmatprep.subr.mxu0 0.0
    %3017 = vmatpush1.msra.mxu0 0.0
    %3018 = vmatprep.subr.mxu0 0.0
    %3019 = vmatpush1.msra.mxu0 0.0
    %3020 = vmatprep.subr.mxu0 0.0
    %3021 = vmatpush1.msra.mxu0 0.0
    %3022 = vmatprep.subr.mxu0 0.0
    %3023 = vmatpush1.msra.mxu0 0.0
    %3024 = vmatprep.subr.mxu0 0.0
    %3025 = vmatpush1.msra.mxu0 0.0
    %3026 = vmatprep.subr.mxu0 0.0
    %3027 = vmatpush1.msra.mxu0 0.0
    %3028 = vmatprep.subr.mxu0 0.0
    %3029 = vmatpush1.msra.mxu0 0.0
    %3030 = vmatprep.subr.mxu0 0.0
    %3031 = vmatpush1.msra.mxu0 0.0
    %3032 = vmatprep.subr.mxu0 0.0
    %3033 = vmatpush1.msra.mxu0 0.0
    %3034 = vmatprep.subr.mxu0 0.0
    %3035 = vmatpush1.msra.mxu0 0.0
    %3036 = vmatprep.subr.mxu0 0.0
    %3037 = vmatpush1.msra.mxu0 0.0
    %3038 = vmatprep.subr.mxu0 0.0
    %3039 = vmatpush1.msra.mxu0 0.0
    %3040 = vmatprep.subr.mxu0 0.0
    %3041 = vmatpush1.msra.mxu0 0.0
    %3042 = vmatprep.subr.mxu0 0.0
    %3043 = vmatpush1.msra.mxu0 0.0
    %3044 = vmatprep.subr.mxu0 0.0
    %3045 = vmatpush1.msra.mxu0 0.0
    %3046 = vmatprep.subr.mxu0 0.0
    %3047 = vmatpush1.msra.mxu0 0.0
    %3048 = vmatprep.subr.mxu0 0.0
    %3049 = vmatpush1.msra.mxu0 0.0
    %3050 = vmatprep.subr.mxu0 0.0
    %3051 = vmatpush1.msra.mxu0 0.0
    %3052 = vmatprep.subr.mxu0 0.0
    %3053 = vmatpush1.msra.mxu0 0.0
    %3054 = vmatprep.subr.mxu0 0.0
    %3055 = vmatpush1.msra.mxu0 0.0
    %3056 = vmatprep.subr.mxu0 0.0
    %3057 = vmatpush1.msra.mxu0 0.0
    %3058 = vmatprep.mubr.f32.mxu0 0.0
    %3059 = vmatmul.mubr.f32.gmra.mrb[0].mxu0 %v2989
    %v3060 = vpop.f32.mrb[0].mxu0
    %v3061 = vadd.f32 %v2987, %v3060
    %v3062 = vpop.f32.mrb[0].mxu0
    %3063 = vmatprep.mubr.f32.mxu0 0.0
    %3064 = vmatmul.mubr.f32.gmra.mrb[0].mxu0 %v2992
    %v3065 = vpop.f32.mrb[0].mxu0
    %v3066 = vadd.f32 %v2987, %v3065
    %v3067 = vpop.f32.mrb[0].mxu0
    %3068 = vdwg.mxu0
    %v3069 = vmul.f32 %v3061, 0.5
    %v3070 = vmul.f32 %v3066, 0.5
    %v3071 = vmul.f32 %v3061, 0.044715
    %v3072 = vmul.f32 %v3066, 0.044715
    %v3073 = vmul.f32 %v3071, %v3061
    %v3074 = vmul.f32 %v3072, %v3066
    %v3075 = vmul.f32 %v3073, %v3061
    %v3076 = vmul.f32 %v3074, %v3066
    %v3077 = vadd.f32 %v3061, %v3075
    %v3078 = vadd.f32 %v3066, %v3076
    %v3079 = vmul.f32 %v3077, 0.7978846
    %v3080 = vmul.f32 %v3078, 0.7978846
    %v3081 = vtanh.pop %v3079
    %v3082 = vtanh.pop %v3080
    %v3083 = vadd.f32 %v3081, 1.0
    %v3084 = vadd.f32 %v3082, 1.0
    %v3085 = vmul.f32 %v3069, %v3083
    %v3086 = vmul.f32 %v3070, %v3084
    %v3087 = vlaneseq
    %v3088 = vshrl.u32 %v3087, 7
    %v3089 = vsub.s32 5, %v3088
    %v3090 = vrot.slane %v1682, %v3089
    %v3092 = vsel %vm1550, %v3085, 0
    %v3095 = vsel %vm1550, %v3086, 0
    %3097 = vmatprep.subr.mxu0 0.0
    %3098 = vmatpush1.msra.mxu0 %v1684
    %3099 = vmatprep.subr.mxu0 0.0
    %3100 = vmatpush1.msra.mxu0 %v1685
    %3101 = vmatprep.subr.mxu0 0.0
    %3102 = vmatpush1.msra.mxu0 %v1686
    %3103 = vmatprep.subr.mxu0 0.0
    %3104 = vmatpush1.msra.mxu0 %v1687
    %3105 = vmatprep.subr.mxu0 0.0
    %3106 = vmatpush1.msra.mxu0 %v1688
    %3107 = vmatprep.subr.mxu0 0.0
    %3108 = vmatpush1.msra.mxu0 %v1689
    %3109 = vmatprep.subr.mxu0 0.0
    %3110 = vmatpush1.msra.mxu0 %v1690
    %3111 = vmatprep.subr.mxu0 0.0
    %3112 = vmatpush1.msra.mxu0 %v1691
    %3113 = vmatprep.subr.mxu0 0.0
    %3114 = vmatpush1.msra.mxu0 0.0
    %3115 = vmatprep.subr.mxu0 0.0
    %3116 = vmatpush1.msra.mxu0 0.0
    %3117 = vmatprep.subr.mxu0 0.0
    %3118 = vmatpush1.msra.mxu0 0.0
    %3119 = vmatprep.subr.mxu0 0.0
    %3120 = vmatpush1.msra.mxu0 0.0
    %3121 = vmatprep.subr.mxu0 0.0
    %3122 = vmatpush1.msra.mxu0 0.0
    %3123 = vmatprep.subr.mxu0 0.0
    %3124 = vmatpush1.msra.mxu0 0.0
    %3125 = vmatprep.subr.mxu0 0.0
    %3126 = vmatpush1.msra.mxu0 0.0
    %3127 = vmatprep.subr.mxu0 0.0
    %3128 = vmatpush1.msra.mxu0 0.0
    %3129 = vmatprep.subr.mxu0 0.0
    %3130 = vmatpush1.msra.mxu0 0.0
    %3131 = vmatprep.subr.mxu0 0.0
    %3132 = vmatpush1.msra.mxu0 0.0
    %3133 = vmatprep.subr.mxu0 0.0
    %3134 = vmatpush1.msra.mxu0 0.0
    %3135 = vmatprep.subr.mxu0 0.0
    %3136 = vmatpush1.msra.mxu0 0.0
    %3137 = vmatprep.subr.mxu0 0.0
    %3138 = vmatpush1.msra.mxu0 0.0
    %3139 = vmatprep.subr.mxu0 0.0
    %3140 = vmatpush1.msra.mxu0 0.0
    %3141 = vmatprep.subr.mxu0 0.0
    %3142 = vmatpush1.msra.mxu0 0.0
    %3143 = vmatprep.subr.mxu0 0.0
    %3144 = vmatpush1.msra.mxu0 0.0
    %3145 = vmatprep.subr.mxu0 0.0
    %3146 = vmatpush1.msra.mxu0 0.0
    %3147 = vmatprep.subr.mxu0 0.0
    %3148 = vmatpush1.msra.mxu0 0.0
    %3149 = vmatprep.subr.mxu0 0.0
    %3150 = vmatpush1.msra.mxu0 0.0
    %3151 = vmatprep.subr.mxu0 0.0
    %3152 = vmatpush1.msra.mxu0 0.0
    %3153 = vmatprep.subr.mxu0 0.0
    %3154 = vmatpush1.msra.mxu0 0.0
    %3155 = vmatprep.subr.mxu0 0.0
    %3156 = vmatpush1.msra.mxu0 0.0
    %3157 = vmatprep.subr.mxu0 0.0
    %3158 = vmatpush1.msra.mxu0 0.0
    %3159 = vmatprep.subr.mxu0 0.0
    %3160 = vmatpush1.msra.mxu0 0.0
    %3161 = vmatprep.mubr.f32.mxu0 0.0
    %3162 = vmatmul.mubr.f32.gmra.mrb[0].mxu0 %v3092
    %v3163 = vpop.f32.mrb[0].mxu0
    %v3164 = vadd.f32 %v3090, %v3163
    %v3165 = vpop.f32.mrb[0].mxu0
    %3166 = vmatprep.mubr.f32.mxu0 0.0
    %3167 = vmatmul.mubr.f32.gmra.mrb[0].mxu0 %v3095
    %v3168 = vpop.f32.mrb[0].mxu0
    %v3169 = vadd.f32 %v3090, %v3168
    %v3170 = vpop.f32.mrb[0].mxu0
    %3171 = vdwg.mxu0
    %v3172 = vadd.f32 %v2982, %v3164
    %v3173 = vadd.f32 %v2983, %v3169
    %v3174 = vsel %vm99, %v3172, 0.0
    %3175 = vadd.xlane.f32.xlu0 %v3174
    %v3176 = vpop.xlane.xlu0 %3175
    %v3177 = vsel %vm99, %v3173, 0.0
    %3178 = vadd.xlane.f32.xlu0 %v3177
    %v3179 = vpop.xlane.xlu0 %3178
    %v3180 = vmul.f32 %v3176, %v53
    %v3181 = vmul.f32 %v3179, %v53
    %v3182 = vsub.f32 %v3172, %v3180
    %v3183 = vsub.f32 %v3173, %v3181
    %v3184 = vmul.f32 %v3182, %v3182
    %v3185 = vmul.f32 %v3183, %v3183
    %v3186 = vsel %vm99, %v3184, 0.0
    %3187 = vadd.xlane.f32.xlu0 %v3186
    %v3188 = vpop.xlane.xlu0 %3187
    %v3189 = vsel %vm99, %v3185, 0.0
    %3190 = vadd.xlane.f32.xlu0 %v3189
    %v3191 = vpop.xlane.xlu0 %3190
    %v3192 = vmul.f32 %v3188, %v53
    %v3193 = vmul.f32 %v3191, %v53
    %v3194 = vadd.f32 %v3192, 1e-12
    %v3195 = vadd.f32 %v3193, 1e-12
    %v3196 = vrsqrt.pop %v3194
    %v3197 = vrsqrt.pop %v3195
    %v3198 = vmul.f32 %v3182, %v3196
    %v3199 = vmul.f32 %v3183, %v3197
    %v3200 = vlaneseq
    %v3201 = vshrl.u32 %v3200, 7
    %v3202 = vsub.s32 6, %v3201
    %v3203 = vrot.slane %v1682, %v3202
    %v3204 = vmul.f32 %v3198, %v3203
    %v3205 = vmul.f32 %v3199, %v3203
    %v3206 = vlaneseq
    %v3207 = vshrl.u32 %v3206, 7
    %v3208 = vsub.s32 7, %v3207
    %v3209 = vrot.slane %v1682, %v3208
    %v3210 = vadd.f32 %v3204, %v3209
    %v3211 = vadd.f32 %v3205, %v3209
    %3212 = vst.msk [vmem:[#allocation3] sm:$0xff] %vm99, %v3210
    %s3213 = scalar_lea.vmem [#allocation3], 8
    %3214 = vst.msk [vmem:[%s3213] sm:$0xff] %vm99, %v3211
    %v3215 = vld [vmem:[%s11] sm:$0x1]
    %v3216 = vld [vmem:[%s11 + $0x1] sm:$0x1]
    %v3217 = vld [vmem:[%s9] sm:$0xff]
    %v3218 = vld [vmem:[%s9 + $0x8] sm:$0xff]
    %v3219 = vld [vmem:[%s9 + $0x10] sm:$0xff]
    %v3220 = vld [vmem:[%s9 + $0x18] sm:$0xff]
    %v3221 = vlaneseq
    %v3222 = vshrl.u32 %v3221, 7
    %v3223 = vsub.s32 0, %v3222
    %v3224 = vrot.slane %v3215, %v3223
    %v3226 = vsel %vm99, %v3210, 0
    %v3229 = vsel %vm99, %v3211, 0
    %3231 = vmatprep.subr.mxu0 0.0
    %3232 = vmatpush1.msra.mxu0 %v3217
    %3233 = vmatprep.subr.mxu0 0.0
    %3234 = vmatpush1.msra.mxu0 %v3218
    %3235 = vmatprep.subr.mxu0 0.0
    %3236 = vmatpush1.msra.mxu0 %v3219
    %3237 = vmatprep.subr.mxu0 0.0
    %3238 = vmatpush1.msra.mxu0 %v3220
    %3239 = vmatprep.subr.mxu0 0.0
    %3240 = vmatpush1.msra.mxu0 0.0
    %3241 = vmatprep.subr.mxu0 0.0
    %3242 = vmatpush1.msra.mxu0 0.0
    %3243 = vmatprep.subr.mxu0 0.0
    %3244 = vmatpush1.msra.mxu0 0.0
    %3245 = vmatprep.subr.mxu0 0.0
    %3246 = vmatpush1.msra.mxu0 0.0
    %3247 = vmatprep.subr.mxu0 0.0
    %3248 = vmatpush1.msra.mxu0 0.0
    %3249 = vmatprep.subr.mxu0 0.0
    %3250 = vmatpush1.msra.mxu0 0.0
    %3251 = vmatprep.subr.mxu0 0.0
    %3252 = vmatpush1.msra.mxu0 0.0
    %3253 = vmatprep.subr.mxu0 0.0
    %3254 = vmatpush1.msra.mxu0 0.0
    %3255 = vmatprep.subr.mxu0 0.0
    %3256 = vmatpush1.msra.mxu0 0.0
    %3257 = vmatprep.subr.mxu0 0.0
    %3258 = vmatpush1.msra.mxu0 0.0
    %3259 = vmatprep.subr.mxu0 0.0
    %3260 = vmatpush1.msra.mxu0 0.0
    %3261 = vmatprep.subr.mxu0 0.0
    %3262 = vmatpush1.msra.mxu0 0.0
    %3263 = vmatprep.subr.mxu0 0.0
    %3264 = vmatpush1.msra.mxu0 0.0
    %3265 = vmatprep.subr.mxu0 0.0
    %3266 = vmatpush1.msra.mxu0 0.0
    %3267 = vmatprep.subr.mxu0 0.0
    %3268 = vmatpush1.msra.mxu0 0.0
    %3269 = vmatprep.subr.mxu0 0.0
    %3270 = vmatpush1.msra.mxu0 0.0
    %3271 = vmatprep.subr.mxu0 0.0
    %3272 = vmatpush1.msra.mxu0 0.0
    %3273 = vmatprep.subr.mxu0 0.0
    %3274 = vmatpush1.msra.mxu0 0.0
    %3275 = vmatprep.subr.mxu0 0.0
    %3276 = vmatpush1.msra.mxu0 0.0
    %3277 = vmatprep.subr.mxu0 0.0
    %3278 = vmatpush1.msra.mxu0 0.0
    %3279 = vmatprep.subr.mxu0 0.0
    %3280 = vmatpush1.msra.mxu0 0.0
    %3281 = vmatprep.subr.mxu0 0.0
    %3282 = vmatpush1.msra.mxu0 0.0
    %3283 = vmatprep.subr.mxu0 0.0
    %3284 = vmatpush1.msra.mxu0 0.0
    %3285 = vmatprep.subr.mxu0 0.0
    %3286 = vmatpush1.msra.mxu0 0.0
    %3287 = vmatprep.subr.mxu0 0.0
    %3288 = vmatpush1.msra.mxu0 0.0
    %3289 = vmatprep.subr.mxu0 0.0
    %3290 = vmatpush1.msra.mxu0 0.0
    %3291 = vmatprep.subr.mxu0 0.0
    %3292 = vmatpush1.msra.mxu0 0.0
    %3293 = vmatprep.subr.mxu0 0.0
    %3294 = vmatpush1.msra.mxu0 0.0
    %3295 = vmatprep.mubr.f32.mxu0 0.0
    %3296 = vmatmul.mubr.f32.gmra.mrb[0].mxu0 %v3226
    %v3297 = vpop.f32.mrb[0].mxu0
    %v3298 = vadd.f32 %v3224, %v3297
    %v3299 = vpop.f32.mrb[0].mxu0
    %3300 = vmatprep.mubr.f32.mxu0 0.0
    %3301 = vmatmul.mubr.f32.gmra.mrb[0].mxu0 %v3229
    %v3302 = vpop.f32.mrb[0].mxu0
    %v3303 = vadd.f32 %v3224, %v3302
    %v3304 = vpop.f32.mrb[0].mxu0
    %3305 = vdwg.mxu0
    %v3306 = vtanh.pop %v3298
    %v3307 = vtanh.pop %v3303
    %v3308 = vld [vmem:[%s10] sm:$0xff]
    %v3309 = vld [vmem:[%s10 + $0x8] sm:$0xff]
    %v3310 = vld [vmem:[%s10 + $0x10] sm:$0xff]
    %v3311 = vld [vmem:[%s10 + $0x18] sm:$0xff]
    %v3312 = vlaneseq
    %v3313 = vshrl.u32 %v3312, 7
    %v3314 = vsub.s32 0, %v3313
    %v3315 = vrot.slane %v3216, %v3314
    %v3317 = vsel %vm99, %v3306, 0
    %v3320 = vsel %vm99, %v3307, 0
    %3322 = vmatprep.subr.mxu0 0.0
    %3323 = vmatpush1.msra.mxu0 %v3308
    %3324 = vmatprep.subr.mxu0 0.0
    %3325 = vmatpush1.msra.mxu0 %v3309
    %3326 = vmatprep.subr.mxu0 0.0
    %3327 = vmatpush1.msra.mxu0 %v3310
    %3328 = vmatprep.subr.mxu0 0.0
    %3329 = vmatpush1.msra.mxu0 %v3311
    %3330 = vmatprep.subr.mxu0 0.0
    %3331 = vmatpush1.msra.mxu0 0.0
    %3332 = vmatprep.subr.mxu0 0.0
    %3333 = vmatpush1.msra.mxu0 0.0
    %3334 = vmatprep.subr.mxu0 0.0
    %3335 = vmatpush1.msra.mxu0 0.0
    %3336 = vmatprep.subr.mxu0 0.0
    %3337 = vmatpush1.msra.mxu0 0.0
    %3338 = vmatprep.subr.mxu0 0.0
    %3339 = vmatpush1.msra.mxu0 0.0
    %3340 = vmatprep.subr.mxu0 0.0
    %3341 = vmatpush1.msra.mxu0 0.0
    %3342 = vmatprep.subr.mxu0 0.0
    %3343 = vmatpush1.msra.mxu0 0.0
    %3344 = vmatprep.subr.mxu0 0.0
    %3345 = vmatpush1.msra.mxu0 0.0
    %3346 = vmatprep.subr.mxu0 0.0
    %3347 = vmatpush1.msra.mxu0 0.0
    %3348 = vmatprep.subr.mxu0 0.0
    %3349 = vmatpush1.msra.mxu0 0.0
    %3350 = vmatprep.subr.mxu0 0.0
    %3351 = vmatpush1.msra.mxu0 0.0
    %3352 = vmatprep.subr.mxu0 0.0
    %3353 = vmatpush1.msra.mxu0 0.0
    %3354 = vmatprep.subr.mxu0 0.0
    %3355 = vmatpush1.msra.mxu0 0.0
    %3356 = vmatprep.subr.mxu0 0.0
    %3357 = vmatpush1.msra.mxu0 0.0
    %3358 = vmatprep.subr.mxu0 0.0
    %3359 = vmatpush1.msra.mxu0 0.0
    %3360 = vmatprep.subr.mxu0 0.0
    %3361 = vmatpush1.msra.mxu0 0.0
    %3362 = vmatprep.subr.mxu0 0.0
    %3363 = vmatpush1.msra.mxu0 0.0
    %3364 = vmatprep.subr.mxu0 0.0
    %3365 = vmatpush1.msra.mxu0 0.0
    %3366 = vmatprep.subr.mxu0 0.0
    %3367 = vmatpush1.msra.mxu0 0.0
    %3368 = vmatprep.subr.mxu0 0.0
    %3369 = vmatpush1.msra.mxu0 0.0
    %3370 = vmatprep.subr.mxu0 0.0
    %3371 = vmatpush1.msra.mxu0 0.0
    %3372 = vmatprep.subr.mxu0 0.0
    %3373 = vmatpush1.msra.mxu0 0.0
    %3374 = vmatprep.subr.mxu0 0.0
    %3375 = vmatpush1.msra.mxu0 0.0
    %3376 = vmatprep.subr.mxu0 0.0
    %3377 = vmatpush1.msra.mxu0 0.0
    %3378 = vmatprep.subr.mxu0 0.0
    %3379 = vmatpush1.msra.mxu0 0.0
    %3380 = vmatprep.subr.mxu0 0.0
    %3381 = vmatpush1.msra.mxu0 0.0
    %3382 = vmatprep.subr.mxu0 0.0
    %3383 = vmatpush1.msra.mxu0 0.0
    %3384 = vmatprep.subr.mxu0 0.0
    %3385 = vmatpush1.msra.mxu0 0.0
    %3386 = vmatprep.mubr.f32.mxu0 0.0
    %3387 = vmatmul.mubr.f32.gmra.mrb[0].mxu0 %v3317
    %v3388 = vpop.f32.mrb[0].mxu0
    %v3389 = vadd.f32 %v3315, %v3388
    %v3390 = vpop.f32.mrb[0].mxu0
    %3391 = vmatprep.mubr.f32.mxu0 0.0
    %3392 = vmatmul.mubr.f32.gmra.mrb[0].mxu0 %v3320
    %v3393 = vpop.f32.mrb[0].mxu0
    %v3394 = vadd.f32 %v3315, %v3393
    %v3395 = vpop.f32.mrb[0].mxu0
    %3396 = vdwg.mxu0
    %vm3397 = vcmask 15360
    %v3398 = vsel %vm3397, %v3389, -inf
    %3399 = vmax.xlane.f32.xlu0 %v3398
    %v3400 = vpop.xlane.xlu0 %3399
    %v3401 = vsel %vm3397, %v3394, -inf
    %3402 = vmax.xlane.f32.xlu0 %v3401
    %v3403 = vpop.xlane.xlu0 %3402
    %v3404 = vsub.f32 %v3389, %v3400
    %v3405 = vsub.f32 %v3394, %v3403
    %v3406 = vmul.f32 %v3404, 1.442695
    %v3407 = vpow.pop %v3406
    %v3408 = vmul.f32 %v3405, 1.442695
    %v3409 = vpow.pop %v3408
    %v3410 = vsel %vm3397, %v3407, 0.0
    %3411 = vadd.xlane.f32.xlu0 %v3410
    %v3412 = vpop.xlane.xlu0 %3411
    %v3413 = vsel %vm3397, %v3409, 0.0
    %3414 = vadd.xlane.f32.xlu0 %v3413
    %v3415 = vpop.xlane.xlu0 %3414
    %v3416 = vrcp.pop %v3412
    %v3417 = vmul.f32 %v3407, %v3416
    %v3418 = vrcp.pop %v3415
    %v3419 = vmul.f32 %v3409, %v3418
    %v3420 = vlog2.pop %v3412
    %v3421 = vmul.f32 %v3420, 0.6931472
    %v3422 = vlog2.pop %v3415
    %v3423 = vmul.f32 %v3422, 0.6931472
    %v3424 = vsub.f32 %v3404, %v3421
    %v3425 = vsub.f32 %v3405, %v3423
    %vm3426 = vcmask 8192
    %3427 = vst.msk [vmem:[%s13] sm:$0x1] %vm3426, %v3389
    %3428 = vst.msk [vmem:[%s13 + $0x2] sm:$0x1] %vm3426, %v3417
    %3429 = vst.msk [vmem:[%s13 + $0x4] sm:$0x1] %vm3426, %v3424
    %3430 = vst.msk [vmem:[%s13 + $0x1] sm:$0x1] %vm3426, %v3394
    %3431 = vst.msk [vmem:[%s13 + $0x3] sm:$0x1] %vm3426, %v3419
    %3432 = vst.msk [vmem:[%s13 + $0x5] sm:$0x1] %vm3426, %v3425
    // Predicated region
    $region50: #{tpu_custom_call.1} parent=1 // pred_check
      _
    $region51: #{tpu_custom_call.1} parent=1 // pred_check_branch
      %3434 = sbr.rel (0) target = $region53
    $region52: #{tpu_custom_call.1} parent=1 // pred_region
      %s3436 = ssub.s32 256, 256
      %3437 = vsyncadd [#allocation4], %s3436
      %s3438 = sshll.u32 [#allocation3], 4
      %s3439 = int_to_ptr.vmem [resolvable:$true] %s3438
      %3444 = dma.vmem_to_hbm [thread:$0]  %s3439, 256, %s12, [#allocation4], 128, 128, 8
    $region53: #{tpu_custom_call.1} parent=1 // pred_fallthru
      _
    // Predicated region
    $region54: #{tpu_custom_call.1} parent=1 // pred_check
      _
    $region55: #{tpu_custom_call.1} parent=1 // pred_check_branch
      %3446 = sbr.rel (0) target = $region57
    $region56: #{tpu_custom_call.1} parent=1 // pred_region
      _
    $region57: #{tpu_custom_call.1} parent=1 // pred_fallthru
      _
    // Predicated region
    $region58: #{tpu_custom_call.1} parent=1 // pred_check
      _
    $region59: #{tpu_custom_call.1} parent=1 // pred_check_branch
      %3448 = sbr.rel (0) target = $region61
    $region60: #{tpu_custom_call.1} parent=1 // pred_region
      %3449 = dma.done [#allocation4], 256
    $region61: #{tpu_custom_call.1} parent=1 // pred_fallthru
      _
    // Predicated region
    $region62: #{tpu_custom_call.1} parent=1 // pred_check
      _
    $region63: #{tpu_custom_call.1} parent=1 // pred_check_branch
      %3451 = sbr.rel (0) target = $region65
    $region64: #{tpu_custom_call.1} parent=1 // pred_region
      _
    $region65: #{tpu_custom_call.1} parent=1 // pred_fallthru
      _
    %3452 = vsyncpa [#allocation4], 1

</llo_original>
